<compile_context>
chip_gen: v7x
topology: tpu7x:2x2x1
jax: 0.10.0
libtpu: 0.0.40
codegen_flags: <defaults>
</compile_context>

<pallas_src>
import functools

import jax
import jax.numpy as jnp
from jax.experimental import pallas as pl
from jax.experimental.pallas import tpu as pltpu


BN_EPS = 1e-3  # EfficientNet's batch_norm_epsilon


# ---------------------------------------------------------------------------
# Fused MBConv block kernel: one grid step == one image, everything in VMEM.
# ---------------------------------------------------------------------------
def _mbconv_kernel(x_ref, *refs, has_expand, has_residual):
    if has_expand:
        (w_exp_ref, s0_ref, b0_ref,
         w_dw_ref, s1_ref, b1_ref,
         w_se1_ref, bse1_ref, w_se2_ref, bse2_ref,
         w_proj_ref, s2_ref, b2_ref,
         o_ref, pad_ref) = refs
    else:
        (w_dw_ref, s1_ref, b1_ref,
         w_se1_ref, bse1_ref, w_se2_ref, bse2_ref,
         w_proj_ref, s2_ref, b2_ref,
         o_ref, pad_ref) = refs

    H, W, cout = o_ref.shape[1], o_ref.shape[2], o_ref.shape[3]
    cin = x_ref.shape[3]
    cexp = w_dw_ref.shape[2]
    HW = H * W

    # (1, H, W, cin) -> (H*W, cin); merging leading dims is free (channels stay on lanes).
    x2d = x_ref[0].astype(jnp.float32).reshape(HW, cin)

    # ---- expand 1x1 conv + BN + swish --------------------------------------
    if has_expand:
        h = jnp.dot(x2d, w_exp_ref[...], preferred_element_type=jnp.float32)
        h = h * s0_ref[...] + b0_ref[...]
        h = h * jax.nn.sigmoid(h)
    else:
        h = x2d

    # ---- depthwise 3x3 (stride 1, SAME) via in-VMEM halo scratch -----------
    pad_ref[...] = jnp.zeros_like(pad_ref)              # zero halo border
    pad_ref[1:H + 1, 1:W + 1, :] = h.reshape(H, W, cexp)
    xp = pad_ref[...]                                   # (H+2, W+2, cexp), f32
    w_dw = w_dw_ref[...]                                # (3, 3, cexp)
    acc = jnp.zeros((H, W, cexp), jnp.float32)
    for dy in range(3):
        for dx in range(3):
            acc = acc + xp[dy:dy + H, dx:dx + W, :] * w_dw[dy, dx, :]
    h = acc.reshape(HW, cexp) * s1_ref[...] + b1_ref[...]
    h = h * jax.nn.sigmoid(h)

    # ---- squeeze-excite gate (stays in VMEM, fused multiply) ---------------
    m = jnp.mean(h, axis=0, keepdims=True)                                   # (1, cexp)
    z = jnp.dot(m, w_se1_ref[...], preferred_element_type=jnp.float32) + bse1_ref[...]
    z = z * jax.nn.sigmoid(z)                                                # swish
    g = jnp.dot(z, w_se2_ref[...], preferred_element_type=jnp.float32) + bse2_ref[...]
    h = h * jax.nn.sigmoid(g)                                                # gate rows

    # ---- project 1x1 conv + BN (+ residual) --------------------------------
    y = jnp.dot(h, w_proj_ref[...], preferred_element_type=jnp.float32)
    y = y * s2_ref[...] + b2_ref[...]
    if has_residual:
        y = y + x2d                                       # stride 1, cin == cout
    o_ref[0] = y.reshape(H, W, cout).astype(o_ref.dtype)


def mbconv_block(x_nhwc, p):
    """One fused MBConv block: x (N,H,W,Cin) -> (N,H,W,Cout), single pallas_call."""
    N, H, W, cin = x_nhwc.shape
    cexp, cout, csq = p["cexp"], p["cout"], p["csq"]
    has_expand = (p["expand"] != 1)
    has_residual = (cin == cout)  # all blocks in this slice are stride 1
    f32 = jnp.float32

    def cspec(shape):  # broadcast (constant-per-grid-step) operand
        return pl.BlockSpec(shape, lambda n: (0,) * len(shape))

    s1, b1 = p["bn1"]
    s2, b2 = p["bn2"]

    args = [x_nhwc]
    in_specs = [pl.BlockSpec((1, H, W, cin), lambda n: (n, 0, 0, 0))]

    if has_expand:
        s0, b0 = p["bn0"]
        args += [p["w_exp"],
                 s0.reshape(1, cexp).astype(f32),
                 b0.reshape(1, cexp).astype(f32)]
        in_specs += [cspec((cin, cexp)), cspec((1, cexp)), cspec((1, cexp))]

    args += [p["w_dw"],
             s1.reshape(1, cexp).astype(f32), b1.reshape(1, cexp).astype(f32),
             p["w_se1"], p["b_se1"].reshape(1, csq).astype(f32),
             p["w_se2"], p["b_se2"].reshape(1, cexp).astype(f32),
             p["w_proj"],
             s2.reshape(1, cout).astype(f32), b2.reshape(1, cout).astype(f32)]
    in_specs += [cspec((3, 3, cexp)),
                 cspec((1, cexp)), cspec((1, cexp)),
                 cspec((cexp, csq)), cspec((1, csq)),
                 cspec((csq, cexp)), cspec((1, cexp)),
                 cspec((cexp, cout)),
                 cspec((1, cout)), cspec((1, cout))]

    kernel = functools.partial(_mbconv_kernel,
                               has_expand=has_expand,
                               has_residual=has_residual)

    return pl.pallas_call(
        kernel,
        out_shape=jax.ShapeDtypeStruct((N, H, W, cout), x_nhwc.dtype),
        grid_spec=pltpu.PrefetchScalarGridSpec(
            num_scalar_prefetch=0,
            grid=(N,),
            in_specs=in_specs,
            out_specs=pl.BlockSpec((1, H, W, cout), lambda n: (n, 0, 0, 0)),
            scratch_shapes=[pltpu.VMEM((H + 2, W + 2, cexp), jnp.float32)],
        ),
        compiler_params=pltpu.CompilerParams(
            dimension_semantics=("parallel",)),   # v7x: one image per TensorCore
    )(*args)


# ---------------------------------------------------------------------------
# Parameter construction (synthetic, deterministic) and the encoder wrapper
# ---------------------------------------------------------------------------
def fold_bn(gamma, beta, mean, var):
    scale = gamma / jnp.sqrt(var + BN_EPS)
    bias = beta - mean * scale
    return scale, bias


def init_block_params(key, cin, cout, expand, se_ratio):
    cexp = cin * expand
    csq = max(1, int(cin * se_ratio))
    ks = jax.random.split(key, 10)

    def w(k, shape, s=0.1):
        return jax.random.normal(k, shape, jnp.float32) * s

    def bn_params(k, c):
        k0, k1, k2, k3 = jax.random.split(k, 4)
        gamma = 1.0 + 0.1 * jax.random.normal(k0, (c,), jnp.float32)
        beta = 0.1 * jax.random.normal(k1, (c,), jnp.float32)
        mean = 0.1 * jax.random.normal(k2, (c,), jnp.float32)
        var = jax.random.uniform(k3, (c,), jnp.float32, 0.5, 1.5)
        return fold_bn(gamma, beta, mean, var)

    p = {"expand": expand, "cin": cin, "cout": cout, "cexp": cexp, "csq": csq}
    if expand != 1:
        p["w_exp"] = w(ks[0], (cin, cexp))            # 1x1 conv as (Cin, Cexp) matmul
        p["bn0"] = bn_params(ks[1], cexp)
    p["w_dw"] = w(ks[2], (3, 3, cexp))                # depthwise 3x3, per-channel
    p["bn1"] = bn_params(ks[3], cexp)
    p["w_se1"] = w(ks[4], (cexp, csq))                # SE reduce (with bias)
    p["b_se1"] = w(ks[5], (csq,))
    p["w_se2"] = w(ks[6], (csq, cexp))                # SE expand (with bias)
    p["b_se2"] = w(ks[7], (cexp,))
    p["w_proj"] = w(ks[8], (cexp, cout))              # project 1x1
    p["bn2"] = bn_params(ks[9], cout)
    return p


def efficientnet_encoder(x_nchw, blocks_params):
    # module input/output convention: NCHW (as in PyTorch)
    x = jnp.transpose(x_nchw, (0, 2, 3, 1))   # -> NHWC for the kernels
    for p in blocks_params:
        x = mbconv_block(x, p)
    return jnp.transpose(x, (0, 3, 1, 2))     # -> NCHW


if __name__ == "__main__":
    key = jax.random.PRNGKey(0)
    k_in, k_b0, k_b1 = jax.random.split(key, 3)

    # Small encoder: efn._blocks[start:end] with two stride-1 MBConv blocks
    # (16 -> 16 filters, expand_ratio=4, se_ratio=0.25).
    blocks = [
        init_block_params(k_b0, cin=16, cout=16, expand=4, se_ratio=0.25),
        init_block_params(k_b1, cin=16, cout=16, expand=4, se_ratio=0.25),
    ]

    # Input in PyTorch NCHW layout: (batch=2, channels=16, H=16, W=16)
    x = jax.random.normal(k_in, (2, 16, 16, 16), jnp.float32)

    fwd = jax.jit(lambda inp: efficientnet_encoder(inp, blocks))
    out = jax.block_until_ready(fwd(x))

    assert out.shape == (2, 16, 16, 16)
    assert bool(jnp.all(jnp.isfinite(out)))
    print("KERNEL_OK")
</pallas_src>

<mosaic_0001>
module attributes {stable_mosaic.version = 11 : i64} {
  func.func @_mbconv_kernel(%arg0: i32, %arg1: memref<1x16x16x16xf32, #tpu.memory_space<vmem>>, %arg2: memref<16x64xf32, #tpu.memory_space<vmem>>, %arg3: memref<1x64xf32, #tpu.memory_space<vmem>>, %arg4: memref<1x64xf32, #tpu.memory_space<vmem>>, %arg5: memref<3x3x64xf32, #tpu.memory_space<vmem>>, %arg6: memref<1x64xf32, #tpu.memory_space<vmem>>, %arg7: memref<1x64xf32, #tpu.memory_space<vmem>>, %arg8: memref<64x4xf32, #tpu.memory_space<vmem>>, %arg9: memref<1x4xf32, #tpu.memory_space<vmem>>, %arg10: memref<4x64xf32, #tpu.memory_space<vmem>>, %arg11: memref<1x64xf32, #tpu.memory_space<vmem>>, %arg12: memref<64x16xf32, #tpu.memory_space<vmem>>, %arg13: memref<1x16xf32, #tpu.memory_space<vmem>>, %arg14: memref<1x16xf32, #tpu.memory_space<vmem>>, %arg15: memref<1x16x16x16xf32, #tpu.memory_space<vmem>>, %arg16: memref<18x18x64xf32, #tpu.memory_space<vmem>>) attributes {dimension_semantics = [#tpu.dimension_semantics<parallel>], iteration_bounds = array<i64: 2>, scalar_prefetch = 0 : i64, scratch_operands = 1 : i64, tpu.core_type = #tpu.core_type<tc>, window_params = [{transform_indices = @transform_0, window_bounds = array<i64: 1, 16, 16, 16>}, {pipeline_mode = #tpu.pipeline_mode<synchronous>, transform_indices = @transform_1, window_bounds = array<i64: 16, 64>}, {pipeline_mode = #tpu.pipeline_mode<synchronous>, transform_indices = @transform_2, window_bounds = array<i64: 1, 64>}, {pipeline_mode = #tpu.pipeline_mode<synchronous>, transform_indices = @transform_3, window_bounds = array<i64: 1, 64>}, {pipeline_mode = #tpu.pipeline_mode<synchronous>, transform_indices = @transform_4, window_bounds = array<i64: 3, 3, 64>}, {pipeline_mode = #tpu.pipeline_mode<synchronous>, transform_indices = @transform_5, window_bounds = array<i64: 1, 64>}, {pipeline_mode = #tpu.pipeline_mode<synchronous>, transform_indices = @transform_6, window_bounds = array<i64: 1, 64>}, {pipeline_mode = #tpu.pipeline_mode<synchronous>, transform_indices = @transform_7, window_bounds = array<i64: 64, 4>}, {pipeline_mode = #tpu.pipeline_mode<synchronous>, transform_indices = @transform_8, window_bounds = array<i64: 1, 4>}, {pipeline_mode = #tpu.pipeline_mode<synchronous>, transform_indices = @transform_9, window_bounds = array<i64: 4, 64>}, {pipeline_mode = #tpu.pipeline_mode<synchronous>, transform_indices = @transform_10, window_bounds = array<i64: 1, 64>}, {pipeline_mode = #tpu.pipeline_mode<synchronous>, transform_indices = @transform_11, window_bounds = array<i64: 64, 16>}, {pipeline_mode = #tpu.pipeline_mode<synchronous>, transform_indices = @transform_12, window_bounds = array<i64: 1, 16>}, {pipeline_mode = #tpu.pipeline_mode<synchronous>, transform_indices = @transform_13, window_bounds = array<i64: 1, 16>}, {transform_indices = @transform_14, window_bounds = array<i64: 1, 16, 16, 16>}]} {
    %c0 = arith.constant 0 : index
    %c0_0 = arith.constant 0 : index
    %c0_1 = arith.constant 0 : index
    %c0_2 = arith.constant 0 : index
    %0 = vector.load %arg1[%c0, %c0_0, %c0_1, %c0_2] : memref<1x16x16x16xf32, #tpu.memory_space<vmem>>, vector<1x16x16x16xf32>
    %1 = vector.shape_cast %0 : vector<1x16x16x16xf32> to vector<16x16x16xf32>
    %2 = vector.shape_cast %1 : vector<16x16x16xf32> to vector<256x16xf32>
    %c0_3 = arith.constant 0 : index
    %c0_4 = arith.constant 0 : index
    %3 = vector.load %arg2[%c0_3, %c0_4] : memref<16x64xf32, #tpu.memory_space<vmem>>, vector<16x64xf32>
    %cst = arith.constant dense<0.000000e+00> : vector<256x64xf32>
    %4 = tpu.matmul %2, %3, %cst {dimension_numbers = #tpu.dot_dimension_numbers<[1], [0], [0], [1], [0, 0, 1, 1], [], []>} : vector<256x16xf32>, vector<16x64xf32>, vector<256x64xf32> -> vector<256x64xf32>
    %c0_5 = arith.constant 0 : index
    %c0_6 = arith.constant 0 : index
    %5 = vector.load %arg3[%c0_5, %c0_6] : memref<1x64xf32, #tpu.memory_space<vmem>>, vector<1x64xf32>
    %6 = vector.broadcast %5 : vector<1x64xf32> to vector<256x64xf32>
    %7 = arith.mulf %4, %6 : vector<256x64xf32>
    %c0_7 = arith.constant 0 : index
    %c0_8 = arith.constant 0 : index
    %8 = vector.load %arg4[%c0_7, %c0_8] : memref<1x64xf32, #tpu.memory_space<vmem>>, vector<1x64xf32>
    %9 = vector.broadcast %8 : vector<1x64xf32> to vector<256x64xf32>
    %10 = arith.addf %7, %9 : vector<256x64xf32>
    %11 = arith.negf %10 : vector<256x64xf32>
    %12 = math.exp %11 : vector<256x64xf32>
    %cst_9 = arith.constant 1.000000e+00 : f32
    %13 = vector.broadcast %cst_9 : f32 to vector<256x64xf32>
    %14 = arith.addf %13, %12 : vector<256x64xf32>
    %15 = arith.divf %13, %14 : vector<256x64xf32>
    %16 = arith.mulf %10, %15 : vector<256x64xf32>
    %cst_10 = arith.constant 0.000000e+00 : f32
    %17 = vector.broadcast %cst_10 : f32 to vector<18x18x64xf32>
    %c0_11 = arith.constant 0 : index
    %c0_12 = arith.constant 0 : index
    %c0_13 = arith.constant 0 : index
    %18 = vector.load %arg16[%c0_11, %c0_12, %c0_13] : memref<18x18x64xf32, #tpu.memory_space<vmem>>, vector<18x18x64xf32>
    tpu.vector_store %arg16[%c0_11, %c0_12, %c0_13], %17 {strides = array<i32>} : memref<18x18x64xf32, #tpu.memory_space<vmem>>, vector<18x18x64xf32>,
    %19 = vector.shape_cast %16 : vector<256x64xf32> to vector<16x16x64xf32>
    %c1 = arith.constant 1 : index
    %c1_14 = arith.constant 1 : index
    %c0_15 = arith.constant 0 : index
    %20 = vector.load %arg16[%c1, %c1_14, %c0_15] : memref<18x18x64xf32, #tpu.memory_space<vmem>>, vector<16x16x64xf32>
    tpu.vector_store %arg16[%c1, %c1_14, %c0_15], %19 {strides = array<i32>} : memref<18x18x64xf32, #tpu.memory_space<vmem>>, vector<16x16x64xf32>,
    %c0_16 = arith.constant 0 : index
    %c0_17 = arith.constant 0 : index
    %c0_18 = arith.constant 0 : index
    %21 = vector.load %arg16[%c0_16, %c0_17, %c0_18] : memref<18x18x64xf32, #tpu.memory_space<vmem>>, vector<18x18x64xf32>
    %c0_19 = arith.constant 0 : index
    %c0_20 = arith.constant 0 : index
    %c0_21 = arith.constant 0 : index
    %22 = vector.load %arg5[%c0_19, %c0_20, %c0_21] : memref<3x3x64xf32, #tpu.memory_space<vmem>>, vector<3x3x64xf32>
    %cst_22 = arith.constant 0.000000e+00 : f32
    %23 = vector.broadcast %cst_22 : f32 to vector<16x16x64xf32>
    %24 = vector.extract_strided_slice %21 {offsets = [0, 0, 0], sizes = [16, 16, 64], strides = [1, 1, 1]} : vector<18x18x64xf32> to vector<16x16x64xf32>
    %25 = vector.extract_strided_slice %22 {offsets = [0, 0, 0], sizes = [1, 1, 64], strides = [1, 1, 1]} : vector<3x3x64xf32> to vector<1x1x64xf32>
    %26 = vector.shape_cast %25 : vector<1x1x64xf32> to vector<64xf32>
    %27 = vector.shape_cast %26 : vector<64xf32> to vector<1x1x64xf32>
    %28 = vector.broadcast %27 : vector<1x1x64xf32> to vector<16x16x64xf32>
    %29 = arith.mulf %24, %28 : vector<16x16x64xf32>
    %30 = arith.addf %23, %29 : vector<16x16x64xf32>
    %31 = vector.extract_strided_slice %21 {offsets = [0, 1, 0], sizes = [16, 16, 64], strides = [1, 1, 1]} : vector<18x18x64xf32> to vector<16x16x64xf32>
    %32 = vector.extract_strided_slice %22 {offsets = [0, 1, 0], sizes = [1, 1, 64], strides = [1, 1, 1]} : vector<3x3x64xf32> to vector<1x1x64xf32>
    %33 = vector.shape_cast %32 : vector<1x1x64xf32> to vector<64xf32>
    %34 = vector.shape_cast %33 : vector<64xf32> to vector<1x1x64xf32>
    %35 = vector.broadcast %34 : vector<1x1x64xf32> to vector<16x16x64xf32>
    %36 = arith.mulf %31, %35 : vector<16x16x64xf32>
    %37 = arith.addf %30, %36 : vector<16x16x64xf32>
    %38 = vector.extract_strided_slice %21 {offsets = [0, 2, 0], sizes = [16, 16, 64], strides = [1, 1, 1]} : vector<18x18x64xf32> to vector<16x16x64xf32>
    %39 = vector.extract_strided_slice %22 {offsets = [0, 2, 0], sizes = [1, 1, 64], strides = [1, 1, 1]} : vector<3x3x64xf32> to vector<1x1x64xf32>
    %40 = vector.shape_cast %39 : vector<1x1x64xf32> to vector<64xf32>
    %41 = vector.shape_cast %40 : vector<64xf32> to vector<1x1x64xf32>
    %42 = vector.broadcast %41 : vector<1x1x64xf32> to vector<16x16x64xf32>
    %43 = arith.mulf %38, %42 : vector<16x16x64xf32>
    %44 = arith.addf %37, %43 : vector<16x16x64xf32>
    %45 = vector.extract_strided_slice %21 {offsets = [1, 0, 0], sizes = [16, 16, 64], strides = [1, 1, 1]} : vector<18x18x64xf32> to vector<16x16x64xf32>
    %46 = vector.extract_strided_slice %22 {offsets = [1, 0, 0], sizes = [1, 1, 64], strides = [1, 1, 1]} : vector<3x3x64xf32> to vector<1x1x64xf32>
    %47 = vector.shape_cast %46 : vector<1x1x64xf32> to vector<64xf32>
    %48 = vector.shape_cast %47 : vector<64xf32> to vector<1x1x64xf32>
    %49 = vector.broadcast %48 : vector<1x1x64xf32> to vector<16x16x64xf32>
    %50 = arith.mulf %45, %49 : vector<16x16x64xf32>
    %51 = arith.addf %44, %50 : vector<16x16x64xf32>
    %52 = vector.extract_strided_slice %21 {offsets = [1, 1, 0], sizes = [16, 16, 64], strides = [1, 1, 1]} : vector<18x18x64xf32> to vector<16x16x64xf32>
    %53 = vector.extract_strided_slice %22 {offsets = [1, 1, 0], sizes = [1, 1, 64], strides = [1, 1, 1]} : vector<3x3x64xf32> to vector<1x1x64xf32>
    %54 = vector.shape_cast %53 : vector<1x1x64xf32> to vector<64xf32>
    %55 = vector.shape_cast %54 : vector<64xf32> to vector<1x1x64xf32>
    %56 = vector.broadcast %55 : vector<1x1x64xf32> to vector<16x16x64xf32>
    %57 = arith.mulf %52, %56 : vector<16x16x64xf32>
    %58 = arith.addf %51, %57 : vector<16x16x64xf32>
    %59 = vector.extract_strided_slice %21 {offsets = [1, 2, 0], sizes = [16, 16, 64], strides = [1, 1, 1]} : vector<18x18x64xf32> to vector<16x16x64xf32>
    %60 = vector.extract_strided_slice %22 {offsets = [1, 2, 0], sizes = [1, 1, 64], strides = [1, 1, 1]} : vector<3x3x64xf32> to vector<1x1x64xf32>
    %61 = vector.shape_cast %60 : vector<1x1x64xf32> to vector<64xf32>
    %62 = vector.shape_cast %61 : vector<64xf32> to vector<1x1x64xf32>
    %63 = vector.broadcast %62 : vector<1x1x64xf32> to vector<16x16x64xf32>
    %64 = arith.mulf %59, %63 : vector<16x16x64xf32>
    %65 = arith.addf %58, %64 : vector<16x16x64xf32>
    %66 = vector.extract_strided_slice %21 {offsets = [2, 0, 0], sizes = [16, 16, 64], strides = [1, 1, 1]} : vector<18x18x64xf32> to vector<16x16x64xf32>
    %67 = vector.extract_strided_slice %22 {offsets = [2, 0, 0], sizes = [1, 1, 64], strides = [1, 1, 1]} : vector<3x3x64xf32> to vector<1x1x64xf32>
    %68 = vector.shape_cast %67 : vector<1x1x64xf32> to vector<64xf32>
    %69 = vector.shape_cast %68 : vector<64xf32> to vector<1x1x64xf32>
    %70 = vector.broadcast %69 : vector<1x1x64xf32> to vector<16x16x64xf32>
    %71 = arith.mulf %66, %70 : vector<16x16x64xf32>
    %72 = arith.addf %65, %71 : vector<16x16x64xf32>
    %73 = vector.extract_strided_slice %21 {offsets = [2, 1, 0], sizes = [16, 16, 64], strides = [1, 1, 1]} : vector<18x18x64xf32> to vector<16x16x64xf32>
    %74 = vector.extract_strided_slice %22 {offsets = [2, 1, 0], sizes = [1, 1, 64], strides = [1, 1, 1]} : vector<3x3x64xf32> to vector<1x1x64xf32>
    %75 = vector.shape_cast %74 : vector<1x1x64xf32> to vector<64xf32>
    %76 = vector.shape_cast %75 : vector<64xf32> to vector<1x1x64xf32>
    %77 = vector.broadcast %76 : vector<1x1x64xf32> to vector<16x16x64xf32>
    %78 = arith.mulf %73, %77 : vector<16x16x64xf32>
    %79 = arith.addf %72, %78 : vector<16x16x64xf32>
    %80 = vector.extract_strided_slice %21 {offsets = [2, 2, 0], sizes = [16, 16, 64], strides = [1, 1, 1]} : vector<18x18x64xf32> to vector<16x16x64xf32>
    %81 = vector.extract_strided_slice %22 {offsets = [2, 2, 0], sizes = [1, 1, 64], strides = [1, 1, 1]} : vector<3x3x64xf32> to vector<1x1x64xf32>
    %82 = vector.shape_cast %81 : vector<1x1x64xf32> to vector<64xf32>
    %83 = vector.shape_cast %82 : vector<64xf32> to vector<1x1x64xf32>
    %84 = vector.broadcast %83 : vector<1x1x64xf32> to vector<16x16x64xf32>
    %85 = arith.mulf %80, %84 : vector<16x16x64xf32>
    %86 = arith.addf %79, %85 : vector<16x16x64xf32>
    %87 = vector.shape_cast %86 : vector<16x16x64xf32> to vector<256x64xf32>
    %c0_23 = arith.constant 0 : index
    %c0_24 = arith.constant 0 : index
    %88 = vector.load %arg6[%c0_23, %c0_24] : memref<1x64xf32, #tpu.memory_space<vmem>>, vector<1x64xf32>
    %89 = vector.broadcast %88 : vector<1x64xf32> to vector<256x64xf32>
    %90 = arith.mulf %87, %89 : vector<256x64xf32>
    %c0_25 = arith.constant 0 : index
    %c0_26 = arith.constant 0 : index
    %91 = vector.load %arg7[%c0_25, %c0_26] : memref<1x64xf32, #tpu.memory_space<vmem>>, vector<1x64xf32>
    %92 = vector.broadcast %91 : vector<1x64xf32> to vector<256x64xf32>
    %93 = arith.addf %90, %92 : vector<256x64xf32>
    %94 = arith.negf %93 : vector<256x64xf32>
    %95 = math.exp %94 : vector<256x64xf32>
    %cst_27 = arith.constant 1.000000e+00 : f32
    %96 = vector.broadcast %cst_27 : f32 to vector<256x64xf32>
    %97 = arith.addf %96, %95 : vector<256x64xf32>
    %98 = arith.divf %96, %97 : vector<256x64xf32>
    %99 = arith.mulf %93, %98 : vector<256x64xf32>
    %cst_28 = arith.constant dense<0.000000e+00> : vector<64xf32>
    %100 = vector.multi_reduction <add>, %99, %cst_28 [0] : vector<256x64xf32> to vector<64xf32>
    %101 = vector.shape_cast %100 : vector<64xf32> to vector<1x64xf32>
    %cst_29 = arith.constant 2.560000e+02 : f32
    %102 = vector.broadcast %cst_29 : f32 to vector<1x64xf32>
    %103 = arith.divf %101, %102 : vector<1x64xf32>
    %c0_30 = arith.constant 0 : index
    %c0_31 = arith.constant 0 : index
    %104 = vector.load %arg8[%c0_30, %c0_31] : memref<64x4xf32, #tpu.memory_space<vmem>>, vector<64x4xf32>
    %cst_32 = arith.constant dense<0.000000e+00> : vector<1x4xf32>
    %105 = tpu.matmul %103, %104, %cst_32 {dimension_numbers = #tpu.dot_dimension_numbers<[1], [0], [0], [1], [0, 0, 1, 1], [], []>} : vector<1x64xf32>, vector<64x4xf32>, vector<1x4xf32> -> vector<1x4xf32>
    %c0_33 = arith.constant 0 : index
    %c0_34 = arith.constant 0 : index
    %106 = vector.load %arg9[%c0_33, %c0_34] : memref<1x4xf32, #tpu.memory_space<vmem>>, vector<1x4xf32>
    %107 = arith.addf %105, %106 : vector<1x4xf32>
    %108 = arith.negf %107 : vector<1x4xf32>
    %109 = math.exp %108 : vector<1x4xf32>
    %cst_35 = arith.constant 1.000000e+00 : f32
    %110 = vector.broadcast %cst_35 : f32 to vector<1x4xf32>
    %111 = arith.addf %110, %109 : vector<1x4xf32>
    %112 = arith.divf %110, %111 : vector<1x4xf32>
    %113 = arith.mulf %107, %112 : vector<1x4xf32>
    %c0_36 = arith.constant 0 : index
    %c0_37 = arith.constant 0 : index
    %114 = vector.load %arg10[%c0_36, %c0_37] : memref<4x64xf32, #tpu.memory_space<vmem>>, vector<4x64xf32>
    %cst_38 = arith.constant dense<0.000000e+00> : vector<1x64xf32>
    %115 = tpu.matmul %113, %114, %cst_38 {dimension_numbers = #tpu.dot_dimension_numbers<[1], [0], [0], [1], [0, 0, 1, 1], [], []>} : vector<1x4xf32>, vector<4x64xf32>, vector<1x64xf32> -> vector<1x64xf32>
    %c0_39 = arith.constant 0 : index
    %c0_40 = arith.constant 0 : index
    %116 = vector.load %arg11[%c0_39, %c0_40] : memref<1x64xf32, #tpu.memory_space<vmem>>, vector<1x64xf32>
    %117 = arith.addf %115, %116 : vector<1x64xf32>
    %118 = arith.negf %117 : vector<1x64xf32>
    %119 = math.exp %118 : vector<1x64xf32>
    %cst_41 = arith.constant 1.000000e+00 : f32
    %120 = vector.broadcast %cst_41 : f32 to vector<1x64xf32>
    %121 = arith.addf %120, %119 : vector<1x64xf32>
    %122 = arith.divf %120, %121 : vector<1x64xf32>
    %123 = vector.broadcast %122 : vector<1x64xf32> to vector<256x64xf32>
    %124 = arith.mulf %99, %123 : vector<256x64xf32>
    %c0_42 = arith.constant 0 : index
    %c0_43 = arith.constant 0 : index
    %125 = vector.load %arg12[%c0_42, %c0_43] : memref<64x16xf32, #tpu.memory_space<vmem>>, vector<64x16xf32>
    %cst_44 = arith.constant dense<0.000000e+00> : vector<256x16xf32>
    %126 = tpu.matmul %124, %125, %cst_44 {dimension_numbers = #tpu.dot_dimension_numbers<[1], [0], [0], [1], [0, 0, 1, 1], [], []>} : vector<256x64xf32>, vector<64x16xf32>, vector<256x16xf32> -> vector<256x16xf32>
    %c0_45 = arith.constant 0 : index
    %c0_46 = arith.constant 0 : index
    %127 = vector.load %arg13[%c0_45, %c0_46] : memref<1x16xf32, #tpu.memory_space<vmem>>, vector<1x16xf32>
    %128 = vector.broadcast %127 : vector<1x16xf32> to vector<256x16xf32>
    %129 = arith.mulf %126, %128 : vector<256x16xf32>
    %c0_47 = arith.constant 0 : index
    %c0_48 = arith.constant 0 : index
    %130 = vector.load %arg14[%c0_47, %c0_48] : memref<1x16xf32, #tpu.memory_space<vmem>>, vector<1x16xf32>
    %131 = vector.broadcast %130 : vector<1x16xf32> to vector<256x16xf32>
    %132 = arith.addf %129, %131 : vector<256x16xf32>
    %133 = arith.addf %132, %2 : vector<256x16xf32>
    %134 = vector.shape_cast %133 : vector<256x16xf32> to vector<16x16x16xf32>
    %c0_49 = arith.constant 0 : index
    %c0_50 = arith.constant 0 : index
    %c0_51 = arith.constant 0 : index
    %c0_52 = arith.constant 0 : index
    %135 = vector.load %arg15[%c0_49, %c0_50, %c0_51, %c0_52] : memref<1x16x16x16xf32, #tpu.memory_space<vmem>>, vector<1x16x16x16xf32>
    %136 = vector.shape_cast %135 : vector<1x16x16x16xf32> to vector<16x16x16xf32>
    %137 = vector.shape_cast %134 : vector<16x16x16xf32> to vector<1x16x16x16xf32>
    tpu.vector_store %arg15[%c0_49, %c0_50, %c0_51, %c0_52], %137 {strides = array<i32>} : memref<1x16x16x16xf32, #tpu.memory_space<vmem>>, vector<1x16x16x16xf32>,
    return
  }
  func.func @transform_0(%arg0: i32) -> (i32, i32, i32, i32) {
    %c0_i32 = arith.constant 0 : i32
    %c0_i32_0 = arith.constant 0 : i32
    %c0_i32_1 = arith.constant 0 : i32
    %c0_i32_2 = arith.constant 0 : i32
    return %arg0, %c0_i32, %c0_i32_0, %c0_i32_1 : i32, i32, i32, i32
  }
  func.func @transform_1(%arg0: i32) -> (i32, i32) {
    %c0_i32 = arith.constant 0 : i32
    %c0_i32_0 = arith.constant 0 : i32
    %c0_i32_1 = arith.constant 0 : i32
    return %c0_i32, %c0_i32_0 : i32, i32
  }
  func.func @transform_2(%arg0: i32) -> (i32, i32) {
    %c0_i32 = arith.constant 0 : i32
    %c0_i32_0 = arith.constant 0 : i32
    %c0_i32_1 = arith.constant 0 : i32
    return %c0_i32, %c0_i32_0 : i32, i32
  }
  func.func @transform_3(%arg0: i32) -> (i32, i32) {
    %c0_i32 = arith.constant 0 : i32
    %c0_i32_0 = arith.constant 0 : i32
    %c0_i32_1 = arith.constant 0 : i32
    return %c0_i32, %c0_i32_0 : i32, i32
  }
  func.func @transform_4(%arg0: i32) -> (i32, i32, i32) {
    %c0_i32 = arith.constant 0 : i32
    %c0_i32_0 = arith.constant 0 : i32
    %c0_i32_1 = arith.constant 0 : i32
    %c0_i32_2 = arith.constant 0 : i32
    return %c0_i32, %c0_i32_0, %c0_i32_1 : i32, i32, i32
  }
  func.func @transform_5(%arg0: i32) -> (i32, i32) {
    %c0_i32 = arith.constant 0 : i32
    %c0_i32_0 = arith.constant 0 : i32
    %c0_i32_1 = arith.constant 0 : i32
    return %c0_i32, %c0_i32_0 : i32, i32
  }
  func.func @transform_6(%arg0: i32) -> (i32, i32) {
    %c0_i32 = arith.constant 0 : i32
    %c0_i32_0 = arith.constant 0 : i32
    %c0_i32_1 = arith.constant 0 : i32
    return %c0_i32, %c0_i32_0 : i32, i32
  }
  func.func @transform_7(%arg0: i32) -> (i32, i32) {
    %c0_i32 = arith.constant 0 : i32
    %c0_i32_0 = arith.constant 0 : i32
    %c0_i32_1 = arith.constant 0 : i32
    return %c0_i32, %c0_i32_0 : i32, i32
  }
  func.func @transform_8(%arg0: i32) -> (i32, i32) {
    %c0_i32 = arith.constant 0 : i32
    %c0_i32_0 = arith.constant 0 : i32
    %c0_i32_1 = arith.constant 0 : i32
    return %c0_i32, %c0_i32_0 : i32, i32
  }
  func.func @transform_9(%arg0: i32) -> (i32, i32) {
    %c0_i32 = arith.constant 0 : i32
    %c0_i32_0 = arith.constant 0 : i32
    %c0_i32_1 = arith.constant 0 : i32
    return %c0_i32, %c0_i32_0 : i32, i32
  }
  func.func @transform_10(%arg0: i32) -> (i32, i32) {
    %c0_i32 = arith.constant 0 : i32
    %c0_i32_0 = arith.constant 0 : i32
    %c0_i32_1 = arith.constant 0 : i32
    return %c0_i32, %c0_i32_0 : i32, i32
  }
  func.func @transform_11(%arg0: i32) -> (i32, i32) {
    %c0_i32 = arith.constant 0 : i32
    %c0_i32_0 = arith.constant 0 : i32
    %c0_i32_1 = arith.constant 0 : i32
    return %c0_i32, %c0_i32_0 : i32, i32
  }
  func.func @transform_12(%arg0: i32) -> (i32, i32) {
    %c0_i32 = arith.constant 0 : i32
    %c0_i32_0 = arith.constant 0 : i32
    %c0_i32_1 = arith.constant 0 : i32
    return %c0_i32, %c0_i32_0 : i32, i32
  }
  func.func @transform_13(%arg0: i32) -> (i32, i32) {
    %c0_i32 = arith.constant 0 : i32
    %c0_i32_0 = arith.constant 0 : i32
    %c0_i32_1 = arith.constant 0 : i32
    return %c0_i32, %c0_i32_0 : i32, i32
  }
  func.func @transform_14(%arg0: i32) -> (i32, i32, i32, i32) {
    %c0_i32 = arith.constant 0 : i32
    %c0_i32_0 = arith.constant 0 : i32
    %c0_i32_1 = arith.constant 0 : i32
    %c0_i32_2 = arith.constant 0 : i32
    return %arg0, %c0_i32, %c0_i32_0, %c0_i32_1 : i32, i32, i32, i32
  }
}

</mosaic_0001>

<llo_original>
// kernel: _lambda_.2
$region0: #{_lambda_.2}
  #allocation0 [shape = 'u32[]', space=smem, size = 0x4, offset = 0x4, fixed_abs, tag = 'smem constant byte address 0x4 - core index']
  #allocation1 [shape = 'u32[144,128]{1,0:T(1,128)}', space=vmem, size = 0x12000, scoped, tag = 'internal scratch']
  #allocation2 [shape = 'f32[18,18,64]{2,1,0:T(8,128)}', space=vmem, size = 0x36000, scoped, tag = 'scratch operand']
  %s0 = inlined_call_operand.vmem [shape: f32[2,16,16,16], index: 0, kind: input, shape index: {}]
  %s1 = inlined_call_operand.vmem [shape: f32[16,64], index: 1, kind: input, shape index: {}]
  %s2 = inlined_call_operand.vmem [shape: f32[1,64], index: 2, kind: input, shape index: {}]
  %s3 = inlined_call_operand.vmem [shape: f32[1,64], index: 3, kind: input, shape index: {}]
  %s4 = inlined_call_operand.vmem [shape: f32[3,3,64], index: 4, kind: input, shape index: {}]
  %s5 = inlined_call_operand.vmem [shape: f32[1,64], index: 5, kind: input, shape index: {}]
  %s6 = inlined_call_operand.vmem [shape: f32[1,64], index: 6, kind: input, shape index: {}]
  %s7 = inlined_call_operand.vmem [shape: f32[64,4], index: 7, kind: input, shape index: {}]
  %s8 = inlined_call_operand.vmem [shape: f32[1,4], index: 8, kind: input, shape index: {}]
  %s9 = inlined_call_operand.vmem [shape: f32[4,64], index: 9, kind: input, shape index: {}]
  %s10 = inlined_call_operand.vmem [shape: f32[1,64], index: 10, kind: input, shape index: {}]
  %s11 = inlined_call_operand.vmem [shape: f32[64,16], index: 11, kind: input, shape index: {}]
  %s12 = inlined_call_operand.vmem [shape: f32[1,16], index: 12, kind: input, shape index: {}]
  %s13 = inlined_call_operand.vmem [shape: f32[1,16], index: 13, kind: input, shape index: {}]
  %s14 = inlined_call_operand.vmem [shape: f32[2,16,16,16], index: 14, kind: output, shape index: {}]
  %s15 = sld [smem:[#allocation0]]
  $region89: #{_lambda_.2} parent=0
    _
  %s17 = ssub.s32 1, %s15
  %s18 = scalar_select 0, %s17, %s15
  loop: start=0, step=1, limit=4
  $region2: #{_lambda_.2} parent=0 // loop_pre_header
    _
  $region3: #{_lambda_.2} parent=0 // loop_header
    %s20 = sphi 0, %s24
    %p21 = scmp.ge.s32.totalorder %s20, 4
    %s30 = sphi 0, %s32
    %s33 = sphi 0, %s30
    %s34 = sphi 0, %s33
    %s50 = sphi 0, %s34
    %s54 = sphi 0, %s54
    %s56 = sphi 0, %s54
    %s57 = sphi 0, %s56
    %s71 = sphi 0, %s57
    %s75 = sphi 0, %s75
    %s77 = sphi 0, %s75
    %s78 = sphi 0, %s77
    %s92 = sphi 0, %s78
    %s96 = sphi 0, %s96
    %s98 = sphi 0, %s96
    %s99 = sphi 0, %s98
    %s113 = sphi 0, %s99
    %s117 = sphi 0, %s117
    %s119 = sphi 0, %s117
    %s120 = sphi 0, %s119
    %s134 = sphi 0, %s120
    %s138 = sphi 0, %s138
    %s140 = sphi 0, %s138
    %s141 = sphi 0, %s140
    %s155 = sphi 0, %s141
    %s159 = sphi 0, %s159
    %s161 = sphi 0, %s159
    %s162 = sphi 0, %s161
    %s176 = sphi 0, %s162
    %s180 = sphi 0, %s180
    %s182 = sphi 0, %s180
    %s183 = sphi 0, %s182
    %s197 = sphi 0, %s183
    %s201 = sphi 0, %s201
    %s203 = sphi 0, %s201
    %s204 = sphi 0, %s203
    %s218 = sphi 0, %s204
    %s222 = sphi 0, %s222
    %s224 = sphi 0, %s222
    %s225 = sphi 0, %s224
    %s239 = sphi 0, %s225
    %s243 = sphi 0, %s243
    %s245 = sphi 0, %s243
    %s246 = sphi 0, %s245
    %s260 = sphi 0, %s246
    %s264 = sphi 0, %s264
    %s266 = sphi 0, %s264
    %s267 = sphi 0, %s266
    %s281 = sphi 0, %s267
    %s285 = sphi 0, %s285
    %s287 = sphi 0, %s285
    %s288 = sphi 0, %s287
    %s302 = sphi 0, %s288
    %s306 = sphi 0, %s306
    %s308 = sphi 0, %s306
    %s309 = sphi 0, %s308
    %s323 = sphi 0, %s309
    %s329 = sphi 0, %s331
    %s332 = sphi 0, %s329
    %s333 = sphi 0, %s332
    %s349 = sphi 0, %s333
  $region4: #{_lambda_.2} parent=0 // loop_header_branch
    %23 = sbr.rel (%p21) target = $region8
  $region5: #{_lambda_.2} parent=0 // loop_body
    %s25 = ssub.s32 %s20, 1
    %s26 = ssub.s32 %s20, 2
    %s27 = sadd.s32 %s20, 1
    %s28 = ssub.s32 %s20, %s27
    %p29 = scmp.eq.s32.totalorder %s28, 0
    %s31 = sadd.s32 %s30, 1
    %s32 = scalar_select %p29, %s30, %s31
    %p35 = pneg %p29
    %p36 = scmp.eq.s32.totalorder %s20, 1
    %p37 = por %p35, %p36
    %p38 = scmp.ne.s32.totalorder %s30, %s33
    %p39 = scmp.eq.s32.totalorder %s20, 0
    %p40 = por %p38, %p39
    %p41 = scmp.ne.s32.totalorder %s30, %s33
    %p42 = scmp.eq.s32.totalorder %s25, 1
    %p43 = por %p41, %p42
    %p44 = scmp.ne.s32.totalorder %s33, %s34
    %p45 = scmp.eq.s32.totalorder %s25, 0
    %p46 = por %p44, %p45
    %p47 = scmp.ne.s32.totalorder %s33, %s34
    %p48 = scmp.eq.s32.totalorder %s26, 1
    %p49 = por %p47, %p48
    %p51 = scmp.ne.s32.totalorder %s34, %s50
    %p52 = scmp.eq.s32.totalorder %s26, 0
    %p53 = por %p51, %p52
    %s55 = sadd.s32 %s54, 1
    %p58 = scmp.eq.s32.totalorder %s20, 1
    %p59 = scmp.ne.s32.totalorder %s54, %s56
    %p60 = scmp.eq.s32.totalorder %s20, 0
    %p61 = por %p59, %p60
    %p62 = scmp.ne.s32.totalorder %s54, %s56
    %p63 = scmp.eq.s32.totalorder %s25, 1
    %p64 = por %p62, %p63
    %p65 = scmp.ne.s32.totalorder %s56, %s57
    %p66 = scmp.eq.s32.totalorder %s25, 0
    %p67 = por %p65, %p66
    %p68 = scmp.ne.s32.totalorder %s56, %s57
    %p69 = scmp.eq.s32.totalorder %s26, 1
    %p70 = por %p68, %p69
    %p72 = scmp.ne.s32.totalorder %s57, %s71
    %p73 = scmp.eq.s32.totalorder %s26, 0
    %p74 = por %p72, %p73
    %s76 = sadd.s32 %s75, 1
    %p79 = scmp.eq.s32.totalorder %s20, 1
    %p80 = scmp.ne.s32.totalorder %s75, %s77
    %p81 = scmp.eq.s32.totalorder %s20, 0
    %p82 = por %p80, %p81
    %p83 = scmp.ne.s32.totalorder %s75, %s77
    %p84 = scmp.eq.s32.totalorder %s25, 1
    %p85 = por %p83, %p84
    %p86 = scmp.ne.s32.totalorder %s77, %s78
    %p87 = scmp.eq.s32.totalorder %s25, 0
    %p88 = por %p86, %p87
    %p89 = scmp.ne.s32.totalorder %s77, %s78
    %p90 = scmp.eq.s32.totalorder %s26, 1
    %p91 = por %p89, %p90
    %p93 = scmp.ne.s32.totalorder %s78, %s92
    %p94 = scmp.eq.s32.totalorder %s26, 0
    %p95 = por %p93, %p94
    %s97 = sadd.s32 %s96, 1
    %p100 = scmp.eq.s32.totalorder %s20, 1
    %p101 = scmp.ne.s32.totalorder %s96, %s98
    %p102 = scmp.eq.s32.totalorder %s20, 0
    %p103 = por %p101, %p102
    %p104 = scmp.ne.s32.totalorder %s96, %s98
    %p105 = scmp.eq.s32.totalorder %s25, 1
    %p106 = por %p104, %p105
    %p107 = scmp.ne.s32.totalorder %s98, %s99
    %p108 = scmp.eq.s32.totalorder %s25, 0
    %p109 = por %p107, %p108
    %p110 = scmp.ne.s32.totalorder %s98, %s99
    %p111 = scmp.eq.s32.totalorder %s26, 1
    %p112 = por %p110, %p111
    %p114 = scmp.ne.s32.totalorder %s99, %s113
    %p115 = scmp.eq.s32.totalorder %s26, 0
    %p116 = por %p114, %p115
    %s118 = sadd.s32 %s117, 1
    %p121 = scmp.eq.s32.totalorder %s20, 1
    %p122 = scmp.ne.s32.totalorder %s117, %s119
    %p123 = scmp.eq.s32.totalorder %s20, 0
    %p124 = por %p122, %p123
    %p125 = scmp.ne.s32.totalorder %s117, %s119
    %p126 = scmp.eq.s32.totalorder %s25, 1
    %p127 = por %p125, %p126
    %p128 = scmp.ne.s32.totalorder %s119, %s120
    %p129 = scmp.eq.s32.totalorder %s25, 0
    %p130 = por %p128, %p129
    %p131 = scmp.ne.s32.totalorder %s119, %s120
    %p132 = scmp.eq.s32.totalorder %s26, 1
    %p133 = por %p131, %p132
    %p135 = scmp.ne.s32.totalorder %s120, %s134
    %p136 = scmp.eq.s32.totalorder %s26, 0
    %p137 = por %p135, %p136
    %s139 = sadd.s32 %s138, 1
    %p142 = scmp.eq.s32.totalorder %s20, 1
    %p143 = scmp.ne.s32.totalorder %s138, %s140
    %p144 = scmp.eq.s32.totalorder %s20, 0
    %p145 = por %p143, %p144
    %p146 = scmp.ne.s32.totalorder %s138, %s140
    %p147 = scmp.eq.s32.totalorder %s25, 1
    %p148 = por %p146, %p147
    %p149 = scmp.ne.s32.totalorder %s140, %s141
    %p150 = scmp.eq.s32.totalorder %s25, 0
    %p151 = por %p149, %p150
    %p152 = scmp.ne.s32.totalorder %s140, %s141
    %p153 = scmp.eq.s32.totalorder %s26, 1
    %p154 = por %p152, %p153
    %p156 = scmp.ne.s32.totalorder %s141, %s155
    %p157 = scmp.eq.s32.totalorder %s26, 0
    %p158 = por %p156, %p157
    %s160 = sadd.s32 %s159, 1
    %p163 = scmp.eq.s32.totalorder %s20, 1
    %p164 = scmp.ne.s32.totalorder %s159, %s161
    %p165 = scmp.eq.s32.totalorder %s20, 0
    %p166 = por %p164, %p165
    %p167 = scmp.ne.s32.totalorder %s159, %s161
    %p168 = scmp.eq.s32.totalorder %s25, 1
    %p169 = por %p167, %p168
    %p170 = scmp.ne.s32.totalorder %s161, %s162
    %p171 = scmp.eq.s32.totalorder %s25, 0
    %p172 = por %p170, %p171
    %p173 = scmp.ne.s32.totalorder %s161, %s162
    %p174 = scmp.eq.s32.totalorder %s26, 1
    %p175 = por %p173, %p174
    %p177 = scmp.ne.s32.totalorder %s162, %s176
    %p178 = scmp.eq.s32.totalorder %s26, 0
    %p179 = por %p177, %p178
    %s181 = sadd.s32 %s180, 1
    %p184 = scmp.eq.s32.totalorder %s20, 1
    %p185 = scmp.ne.s32.totalorder %s180, %s182
    %p186 = scmp.eq.s32.totalorder %s20, 0
    %p187 = por %p185, %p186
    %p188 = scmp.ne.s32.totalorder %s180, %s182
    %p189 = scmp.eq.s32.totalorder %s25, 1
    %p190 = por %p188, %p189
    %p191 = scmp.ne.s32.totalorder %s182, %s183
    %p192 = scmp.eq.s32.totalorder %s25, 0
    %p193 = por %p191, %p192
    %p194 = scmp.ne.s32.totalorder %s182, %s183
    %p195 = scmp.eq.s32.totalorder %s26, 1
    %p196 = por %p194, %p195
    %p198 = scmp.ne.s32.totalorder %s183, %s197
    %p199 = scmp.eq.s32.totalorder %s26, 0
    %p200 = por %p198, %p199
    %s202 = sadd.s32 %s201, 1
    %p205 = scmp.eq.s32.totalorder %s20, 1
    %p206 = scmp.ne.s32.totalorder %s201, %s203
    %p207 = scmp.eq.s32.totalorder %s20, 0
    %p208 = por %p206, %p207
    %p209 = scmp.ne.s32.totalorder %s201, %s203
    %p210 = scmp.eq.s32.totalorder %s25, 1
    %p211 = por %p209, %p210
    %p212 = scmp.ne.s32.totalorder %s203, %s204
    %p213 = scmp.eq.s32.totalorder %s25, 0
    %p214 = por %p212, %p213
    %p215 = scmp.ne.s32.totalorder %s203, %s204
    %p216 = scmp.eq.s32.totalorder %s26, 1
    %p217 = por %p215, %p216
    %p219 = scmp.ne.s32.totalorder %s204, %s218
    %p220 = scmp.eq.s32.totalorder %s26, 0
    %p221 = por %p219, %p220
    %s223 = sadd.s32 %s222, 1
    %p226 = scmp.eq.s32.totalorder %s20, 1
    %p227 = scmp.ne.s32.totalorder %s222, %s224
    %p228 = scmp.eq.s32.totalorder %s20, 0
    %p229 = por %p227, %p228
    %p230 = scmp.ne.s32.totalorder %s222, %s224
    %p231 = scmp.eq.s32.totalorder %s25, 1
    %p232 = por %p230, %p231
    %p233 = scmp.ne.s32.totalorder %s224, %s225
    %p234 = scmp.eq.s32.totalorder %s25, 0
    %p235 = por %p233, %p234
    %p236 = scmp.ne.s32.totalorder %s224, %s225
    %p237 = scmp.eq.s32.totalorder %s26, 1
    %p238 = por %p236, %p237
    %p240 = scmp.ne.s32.totalorder %s225, %s239
    %p241 = scmp.eq.s32.totalorder %s26, 0
    %p242 = por %p240, %p241
    %s244 = sadd.s32 %s243, 1
    %p247 = scmp.eq.s32.totalorder %s20, 1
    %p248 = scmp.ne.s32.totalorder %s243, %s245
    %p249 = scmp.eq.s32.totalorder %s20, 0
    %p250 = por %p248, %p249
    %p251 = scmp.ne.s32.totalorder %s243, %s245
    %p252 = scmp.eq.s32.totalorder %s25, 1
    %p253 = por %p251, %p252
    %p254 = scmp.ne.s32.totalorder %s245, %s246
    %p255 = scmp.eq.s32.totalorder %s25, 0
    %p256 = por %p254, %p255
    %p257 = scmp.ne.s32.totalorder %s245, %s246
    %p258 = scmp.eq.s32.totalorder %s26, 1
    %p259 = por %p257, %p258
    %p261 = scmp.ne.s32.totalorder %s246, %s260
    %p262 = scmp.eq.s32.totalorder %s26, 0
    %p263 = por %p261, %p262
    %s265 = sadd.s32 %s264, 1
    %p268 = scmp.eq.s32.totalorder %s20, 1
    %p269 = scmp.ne.s32.totalorder %s264, %s266
    %p270 = scmp.eq.s32.totalorder %s20, 0
    %p271 = por %p269, %p270
    %p272 = scmp.ne.s32.totalorder %s264, %s266
    %p273 = scmp.eq.s32.totalorder %s25, 1
    %p274 = por %p272, %p273
    %p275 = scmp.ne.s32.totalorder %s266, %s267
    %p276 = scmp.eq.s32.totalorder %s25, 0
    %p277 = por %p275, %p276
    %p278 = scmp.ne.s32.totalorder %s266, %s267
    %p279 = scmp.eq.s32.totalorder %s26, 1
    %p280 = por %p278, %p279
    %p282 = scmp.ne.s32.totalorder %s267, %s281
    %p283 = scmp.eq.s32.totalorder %s26, 0
    %p284 = por %p282, %p283
    %s286 = sadd.s32 %s285, 1
    %p289 = scmp.eq.s32.totalorder %s20, 1
    %p290 = scmp.ne.s32.totalorder %s285, %s287
    %p291 = scmp.eq.s32.totalorder %s20, 0
    %p292 = por %p290, %p291
    %p293 = scmp.ne.s32.totalorder %s285, %s287
    %p294 = scmp.eq.s32.totalorder %s25, 1
    %p295 = por %p293, %p294
    %p296 = scmp.ne.s32.totalorder %s287, %s288
    %p297 = scmp.eq.s32.totalorder %s25, 0
    %p298 = por %p296, %p297
    %p299 = scmp.ne.s32.totalorder %s287, %s288
    %p300 = scmp.eq.s32.totalorder %s26, 1
    %p301 = por %p299, %p300
    %p303 = scmp.ne.s32.totalorder %s288, %s302
    %p304 = scmp.eq.s32.totalorder %s26, 0
    %p305 = por %p303, %p304
    %s307 = sadd.s32 %s306, 1
    %p310 = scmp.eq.s32.totalorder %s20, 1
    %p311 = scmp.ne.s32.totalorder %s306, %s308
    %p312 = scmp.eq.s32.totalorder %s20, 0
    %p313 = por %p311, %p312
    %p314 = scmp.ne.s32.totalorder %s306, %s308
    %p315 = scmp.eq.s32.totalorder %s25, 1
    %p316 = por %p314, %p315
    %p317 = scmp.ne.s32.totalorder %s308, %s309
    %p318 = scmp.eq.s32.totalorder %s25, 0
    %p319 = por %p317, %p318
    %p320 = scmp.ne.s32.totalorder %s308, %s309
    %p321 = scmp.eq.s32.totalorder %s26, 1
    %p322 = por %p320, %p321
    %p324 = scmp.ne.s32.totalorder %s309, %s323
    %p325 = scmp.eq.s32.totalorder %s26, 0
    %p326 = por %p324, %p325
    %s327 = ssub.s32 %s20, %s27
    %p328 = scmp.eq.s32.totalorder %s327, 0
    %s330 = sadd.s32 %s329, 1
    %s331 = scalar_select %p328, %s329, %s330
    %p334 = pneg %p328
    %p335 = scmp.eq.s32.totalorder %s20, 1
    %p336 = por %p334, %p335
    %p337 = scmp.ne.s32.totalorder %s329, %s332
    %p338 = scmp.eq.s32.totalorder %s20, 0
    %p339 = por %p337, %p338
    %p340 = scmp.ne.s32.totalorder %s329, %s332
    %p341 = scmp.eq.s32.totalorder %s25, 1
    %p342 = por %p340, %p341
    %p343 = scmp.ne.s32.totalorder %s332, %s333
    %p344 = scmp.eq.s32.totalorder %s25, 0
    %p345 = por %p343, %p344
    %p346 = scmp.ne.s32.totalorder %s332, %s333
    %p347 = scmp.eq.s32.totalorder %s26, 1
    %p348 = por %p346, %p347
    %p350 = scmp.ne.s32.totalorder %s333, %s349
    %p351 = scmp.eq.s32.totalorder %s26, 0
    %p352 = por %p350, %p351
    %p353 = scmp.le.s32.totalorder 1, %s20
    %p354 = scmp.lt.s32.totalorder %s20, 3
    %p355 = pnand %p353, %p354
    %p356 = pneg %p355
    // Predicated region
    $region9: #{_lambda_.2} parent=5 // pred_check
      _
    $region10: #{_lambda_.2} parent=5 // pred_check_branch
      %358 = sbr.rel (%p355) target = $region12
    $region11: #{_lambda_.2} parent=5 // pred_region
      %s359 = ssub.s32 %s20, 1
      // Predicated region
      $region13: #{_lambda_.2} parent=11 // pred_check
        %p360 = pneg %p67
      $region14: #{_lambda_.2} parent=11 // pred_check_branch
        %362 = sbr.rel (%p360) target = $region16
      $region15: #{_lambda_.2} parent=11 // pred_region
        _
      $region16: #{_lambda_.2} parent=11 // pred_fallthru
        _
      // Predicated region
      $region17: #{_lambda_.2} parent=11 // pred_check
        %p363 = pneg %p88
      $region18: #{_lambda_.2} parent=11 // pred_check_branch
        %365 = sbr.rel (%p363) target = $region20
      $region19: #{_lambda_.2} parent=11 // pred_region
        _
      $region20: #{_lambda_.2} parent=11 // pred_fallthru
        _
      // Predicated region
      $region21: #{_lambda_.2} parent=11 // pred_check
        %p366 = pneg %p109
      $region22: #{_lambda_.2} parent=11 // pred_check_branch
        %368 = sbr.rel (%p366) target = $region24
      $region23: #{_lambda_.2} parent=11 // pred_region
        _
      $region24: #{_lambda_.2} parent=11 // pred_fallthru
        _
      // Predicated region
      $region25: #{_lambda_.2} parent=11 // pred_check
        %p369 = pneg %p130
      $region26: #{_lambda_.2} parent=11 // pred_check_branch
        %371 = sbr.rel (%p369) target = $region28
      $region27: #{_lambda_.2} parent=11 // pred_region
        _
      $region28: #{_lambda_.2} parent=11 // pred_fallthru
        _
      // Predicated region
      $region29: #{_lambda_.2} parent=11 // pred_check
        %p372 = pneg %p151
      $region30: #{_lambda_.2} parent=11 // pred_check_branch
        %374 = sbr.rel (%p372) target = $region32
      $region31: #{_lambda_.2} parent=11 // pred_region
        _
      $region32: #{_lambda_.2} parent=11 // pred_fallthru
        _
      // Predicated region
      $region33: #{_lambda_.2} parent=11 // pred_check
        %p375 = pneg %p172
      $region34: #{_lambda_.2} parent=11 // pred_check_branch
        %377 = sbr.rel (%p375) target = $region36
      $region35: #{_lambda_.2} parent=11 // pred_region
        _
      $region36: #{_lambda_.2} parent=11 // pred_fallthru
        _
      // Predicated region
      $region37: #{_lambda_.2} parent=11 // pred_check
        %p378 = pneg %p193
      $region38: #{_lambda_.2} parent=11 // pred_check_branch
        %380 = sbr.rel (%p378) target = $region40
      $region39: #{_lambda_.2} parent=11 // pred_region
        _
      $region40: #{_lambda_.2} parent=11 // pred_fallthru
        _
      // Predicated region
      $region41: #{_lambda_.2} parent=11 // pred_check
        %p381 = pneg %p214
      $region42: #{_lambda_.2} parent=11 // pred_check_branch
        %383 = sbr.rel (%p381) target = $region44
      $region43: #{_lambda_.2} parent=11 // pred_region
        _
      $region44: #{_lambda_.2} parent=11 // pred_fallthru
        _
      // Predicated region
      $region45: #{_lambda_.2} parent=11 // pred_check
        %p384 = pneg %p235
      $region46: #{_lambda_.2} parent=11 // pred_check_branch
        %386 = sbr.rel (%p384) target = $region48
      $region47: #{_lambda_.2} parent=11 // pred_region
        _
      $region48: #{_lambda_.2} parent=11 // pred_fallthru
        _
      // Predicated region
      $region49: #{_lambda_.2} parent=11 // pred_check
        %p387 = pneg %p256
      $region50: #{_lambda_.2} parent=11 // pred_check_branch
        %389 = sbr.rel (%p387) target = $region52
      $region51: #{_lambda_.2} parent=11 // pred_region
        _
      $region52: #{_lambda_.2} parent=11 // pred_fallthru
        _
      // Predicated region
      $region53: #{_lambda_.2} parent=11 // pred_check
        %p390 = pneg %p277
      $region54: #{_lambda_.2} parent=11 // pred_check_branch
        %392 = sbr.rel (%p390) target = $region56
      $region55: #{_lambda_.2} parent=11 // pred_region
        _
      $region56: #{_lambda_.2} parent=11 // pred_fallthru
        _
      // Predicated region
      $region57: #{_lambda_.2} parent=11 // pred_check
        %p393 = pneg %p298
      $region58: #{_lambda_.2} parent=11 // pred_check_branch
        %395 = sbr.rel (%p393) target = $region60
      $region59: #{_lambda_.2} parent=11 // pred_region
        _
      $region60: #{_lambda_.2} parent=11 // pred_fallthru
        _
      // Predicated region
      $region61: #{_lambda_.2} parent=11 // pred_check
        %p396 = pneg %p319
      $region62: #{_lambda_.2} parent=11 // pred_check_branch
        %398 = sbr.rel (%p396) target = $region64
      $region63: #{_lambda_.2} parent=11 // pred_region
        _
      $region64: #{_lambda_.2} parent=11 // pred_fallthru
        _
    $region12: #{_lambda_.2} parent=5 // pred_fallthru
      _
    %p399 = scmp.lt.s32.totalorder %s20, 2
    // Predicated region
    $region65: #{_lambda_.2} parent=5 // pred_check
      %p400 = pneg %p399
    $region66: #{_lambda_.2} parent=5 // pred_check_branch
      %402 = sbr.rel (%p400) target = $region68
    $region67: #{_lambda_.2} parent=5 // pred_region
      // Predicated region
      $region69: #{_lambda_.2} parent=67 // pred_check
        %p403 = pneg %p40
      $region70: #{_lambda_.2} parent=67 // pred_check_branch
        %405 = sbr.rel (%p403) target = $region72
      $region71: #{_lambda_.2} parent=67 // pred_region
        %p406 = scmp.lt.s32.totalorder %s20, 1
        %s407 = scalar_select %p406, %s20, 1
        %s408 = smul.addr %s407, 32
        %s409 = smul.addr %s408, 8
        %s410 = scalar_lea.vmem %s0, %s409
      $region72: #{_lambda_.2} parent=67 // pred_fallthru
        _
    $region68: #{_lambda_.2} parent=5 // pred_fallthru
      _
    %p411 = scmp.le.s32.totalorder 1, %s20
    %p412 = scmp.lt.s32.totalorder %s20, 3
    %p413 = pnand %p411, %p412
    %p414 = pneg %p413
    // Predicated region
    $region73: #{_lambda_.2} parent=5 // pred_check
      _
    $region74: #{_lambda_.2} parent=5 // pred_check_branch
      %416 = sbr.rel (%p413) target = $region76
    $region75: #{_lambda_.2} parent=5 // pred_region
      %s417 = ssub.s32 %s20, 1
      %p418 = scmp.lt.s32.totalorder %s25, 1
      %s419 = scalar_select %p418, %s25, 1
      %s420 = smul.addr %s419, 32
      %s421 = smul.addr %s420, 8
      %s422 = scalar_lea.vmem %s0, %s421
      %p423 = pneg %p46
      %p424 = pneg %p43
      %p425 = pneg %p67
      %p426 = pneg %p64
      %p427 = pneg %p88
      %p428 = pneg %p85
      %p429 = pneg %p109
      %p430 = pneg %p106
      %p431 = pneg %p130
      %p432 = pneg %p127
      %p433 = pneg %p151
      %p434 = pneg %p148
      %p435 = pneg %p172
      %p436 = pneg %p169
      %p437 = pneg %p193
      %p438 = pneg %p190
      %p439 = pneg %p214
      %p440 = pneg %p211
      %p441 = pneg %p235
      %p442 = pneg %p232
      %p443 = pneg %p256
      %p444 = pneg %p253
      %p445 = pneg %p277
      %p446 = pneg %p274
      %p447 = pneg %p298
      %p448 = pneg %p295
      %p449 = pneg %p319
      %p450 = pneg %p316
      %p451 = pneg %p345
      %p452 = pneg %p342
      %p453 = scmp.lt.s32.totalorder %s25, 1
      %s454 = scalar_select %p453, %s25, 1
      %s455 = smul.addr %s454, 32
      %s456 = smul.addr %s455, 8
      %s457 = scalar_lea.vmem %s14, %s456
      %p458 = scmp.lt.s32.totalorder %s25, 1
      %s459 = scalar_select %p458, %s25, 1
      %s460 = smul.addr %s459, 32
      %s461 = smul.addr %s460, 8
      %s462 = scalar_lea.vmem %s0, %s461
      %p463 = scmp.lt.s32.totalorder %s25, 1
      %s464 = scalar_select %p463, %s25, 1
      %s465 = smul.addr %s464, 32
      %s466 = smul.addr %s465, 8
      %s467 = scalar_lea.vmem %s14, %s466
      %v468 = vld [vmem:[%s462] sm:$0xff]
      %v469 = vld [vmem:[%s462 + $0x8] sm:$0xff]
      %v470 = vld [vmem:[%s462 + $0x10] sm:$0xff]
      %v471 = vld [vmem:[%s462 + $0x18] sm:$0xff]
      %v472 = vld [vmem:[%s462 + $0x20] sm:$0xff]
      %v473 = vld [vmem:[%s462 + $0x28] sm:$0xff]
      %v474 = vld [vmem:[%s462 + $0x30] sm:$0xff]
      %v475 = vld [vmem:[%s462 + $0x38] sm:$0xff]
      %v476 = vld [vmem:[%s462 + $0x40] sm:$0xff]
      %v477 = vld [vmem:[%s462 + $0x48] sm:$0xff]
      %v478 = vld [vmem:[%s462 + $0x50] sm:$0xff]
      %v479 = vld [vmem:[%s462 + $0x58] sm:$0xff]
      %v480 = vld [vmem:[%s462 + $0x60] sm:$0xff]
      %v481 = vld [vmem:[%s462 + $0x68] sm:$0xff]
      %v482 = vld [vmem:[%s462 + $0x70] sm:$0xff]
      %v483 = vld [vmem:[%s462 + $0x78] sm:$0xff]
      %v484 = vld [vmem:[%s462 + $0x80] sm:$0xff]
      %v485 = vld [vmem:[%s462 + $0x88] sm:$0xff]
      %v486 = vld [vmem:[%s462 + $0x90] sm:$0xff]
      %v487 = vld [vmem:[%s462 + $0x98] sm:$0xff]
      %v488 = vld [vmem:[%s462 + $0xa0] sm:$0xff]
      %v489 = vld [vmem:[%s462 + $0xa8] sm:$0xff]
      %v490 = vld [vmem:[%s462 + $0xb0] sm:$0xff]
      %v491 = vld [vmem:[%s462 + $0xb8] sm:$0xff]
      %v492 = vld [vmem:[%s462 + $0xc0] sm:$0xff]
      %v493 = vld [vmem:[%s462 + $0xc8] sm:$0xff]
      %v494 = vld [vmem:[%s462 + $0xd0] sm:$0xff]
      %v495 = vld [vmem:[%s462 + $0xd8] sm:$0xff]
      %v496 = vld [vmem:[%s462 + $0xe0] sm:$0xff]
      %v497 = vld [vmem:[%s462 + $0xe8] sm:$0xff]
      %v498 = vld [vmem:[%s462 + $0xf0] sm:$0xff]
      %v499 = vld [vmem:[%s462 + $0xf8] sm:$0xff]
      %v500 = vld [vmem:[%s1] sm:$0xff]
      %v501 = vld [vmem:[%s1 + $0x8] sm:$0xff]
      %vm502 = vcmask 130048
      %v504 = vsel %vm502, %v468, 0
      %v507 = vsel %vm502, %v469, 0
      %v510 = vsel %vm502, %v470, 0
      %v513 = vsel %vm502, %v471, 0
      %v516 = vsel %vm502, %v472, 0
      %v519 = vsel %vm502, %v473, 0
      %v522 = vsel %vm502, %v474, 0
      %v525 = vsel %vm502, %v475, 0
      %v528 = vsel %vm502, %v476, 0
      %v531 = vsel %vm502, %v477, 0
      %v534 = vsel %vm502, %v478, 0
      %v537 = vsel %vm502, %v479, 0
      %v540 = vsel %vm502, %v480, 0
      %v543 = vsel %vm502, %v481, 0
      %v546 = vsel %vm502, %v482, 0
      %v549 = vsel %vm502, %v483, 0
      %v552 = vsel %vm502, %v484, 0
      %v555 = vsel %vm502, %v485, 0
      %v558 = vsel %vm502, %v486, 0
      %v561 = vsel %vm502, %v487, 0
      %v564 = vsel %vm502, %v488, 0
      %v567 = vsel %vm502, %v489, 0
      %v570 = vsel %vm502, %v490, 0
      %v573 = vsel %vm502, %v491, 0
      %v576 = vsel %vm502, %v492, 0
      %v579 = vsel %vm502, %v493, 0
      %v582 = vsel %vm502, %v494, 0
      %v585 = vsel %vm502, %v495, 0
      %v588 = vsel %vm502, %v496, 0
      %v591 = vsel %vm502, %v497, 0
      %v594 = vsel %vm502, %v498, 0
      %v597 = vsel %vm502, %v499, 0
      %599 = vmatprep.subr.mxu0 0.0
      %600 = vmatpush1.msra.mxu0 %v500
      %601 = vmatprep.subr.mxu0 0.0
      %602 = vmatpush1.msra.mxu0 %v501
      %603 = vmatprep.subr.mxu0 0.0
      %604 = vmatpush1.msra.mxu0 0.0
      %605 = vmatprep.subr.mxu0 0.0
      %606 = vmatpush1.msra.mxu0 0.0
      %607 = vmatprep.subr.mxu0 0.0
      %608 = vmatpush1.msra.mxu0 0.0
      %609 = vmatprep.subr.mxu0 0.0
      %610 = vmatpush1.msra.mxu0 0.0
      %611 = vmatprep.subr.mxu0 0.0
      %612 = vmatpush1.msra.mxu0 0.0
      %613 = vmatprep.subr.mxu0 0.0
      %614 = vmatpush1.msra.mxu0 0.0
      %615 = vmatprep.subr.mxu0 0.0
      %616 = vmatpush1.msra.mxu0 0.0
      %617 = vmatprep.subr.mxu0 0.0
      %618 = vmatpush1.msra.mxu0 0.0
      %619 = vmatprep.subr.mxu0 0.0
      %620 = vmatpush1.msra.mxu0 0.0
      %621 = vmatprep.subr.mxu0 0.0
      %622 = vmatpush1.msra.mxu0 0.0
      %623 = vmatprep.subr.mxu0 0.0
      %624 = vmatpush1.msra.mxu0 0.0
      %625 = vmatprep.subr.mxu0 0.0
      %626 = vmatpush1.msra.mxu0 0.0
      %627 = vmatprep.subr.mxu0 0.0
      %628 = vmatpush1.msra.mxu0 0.0
      %629 = vmatprep.subr.mxu0 0.0
      %630 = vmatpush1.msra.mxu0 0.0
      %631 = vmatprep.subr.mxu0 0.0
      %632 = vmatpush1.msra.mxu0 0.0
      %633 = vmatprep.subr.mxu0 0.0
      %634 = vmatpush1.msra.mxu0 0.0
      %635 = vmatprep.subr.mxu0 0.0
      %636 = vmatpush1.msra.mxu0 0.0
      %637 = vmatprep.subr.mxu0 0.0
      %638 = vmatpush1.msra.mxu0 0.0
      %639 = vmatprep.subr.mxu0 0.0
      %640 = vmatpush1.msra.mxu0 0.0
      %641 = vmatprep.subr.mxu0 0.0
      %642 = vmatpush1.msra.mxu0 0.0
      %643 = vmatprep.subr.mxu0 0.0
      %644 = vmatpush1.msra.mxu0 0.0
      %645 = vmatprep.subr.mxu0 0.0
      %646 = vmatpush1.msra.mxu0 0.0
      %647 = vmatprep.subr.mxu0 0.0
      %648 = vmatpush1.msra.mxu0 0.0
      %649 = vmatprep.subr.mxu0 0.0
      %650 = vmatpush1.msra.mxu0 0.0
      %651 = vmatprep.subr.mxu0 0.0
      %652 = vmatpush1.msra.mxu0 0.0
      %653 = vmatprep.subr.mxu0 0.0
      %654 = vmatpush1.msra.mxu0 0.0
      %655 = vmatprep.subr.mxu0 0.0
      %656 = vmatpush1.msra.mxu0 0.0
      %657 = vmatprep.subr.mxu0 0.0
      %658 = vmatpush1.msra.mxu0 0.0
      %659 = vmatprep.subr.mxu0 0.0
      %660 = vmatpush1.msra.mxu0 0.0
      %661 = vmatprep.subr.mxu0 0.0
      %662 = vmatpush1.msra.mxu0 0.0
      %663 = vmatprep.mubr.f32.mxu0 0.0
      %664 = vmatmul.mubr.f32.gmra.mrb[0].mxu0 %v504
      %v665 = vpop.f32.mrb[0].mxu0
      %v666 = vadd.f32 0.0, %v665
      %v667 = vpop.f32.mrb[0].mxu0
      %668 = vmatprep.mubr.f32.mxu0 0.0
      %669 = vmatmul.mubr.f32.gmra.mrb[0].mxu0 %v507
      %v670 = vpop.f32.mrb[0].mxu0
      %v671 = vadd.f32 0.0, %v670
      %v672 = vpop.f32.mrb[0].mxu0
      %673 = vmatprep.mubr.f32.mxu0 0.0
      %674 = vmatmul.mubr.f32.gmra.mrb[0].mxu0 %v510
      %v675 = vpop.f32.mrb[0].mxu0
      %v676 = vadd.f32 0.0, %v675
      %v677 = vpop.f32.mrb[0].mxu0
      %678 = vmatprep.mubr.f32.mxu0 0.0
      %679 = vmatmul.mubr.f32.gmra.mrb[0].mxu0 %v513
      %v680 = vpop.f32.mrb[0].mxu0
      %v681 = vadd.f32 0.0, %v680
      %v682 = vpop.f32.mrb[0].mxu0
      %683 = vmatprep.mubr.f32.mxu0 0.0
      %684 = vmatmul.mubr.f32.gmra.mrb[0].mxu0 %v516
      %v685 = vpop.f32.mrb[0].mxu0
      %v686 = vadd.f32 0.0, %v685
      %v687 = vpop.f32.mrb[0].mxu0
      %688 = vmatprep.mubr.f32.mxu0 0.0
      %689 = vmatmul.mubr.f32.gmra.mrb[0].mxu0 %v519
      %v690 = vpop.f32.mrb[0].mxu0
      %v691 = vadd.f32 0.0, %v690
      %v692 = vpop.f32.mrb[0].mxu0
      %693 = vmatprep.mubr.f32.mxu0 0.0
      %694 = vmatmul.mubr.f32.gmra.mrb[0].mxu0 %v522
      %v695 = vpop.f32.mrb[0].mxu0
      %v696 = vadd.f32 0.0, %v695
      %v697 = vpop.f32.mrb[0].mxu0
      %698 = vmatprep.mubr.f32.mxu0 0.0
      %699 = vmatmul.mubr.f32.gmra.mrb[0].mxu0 %v525
      %v700 = vpop.f32.mrb[0].mxu0
      %v701 = vadd.f32 0.0, %v700
      %v702 = vpop.f32.mrb[0].mxu0
      %703 = vmatprep.mubr.f32.mxu0 0.0
      %704 = vmatmul.mubr.f32.gmra.mrb[0].mxu0 %v528
      %v705 = vpop.f32.mrb[0].mxu0
      %v706 = vadd.f32 0.0, %v705
      %v707 = vpop.f32.mrb[0].mxu0
      %708 = vmatprep.mubr.f32.mxu0 0.0
      %709 = vmatmul.mubr.f32.gmra.mrb[0].mxu0 %v531
      %v710 = vpop.f32.mrb[0].mxu0
      %v711 = vadd.f32 0.0, %v710
      %v712 = vpop.f32.mrb[0].mxu0
      %713 = vmatprep.mubr.f32.mxu0 0.0
      %714 = vmatmul.mubr.f32.gmra.mrb[0].mxu0 %v534
      %v715 = vpop.f32.mrb[0].mxu0
      %v716 = vadd.f32 0.0, %v715
      %v717 = vpop.f32.mrb[0].mxu0
      %718 = vmatprep.mubr.f32.mxu0 0.0
      %719 = vmatmul.mubr.f32.gmra.mrb[0].mxu0 %v537
      %v720 = vpop.f32.mrb[0].mxu0
      %v721 = vadd.f32 0.0, %v720
      %v722 = vpop.f32.mrb[0].mxu0
      %723 = vmatprep.mubr.f32.mxu0 0.0
      %724 = vmatmul.mubr.f32.gmra.mrb[0].mxu0 %v540
      %v725 = vpop.f32.mrb[0].mxu0
      %v726 = vadd.f32 0.0, %v725
      %v727 = vpop.f32.mrb[0].mxu0
      %728 = vmatprep.mubr.f32.mxu0 0.0
      %729 = vmatmul.mubr.f32.gmra.mrb[0].mxu0 %v543
      %v730 = vpop.f32.mrb[0].mxu0
      %v731 = vadd.f32 0.0, %v730
      %v732 = vpop.f32.mrb[0].mxu0
      %733 = vmatprep.mubr.f32.mxu0 0.0
      %734 = vmatmul.mubr.f32.gmra.mrb[0].mxu0 %v546
      %v735 = vpop.f32.mrb[0].mxu0
      %v736 = vadd.f32 0.0, %v735
      %v737 = vpop.f32.mrb[0].mxu0
      %738 = vmatprep.mubr.f32.mxu0 0.0
      %739 = vmatmul.mubr.f32.gmra.mrb[0].mxu0 %v549
      %v740 = vpop.f32.mrb[0].mxu0
      %v741 = vadd.f32 0.0, %v740
      %v742 = vpop.f32.mrb[0].mxu0
      %743 = vmatprep.mubr.f32.mxu0 0.0
      %744 = vmatmul.mubr.f32.gmra.mrb[0].mxu0 %v552
      %v745 = vpop.f32.mrb[0].mxu0
      %v746 = vadd.f32 0.0, %v745
      %v747 = vpop.f32.mrb[0].mxu0
      %748 = vmatprep.mubr.f32.mxu0 0.0
      %749 = vmatmul.mubr.f32.gmra.mrb[0].mxu0 %v555
      %v750 = vpop.f32.mrb[0].mxu0
      %v751 = vadd.f32 0.0, %v750
      %v752 = vpop.f32.mrb[0].mxu0
      %753 = vmatprep.mubr.f32.mxu0 0.0
      %754 = vmatmul.mubr.f32.gmra.mrb[0].mxu0 %v558
      %v755 = vpop.f32.mrb[0].mxu0
      %v756 = vadd.f32 0.0, %v755
      %v757 = vpop.f32.mrb[0].mxu0
      %758 = vmatprep.mubr.f32.mxu0 0.0
      %759 = vmatmul.mubr.f32.gmra.mrb[0].mxu0 %v561
      %v760 = vpop.f32.mrb[0].mxu0
      %v761 = vadd.f32 0.0, %v760
      %v762 = vpop.f32.mrb[0].mxu0
      %763 = vmatprep.mubr.f32.mxu0 0.0
      %764 = vmatmul.mubr.f32.gmra.mrb[0].mxu0 %v564
      %v765 = vpop.f32.mrb[0].mxu0
      %v766 = vadd.f32 0.0, %v765
      %v767 = vpop.f32.mrb[0].mxu0
      %768 = vmatprep.mubr.f32.mxu0 0.0
      %769 = vmatmul.mubr.f32.gmra.mrb[0].mxu0 %v567
      %v770 = vpop.f32.mrb[0].mxu0
      %v771 = vadd.f32 0.0, %v770
      %v772 = vpop.f32.mrb[0].mxu0
      %773 = vmatprep.mubr.f32.mxu0 0.0
      %774 = vmatmul.mubr.f32.gmra.mrb[0].mxu0 %v570
      %v775 = vpop.f32.mrb[0].mxu0
      %v776 = vadd.f32 0.0, %v775
      %v777 = vpop.f32.mrb[0].mxu0
      %778 = vmatprep.mubr.f32.mxu0 0.0
      %779 = vmatmul.mubr.f32.gmra.mrb[0].mxu0 %v573
      %v780 = vpop.f32.mrb[0].mxu0
      %v781 = vadd.f32 0.0, %v780
      %v782 = vpop.f32.mrb[0].mxu0
      %783 = vmatprep.mubr.f32.mxu0 0.0
      %784 = vmatmul.mubr.f32.gmra.mrb[0].mxu0 %v576
      %v785 = vpop.f32.mrb[0].mxu0
      %v786 = vadd.f32 0.0, %v785
      %v787 = vpop.f32.mrb[0].mxu0
      %788 = vmatprep.mubr.f32.mxu0 0.0
      %789 = vmatmul.mubr.f32.gmra.mrb[0].mxu0 %v579
      %v790 = vpop.f32.mrb[0].mxu0
      %v791 = vadd.f32 0.0, %v790
      %v792 = vpop.f32.mrb[0].mxu0
      %793 = vmatprep.mubr.f32.mxu0 0.0
      %794 = vmatmul.mubr.f32.gmra.mrb[0].mxu0 %v582
      %v795 = vpop.f32.mrb[0].mxu0
      %v796 = vadd.f32 0.0, %v795
      %v797 = vpop.f32.mrb[0].mxu0
      %798 = vmatprep.mubr.f32.mxu0 0.0
      %799 = vmatmul.mubr.f32.gmra.mrb[0].mxu0 %v585
      %v800 = vpop.f32.mrb[0].mxu0
      %v801 = vadd.f32 0.0, %v800
      %v802 = vpop.f32.mrb[0].mxu0
      %803 = vmatprep.mubr.f32.mxu0 0.0
      %804 = vmatmul.mubr.f32.gmra.mrb[0].mxu0 %v588
      %v805 = vpop.f32.mrb[0].mxu0
      %v806 = vadd.f32 0.0, %v805
      %v807 = vpop.f32.mrb[0].mxu0
      %808 = vmatprep.mubr.f32.mxu0 0.0
      %809 = vmatmul.mubr.f32.gmra.mrb[0].mxu0 %v591
      %v810 = vpop.f32.mrb[0].mxu0
      %v811 = vadd.f32 0.0, %v810
      %v812 = vpop.f32.mrb[0].mxu0
      %813 = vmatprep.mubr.f32.mxu0 0.0
      %814 = vmatmul.mubr.f32.gmra.mrb[0].mxu0 %v594
      %v815 = vpop.f32.mrb[0].mxu0
      %v816 = vadd.f32 0.0, %v815
      %v817 = vpop.f32.mrb[0].mxu0
      %818 = vmatprep.mubr.f32.mxu0 0.0
      %819 = vmatmul.mubr.f32.gmra.mrb[0].mxu0 %v597
      %v820 = vpop.f32.mrb[0].mxu0
      %v821 = vadd.f32 0.0, %v820
      %v822 = vpop.f32.mrb[0].mxu0
      %823 = vdwg.mxu0
      %v824 = vld [vmem:[%s2] sm:$0x1]
      %v826 = vlaneseq
      %v827 = vshrl.u32 %v826, 7
      %v828 = vsub.s32 0, %v827
      %v829 = vrot.slane %v824, %v828
      %v831 = vmul.f32 %v666, %v829
      %v832 = vmul.f32 %v671, %v829
      %v833 = vmul.f32 %v676, %v829
      %v834 = vmul.f32 %v681, %v829
      %v835 = vmul.f32 %v686, %v829
      %v836 = vmul.f32 %v691, %v829
      %v837 = vmul.f32 %v696, %v829
      %v838 = vmul.f32 %v701, %v829
      %v839 = vmul.f32 %v706, %v829
      %v840 = vmul.f32 %v711, %v829
      %v841 = vmul.f32 %v716, %v829
      %v842 = vmul.f32 %v721, %v829
      %v843 = vmul.f32 %v726, %v829
      %v844 = vmul.f32 %v731, %v829
      %v845 = vmul.f32 %v736, %v829
      %v846 = vmul.f32 %v741, %v829
      %v847 = vmul.f32 %v746, %v829
      %v848 = vmul.f32 %v751, %v829
      %v849 = vmul.f32 %v756, %v829
      %v850 = vmul.f32 %v761, %v829
      %v851 = vmul.f32 %v766, %v829
      %v852 = vmul.f32 %v771, %v829
      %v853 = vmul.f32 %v776, %v829
      %v854 = vmul.f32 %v781, %v829
      %v855 = vmul.f32 %v786, %v829
      %v856 = vmul.f32 %v791, %v829
      %v857 = vmul.f32 %v796, %v829
      %v858 = vmul.f32 %v801, %v829
      %v859 = vmul.f32 %v806, %v829
      %v860 = vmul.f32 %v811, %v829
      %v861 = vmul.f32 %v816, %v829
      %v862 = vmul.f32 %v821, %v829
      %v863 = vld [vmem:[%s3] sm:$0x1]
      %v865 = vlaneseq
      %v866 = vshrl.u32 %v865, 7
      %v867 = vsub.s32 0, %v866
      %v868 = vrot.slane %v863, %v867
      %v870 = vadd.f32 %v831, %v868
      %v871 = vadd.f32 %v832, %v868
      %v872 = vadd.f32 %v833, %v868
      %v873 = vadd.f32 %v834, %v868
      %v874 = vadd.f32 %v835, %v868
      %v875 = vadd.f32 %v836, %v868
      %v876 = vadd.f32 %v837, %v868
      %v877 = vadd.f32 %v838, %v868
      %v878 = vadd.f32 %v839, %v868
      %v879 = vadd.f32 %v840, %v868
      %v880 = vadd.f32 %v841, %v868
      %v881 = vadd.f32 %v842, %v868
      %v882 = vadd.f32 %v843, %v868
      %v883 = vadd.f32 %v844, %v868
      %v884 = vadd.f32 %v845, %v868
      %v885 = vadd.f32 %v846, %v868
      %v886 = vadd.f32 %v847, %v868
      %v887 = vadd.f32 %v848, %v868
      %v888 = vadd.f32 %v849, %v868
      %v889 = vadd.f32 %v850, %v868
      %v890 = vadd.f32 %v851, %v868
      %v891 = vadd.f32 %v852, %v868
      %v892 = vadd.f32 %v853, %v868
      %v893 = vadd.f32 %v854, %v868
      %v894 = vadd.f32 %v855, %v868
      %v895 = vadd.f32 %v856, %v868
      %v896 = vadd.f32 %v857, %v868
      %v897 = vadd.f32 %v858, %v868
      %v898 = vadd.f32 %v859, %v868
      %v899 = vadd.f32 %v860, %v868
      %v900 = vadd.f32 %v861, %v868
      %v901 = vadd.f32 %v862, %v868
      %v902 = vxor.u32 %v870, 2147483648
      %v903 = vxor.u32 %v871, 2147483648
      %v904 = vxor.u32 %v872, 2147483648
      %v905 = vxor.u32 %v873, 2147483648
      %v906 = vxor.u32 %v874, 2147483648
      %v907 = vxor.u32 %v875, 2147483648
      %v908 = vxor.u32 %v876, 2147483648
      %v909 = vxor.u32 %v877, 2147483648
      %v910 = vxor.u32 %v878, 2147483648
      %v911 = vxor.u32 %v879, 2147483648
      %v912 = vxor.u32 %v880, 2147483648
      %v913 = vxor.u32 %v881, 2147483648
      %v914 = vxor.u32 %v882, 2147483648
      %v915 = vxor.u32 %v883, 2147483648
      %v916 = vxor.u32 %v884, 2147483648
      %v917 = vxor.u32 %v885, 2147483648
      %v918 = vxor.u32 %v886, 2147483648
      %v919 = vxor.u32 %v887, 2147483648
      %v920 = vxor.u32 %v888, 2147483648
      %v921 = vxor.u32 %v889, 2147483648
      %v922 = vxor.u32 %v890, 2147483648
      %v923 = vxor.u32 %v891, 2147483648
      %v924 = vxor.u32 %v892, 2147483648
      %v925 = vxor.u32 %v893, 2147483648
      %v926 = vxor.u32 %v894, 2147483648
      %v927 = vxor.u32 %v895, 2147483648
      %v928 = vxor.u32 %v896, 2147483648
      %v929 = vxor.u32 %v897, 2147483648
      %v930 = vxor.u32 %v898, 2147483648
      %v931 = vxor.u32 %v899, 2147483648
      %v932 = vxor.u32 %v900, 2147483648
      %v933 = vxor.u32 %v901, 2147483648
      %v934 = vmul.f32 %v902, 1.442695
      %v935 = vpow.pop %v934
      %v936 = vmul.f32 %v903, 1.442695
      %v937 = vpow.pop %v936
      %v938 = vmul.f32 %v904, 1.442695
      %v939 = vpow.pop %v938
      %v940 = vmul.f32 %v905, 1.442695
      %v941 = vpow.pop %v940
      %v942 = vmul.f32 %v906, 1.442695
      %v943 = vpow.pop %v942
      %v944 = vmul.f32 %v907, 1.442695
      %v945 = vpow.pop %v944
      %v946 = vmul.f32 %v908, 1.442695
      %v947 = vpow.pop %v946
      %v948 = vmul.f32 %v909, 1.442695
      %v949 = vpow.pop %v948
      %v950 = vmul.f32 %v910, 1.442695
      %v951 = vpow.pop %v950
      %v952 = vmul.f32 %v911, 1.442695
      %v953 = vpow.pop %v952
      %v954 = vmul.f32 %v912, 1.442695
      %v955 = vpow.pop %v954
      %v956 = vmul.f32 %v913, 1.442695
      %v957 = vpow.pop %v956
      %v958 = vmul.f32 %v914, 1.442695
      %v959 = vpow.pop %v958
      %v960 = vmul.f32 %v915, 1.442695
      %v961 = vpow.pop %v960
      %v962 = vmul.f32 %v916, 1.442695
      %v963 = vpow.pop %v962
      %v964 = vmul.f32 %v917, 1.442695
      %v965 = vpow.pop %v964
      %v966 = vmul.f32 %v918, 1.442695
      %v967 = vpow.pop %v966
      %v968 = vmul.f32 %v919, 1.442695
      %v969 = vpow.pop %v968
      %v970 = vmul.f32 %v920, 1.442695
      %v971 = vpow.pop %v970
      %v972 = vmul.f32 %v921, 1.442695
      %v973 = vpow.pop %v972
      %v974 = vmul.f32 %v922, 1.442695
      %v975 = vpow.pop %v974
      %v976 = vmul.f32 %v923, 1.442695
      %v977 = vpow.pop %v976
      %v978 = vmul.f32 %v924, 1.442695
      %v979 = vpow.pop %v978
      %v980 = vmul.f32 %v925, 1.442695
      %v981 = vpow.pop %v980
      %v982 = vmul.f32 %v926, 1.442695
      %v983 = vpow.pop %v982
      %v984 = vmul.f32 %v927, 1.442695
      %v985 = vpow.pop %v984
      %v986 = vmul.f32 %v928, 1.442695
      %v987 = vpow.pop %v986
      %v988 = vmul.f32 %v929, 1.442695
      %v989 = vpow.pop %v988
      %v990 = vmul.f32 %v930, 1.442695
      %v991 = vpow.pop %v990
      %v992 = vmul.f32 %v931, 1.442695
      %v993 = vpow.pop %v992
      %v994 = vmul.f32 %v932, 1.442695
      %v995 = vpow.pop %v994
      %v996 = vmul.f32 %v933, 1.442695
      %v997 = vpow.pop %v996
      %v998 = vadd.f32 %v935, 1.0
      %v999 = vadd.f32 %v937, 1.0
      %v1000 = vadd.f32 %v939, 1.0
      %v1001 = vadd.f32 %v941, 1.0
      %v1002 = vadd.f32 %v943, 1.0
      %v1003 = vadd.f32 %v945, 1.0
      %v1004 = vadd.f32 %v947, 1.0
      %v1005 = vadd.f32 %v949, 1.0
      %v1006 = vadd.f32 %v951, 1.0
      %v1007 = vadd.f32 %v953, 1.0
      %v1008 = vadd.f32 %v955, 1.0
      %v1009 = vadd.f32 %v957, 1.0
      %v1010 = vadd.f32 %v959, 1.0
      %v1011 = vadd.f32 %v961, 1.0
      %v1012 = vadd.f32 %v963, 1.0
      %v1013 = vadd.f32 %v965, 1.0
      %v1014 = vadd.f32 %v967, 1.0
      %v1015 = vadd.f32 %v969, 1.0
      %v1016 = vadd.f32 %v971, 1.0
      %v1017 = vadd.f32 %v973, 1.0
      %v1018 = vadd.f32 %v975, 1.0
      %v1019 = vadd.f32 %v977, 1.0
      %v1020 = vadd.f32 %v979, 1.0
      %v1021 = vadd.f32 %v981, 1.0
      %v1022 = vadd.f32 %v983, 1.0
      %v1023 = vadd.f32 %v985, 1.0
      %v1024 = vadd.f32 %v987, 1.0
      %v1025 = vadd.f32 %v989, 1.0
      %v1026 = vadd.f32 %v991, 1.0
      %v1027 = vadd.f32 %v993, 1.0
      %v1028 = vadd.f32 %v995, 1.0
      %v1029 = vadd.f32 %v997, 1.0
      %v1030 = vrcp.pop %v998
      %v1031 = vmul.f32 1.0, %v1030
      %v1032 = vrcp.pop %v999
      %v1033 = vmul.f32 1.0, %v1032
      %v1034 = vrcp.pop %v1000
      %v1035 = vmul.f32 1.0, %v1034
      %v1036 = vrcp.pop %v1001
      %v1037 = vmul.f32 1.0, %v1036
      %v1038 = vrcp.pop %v1002
      %v1039 = vmul.f32 1.0, %v1038
      %v1040 = vrcp.pop %v1003
      %v1041 = vmul.f32 1.0, %v1040
      %v1042 = vrcp.pop %v1004
      %v1043 = vmul.f32 1.0, %v1042
      %v1044 = vrcp.pop %v1005
      %v1045 = vmul.f32 1.0, %v1044
      %v1046 = vrcp.pop %v1006
      %v1047 = vmul.f32 1.0, %v1046
      %v1048 = vrcp.pop %v1007
      %v1049 = vmul.f32 1.0, %v1048
      %v1050 = vrcp.pop %v1008
      %v1051 = vmul.f32 1.0, %v1050
      %v1052 = vrcp.pop %v1009
      %v1053 = vmul.f32 1.0, %v1052
      %v1054 = vrcp.pop %v1010
      %v1055 = vmul.f32 1.0, %v1054
      %v1056 = vrcp.pop %v1011
      %v1057 = vmul.f32 1.0, %v1056
      %v1058 = vrcp.pop %v1012
      %v1059 = vmul.f32 1.0, %v1058
      %v1060 = vrcp.pop %v1013
      %v1061 = vmul.f32 1.0, %v1060
      %v1062 = vrcp.pop %v1014
      %v1063 = vmul.f32 1.0, %v1062
      %v1064 = vrcp.pop %v1015
      %v1065 = vmul.f32 1.0, %v1064
      %v1066 = vrcp.pop %v1016
      %v1067 = vmul.f32 1.0, %v1066
      %v1068 = vrcp.pop %v1017
      %v1069 = vmul.f32 1.0, %v1068
      %v1070 = vrcp.pop %v1018
      %v1071 = vmul.f32 1.0, %v1070
      %v1072 = vrcp.pop %v1019
      %v1073 = vmul.f32 1.0, %v1072
      %v1074 = vrcp.pop %v1020
      %v1075 = vmul.f32 1.0, %v1074
      %v1076 = vrcp.pop %v1021
      %v1077 = vmul.f32 1.0, %v1076
      %v1078 = vrcp.pop %v1022
      %v1079 = vmul.f32 1.0, %v1078
      %v1080 = vrcp.pop %v1023
      %v1081 = vmul.f32 1.0, %v1080
      %v1082 = vrcp.pop %v1024
      %v1083 = vmul.f32 1.0, %v1082
      %v1084 = vrcp.pop %v1025
      %v1085 = vmul.f32 1.0, %v1084
      %v1086 = vrcp.pop %v1026
      %v1087 = vmul.f32 1.0, %v1086
      %v1088 = vrcp.pop %v1027
      %v1089 = vmul.f32 1.0, %v1088
      %v1090 = vrcp.pop %v1028
      %v1091 = vmul.f32 1.0, %v1090
      %v1092 = vrcp.pop %v1029
      %v1093 = vmul.f32 1.0, %v1092
      %v1094 = vmul.f32 %v870, %v1031
      %v1095 = vmul.f32 %v871, %v1033
      %v1096 = vmul.f32 %v872, %v1035
      %v1097 = vmul.f32 %v873, %v1037
      %v1098 = vmul.f32 %v874, %v1039
      %v1099 = vmul.f32 %v875, %v1041
      %v1100 = vmul.f32 %v876, %v1043
      %v1101 = vmul.f32 %v877, %v1045
      %v1102 = vmul.f32 %v878, %v1047
      %v1103 = vmul.f32 %v879, %v1049
      %v1104 = vmul.f32 %v880, %v1051
      %v1105 = vmul.f32 %v881, %v1053
      %v1106 = vmul.f32 %v882, %v1055
      %v1107 = vmul.f32 %v883, %v1057
      %v1108 = vmul.f32 %v884, %v1059
      %v1109 = vmul.f32 %v885, %v1061
      %v1110 = vmul.f32 %v886, %v1063
      %v1111 = vmul.f32 %v887, %v1065
      %v1112 = vmul.f32 %v888, %v1067
      %v1113 = vmul.f32 %v889, %v1069
      %v1114 = vmul.f32 %v890, %v1071
      %v1115 = vmul.f32 %v891, %v1073
      %v1116 = vmul.f32 %v892, %v1075
      %v1117 = vmul.f32 %v893, %v1077
      %v1118 = vmul.f32 %v894, %v1079
      %v1119 = vmul.f32 %v895, %v1081
      %v1120 = vmul.f32 %v896, %v1083
      %v1121 = vmul.f32 %v897, %v1085
      %v1122 = vmul.f32 %v898, %v1087
      %v1123 = vmul.f32 %v899, %v1089
      %v1124 = vmul.f32 %v900, %v1091
      %v1125 = vmul.f32 %v901, %v1093
      %vm1126 = vcmask 523264
      %1127 = vst.msk [vmem:[#allocation2] sm:$0xff] %vm1126, 0.0
      %1128 = vst.msk [vmem:[#allocation2 + $0x8] sm:$0xff] %vm1126, 0.0
      %vm1129 = vcmask 517120
      %1130 = vst.msk [vmem:[#allocation2 + $0x10] sm:$0x3] %vm1129, 0.0
      %1131 = vst.msk [vmem:[#allocation2 + $0x18] sm:$0xff] %vm1126, 0.0
      %1132 = vst.msk [vmem:[#allocation2 + $0x20] sm:$0xff] %vm1126, 0.0
      %1133 = vst.msk [vmem:[#allocation2 + $0x28] sm:$0x3] %vm1129, 0.0
      %1134 = vst.msk [vmem:[#allocation2 + $0x30] sm:$0xff] %vm1126, 0.0
      %1135 = vst.msk [vmem:[#allocation2 + $0x38] sm:$0xff] %vm1126, 0.0
      %1136 = vst.msk [vmem:[#allocation2 + $0x40] sm:$0x3] %vm1129, 0.0
      %1137 = vst.msk [vmem:[#allocation2 + $0x48] sm:$0xff] %vm1126, 0.0
      %1138 = vst.msk [vmem:[#allocation2 + $0x50] sm:$0xff] %vm1126, 0.0
      %1139 = vst.msk [vmem:[#allocation2 + $0x58] sm:$0x3] %vm1129, 0.0
      %1140 = vst.msk [vmem:[#allocation2 + $0x60] sm:$0xff] %vm1126, 0.0
      %1141 = vst.msk [vmem:[#allocation2 + $0x68] sm:$0xff] %vm1126, 0.0
      %1142 = vst.msk [vmem:[#allocation2 + $0x70] sm:$0x3] %vm1129, 0.0
      %1143 = vst.msk [vmem:[#allocation2 + $0x78] sm:$0xff] %vm1126, 0.0
      %1144 = vst.msk [vmem:[#allocation2 + $0x80] sm:$0xff] %vm1126, 0.0
      %1145 = vst.msk [vmem:[#allocation2 + $0x88] sm:$0x3] %vm1129, 0.0
      %1146 = vst.msk [vmem:[#allocation2 + $0x90] sm:$0xff] %vm1126, 0.0
      %1147 = vst.msk [vmem:[#allocation2 + $0x98] sm:$0xff] %vm1126, 0.0
      %1148 = vst.msk [vmem:[#allocation2 + $0xa0] sm:$0x3] %vm1129, 0.0
      %1149 = vst.msk [vmem:[#allocation2 + $0xa8] sm:$0xff] %vm1126, 0.0
      %1150 = vst.msk [vmem:[#allocation2 + $0xb0] sm:$0xff] %vm1126, 0.0
      %1151 = vst.msk [vmem:[#allocation2 + $0xb8] sm:$0x3] %vm1129, 0.0
      %1152 = vst.msk [vmem:[#allocation2 + $0xc0] sm:$0xff] %vm1126, 0.0
      %1153 = vst.msk [vmem:[#allocation2 + $0xc8] sm:$0xff] %vm1126, 0.0
      %1154 = vst.msk [vmem:[#allocation2 + $0xd0] sm:$0x3] %vm1129, 0.0
      %1155 = vst.msk [vmem:[#allocation2 + $0xd8] sm:$0xff] %vm1126, 0.0
      %1156 = vst.msk [vmem:[#allocation2 + $0xe0] sm:$0xff] %vm1126, 0.0
      %1157 = vst.msk [vmem:[#allocation2 + $0xe8] sm:$0x3] %vm1129, 0.0
      %1158 = vst.msk [vmem:[#allocation2 + $0xf0] sm:$0xff] %vm1126, 0.0
      %1159 = vst.msk [vmem:[#allocation2 + $0xf8] sm:$0xff] %vm1126, 0.0
      %1160 = vst.msk [vmem:[#allocation2 + $0x100] sm:$0x3] %vm1129, 0.0
      %1161 = vst.msk [vmem:[#allocation2 + $0x108] sm:$0xff] %vm1126, 0.0
      %1162 = vst.msk [vmem:[#allocation2 + $0x110] sm:$0xff] %vm1126, 0.0
      %1163 = vst.msk [vmem:[#allocation2 + $0x118] sm:$0x3] %vm1129, 0.0
      %1164 = vst.msk [vmem:[#allocation2 + $0x120] sm:$0xff] %vm1126, 0.0
      %1165 = vst.msk [vmem:[#allocation2 + $0x128] sm:$0xff] %vm1126, 0.0
      %1166 = vst.msk [vmem:[#allocation2 + $0x130] sm:$0x3] %vm1129, 0.0
      %1167 = vst.msk [vmem:[#allocation2 + $0x138] sm:$0xff] %vm1126, 0.0
      %1168 = vst.msk [vmem:[#allocation2 + $0x140] sm:$0xff] %vm1126, 0.0
      %1169 = vst.msk [vmem:[#allocation2 + $0x148] sm:$0x3] %vm1129, 0.0
      %1170 = vst.msk [vmem:[#allocation2 + $0x150] sm:$0xff] %vm1126, 0.0
      %1171 = vst.msk [vmem:[#allocation2 + $0x158] sm:$0xff] %vm1126, 0.0
      %1172 = vst.msk [vmem:[#allocation2 + $0x160] sm:$0x3] %vm1129, 0.0
      %1173 = vst.msk [vmem:[#allocation2 + $0x168] sm:$0xff] %vm1126, 0.0
      %1174 = vst.msk [vmem:[#allocation2 + $0x170] sm:$0xff] %vm1126, 0.0
      %1175 = vst.msk [vmem:[#allocation2 + $0x178] sm:$0x3] %vm1129, 0.0
      %1176 = vst.msk [vmem:[#allocation2 + $0x180] sm:$0xff] %vm1126, 0.0
      %1177 = vst.msk [vmem:[#allocation2 + $0x188] sm:$0xff] %vm1126, 0.0
      %1178 = vst.msk [vmem:[#allocation2 + $0x190] sm:$0x3] %vm1129, 0.0
      %1179 = vst.msk [vmem:[#allocation2 + $0x198] sm:$0xff] %vm1126, 0.0
      %1180 = vst.msk [vmem:[#allocation2 + $0x1a0] sm:$0xff] %vm1126, 0.0
      %1181 = vst.msk [vmem:[#allocation2 + $0x1a8] sm:$0x3] %vm1129, 0.0
      %s1182 = scalar_lea.vmem [#allocation2], 24
      %1183 = vst.msk [vmem:[%s1182 + $0x1] sm:$0xff] %vm1126, %v1094
      %1184 = vst.msk [vmem:[%s1182 + $0x9] sm:$0xff] %vm1126, %v1095
      %1185 = vst.msk [vmem:[%s1182 + $0x19] sm:$0xff] %vm1126, %v1096
      %1186 = vst.msk [vmem:[%s1182 + $0x21] sm:$0xff] %vm1126, %v1097
      %1187 = vst.msk [vmem:[%s1182 + $0x31] sm:$0xff] %vm1126, %v1098
      %1188 = vst.msk [vmem:[%s1182 + $0x39] sm:$0xff] %vm1126, %v1099
      %1189 = vst.msk [vmem:[%s1182 + $0x49] sm:$0xff] %vm1126, %v1100
      %1190 = vst.msk [vmem:[%s1182 + $0x51] sm:$0xff] %vm1126, %v1101
      %1191 = vst.msk [vmem:[%s1182 + $0x61] sm:$0xff] %vm1126, %v1102
      %1192 = vst.msk [vmem:[%s1182 + $0x69] sm:$0xff] %vm1126, %v1103
      %1193 = vst.msk [vmem:[%s1182 + $0x79] sm:$0xff] %vm1126, %v1104
      %1194 = vst.msk [vmem:[%s1182 + $0x81] sm:$0xff] %vm1126, %v1105
      %1195 = vst.msk [vmem:[%s1182 + $0x91] sm:$0xff] %vm1126, %v1106
      %1196 = vst.msk [vmem:[%s1182 + $0x99] sm:$0xff] %vm1126, %v1107
      %1197 = vst.msk [vmem:[%s1182 + $0xa9] sm:$0xff] %vm1126, %v1108
      %1198 = vst.msk [vmem:[%s1182 + $0xb1] sm:$0xff] %vm1126, %v1109
      %1199 = vst.msk [vmem:[%s1182 + $0xc1] sm:$0xff] %vm1126, %v1110
      %1200 = vst.msk [vmem:[%s1182 + $0xc9] sm:$0xff] %vm1126, %v1111
      %1201 = vst.msk [vmem:[%s1182 + $0xd9] sm:$0xff] %vm1126, %v1112
      %1202 = vst.msk [vmem:[%s1182 + $0xe1] sm:$0xff] %vm1126, %v1113
      %1203 = vst.msk [vmem:[%s1182 + $0xf1] sm:$0xff] %vm1126, %v1114
      %1204 = vst.msk [vmem:[%s1182 + $0xf9] sm:$0xff] %vm1126, %v1115
      %1205 = vst.msk [vmem:[%s1182 + $0x109] sm:$0xff] %vm1126, %v1116
      %1206 = vst.msk [vmem:[%s1182 + $0x111] sm:$0xff] %vm1126, %v1117
      %1207 = vst.msk [vmem:[%s1182 + $0x121] sm:$0xff] %vm1126, %v1118
      %1208 = vst.msk [vmem:[%s1182 + $0x129] sm:$0xff] %vm1126, %v1119
      %1209 = vst.msk [vmem:[%s1182 + $0x139] sm:$0xff] %vm1126, %v1120
      %1210 = vst.msk [vmem:[%s1182 + $0x141] sm:$0xff] %vm1126, %v1121
      %1211 = vst.msk [vmem:[%s1182 + $0x151] sm:$0xff] %vm1126, %v1122
      %1212 = vst.msk [vmem:[%s1182 + $0x159] sm:$0xff] %vm1126, %v1123
      %1213 = vst.msk [vmem:[%s1182 + $0x169] sm:$0xff] %vm1126, %v1124
      %1214 = vst.msk [vmem:[%s1182 + $0x171] sm:$0xff] %vm1126, %v1125
      %v1215 = vld [vmem:[#allocation2] sm:$0xff]
      %v1216 = vld [vmem:[#allocation2 + $0x8] sm:$0xff]
      %v1217 = vld [vmem:[#allocation2 + $0x10] sm:$0x3]
      %v1218 = vld [vmem:[#allocation2 + $0x18] sm:$0xff]
      %v1219 = vld [vmem:[#allocation2 + $0x20] sm:$0xff]
      %v1220 = vld [vmem:[#allocation2 + $0x28] sm:$0x3]
      %v1221 = vld [vmem:[#allocation2 + $0x30] sm:$0xff]
      %v1222 = vld [vmem:[#allocation2 + $0x38] sm:$0xff]
      %v1223 = vld [vmem:[#allocation2 + $0x40] sm:$0x3]
      %v1224 = vld [vmem:[#allocation2 + $0x48] sm:$0xff]
      %v1225 = vld [vmem:[#allocation2 + $0x50] sm:$0xff]
      %v1226 = vld [vmem:[#allocation2 + $0x58] sm:$0x3]
      %v1227 = vld [vmem:[#allocation2 + $0x60] sm:$0xff]
      %v1228 = vld [vmem:[#allocation2 + $0x68] sm:$0xff]
      %v1229 = vld [vmem:[#allocation2 + $0x70] sm:$0x3]
      %v1230 = vld [vmem:[#allocation2 + $0x78] sm:$0xff]
      %v1231 = vld [vmem:[#allocation2 + $0x80] sm:$0xff]
      %v1232 = vld [vmem:[#allocation2 + $0x88] sm:$0x3]
      %v1233 = vld [vmem:[#allocation2 + $0x90] sm:$0xff]
      %v1234 = vld [vmem:[#allocation2 + $0x98] sm:$0xff]
      %v1235 = vld [vmem:[#allocation2 + $0xa0] sm:$0x3]
      %v1236 = vld [vmem:[#allocation2 + $0xa8] sm:$0xff]
      %v1237 = vld [vmem:[#allocation2 + $0xb0] sm:$0xff]
      %v1238 = vld [vmem:[#allocation2 + $0xb8] sm:$0x3]
      %v1239 = vld [vmem:[#allocation2 + $0xc0] sm:$0xff]
      %v1240 = vld [vmem:[#allocation2 + $0xc8] sm:$0xff]
      %v1241 = vld [vmem:[#allocation2 + $0xd0] sm:$0x3]
      %v1242 = vld [vmem:[#allocation2 + $0xd8] sm:$0xff]
      %v1243 = vld [vmem:[#allocation2 + $0xe0] sm:$0xff]
      %v1244 = vld [vmem:[#allocation2 + $0xe8] sm:$0x3]
      %v1245 = vld [vmem:[#allocation2 + $0xf0] sm:$0xff]
      %v1246 = vld [vmem:[#allocation2 + $0xf8] sm:$0xff]
      %v1247 = vld [vmem:[#allocation2 + $0x100] sm:$0x3]
      %v1248 = vld [vmem:[#allocation2 + $0x108] sm:$0xff]
      %v1249 = vld [vmem:[#allocation2 + $0x110] sm:$0xff]
      %v1250 = vld [vmem:[#allocation2 + $0x118] sm:$0x3]
      %v1251 = vld [vmem:[#allocation2 + $0x120] sm:$0xff]
      %v1252 = vld [vmem:[#allocation2 + $0x128] sm:$0xff]
      %v1253 = vld [vmem:[#allocation2 + $0x130] sm:$0x3]
      %v1254 = vld [vmem:[#allocation2 + $0x138] sm:$0xff]
      %v1255 = vld [vmem:[#allocation2 + $0x140] sm:$0xff]
      %v1256 = vld [vmem:[#allocation2 + $0x148] sm:$0x3]
      %v1257 = vld [vmem:[#allocation2 + $0x150] sm:$0xff]
      %v1258 = vld [vmem:[#allocation2 + $0x158] sm:$0xff]
      %v1259 = vld [vmem:[#allocation2 + $0x160] sm:$0x3]
      %v1260 = vld [vmem:[#allocation2 + $0x168] sm:$0xff]
      %v1261 = vld [vmem:[#allocation2 + $0x170] sm:$0xff]
      %v1262 = vld [vmem:[#allocation2 + $0x178] sm:$0x3]
      %v1263 = vld [vmem:[#allocation2 + $0x180] sm:$0xff]
      %v1264 = vld [vmem:[#allocation2 + $0x188] sm:$0xff]
      %v1265 = vld [vmem:[#allocation2 + $0x190] sm:$0x3]
      %v1266 = vld [vmem:[#allocation2 + $0x198] sm:$0xff]
      %v1267 = vld [vmem:[#allocation2 + $0x1a0] sm:$0xff]
      %v1268 = vld [vmem:[#allocation2 + $0x1a8] sm:$0x3]
      %v1269 = vld [vmem:[%s4] sm:$0x7]
      %v1270 = vld [vmem:[%s4 + $0x4] sm:$0x7]
      %v1271 = vld [vmem:[%s4 + $0x8] sm:$0x7]
      %v1272 = vlaneseq
      %v1273 = vshrl.u32 %v1272, 7
      %v1274 = vsub.s32 0, %v1273
      %v1275 = vrot.slane %v1269, %v1274
      %v1276 = vmul.f32 %v1215, %v1275
      %v1277 = vmul.f32 %v1216, %v1275
      %v1278 = vmul.f32 %v1218, %v1275
      %v1279 = vmul.f32 %v1219, %v1275
      %v1280 = vmul.f32 %v1221, %v1275
      %v1281 = vmul.f32 %v1222, %v1275
      %v1282 = vmul.f32 %v1224, %v1275
      %v1283 = vmul.f32 %v1225, %v1275
      %v1284 = vmul.f32 %v1227, %v1275
      %v1285 = vmul.f32 %v1228, %v1275
      %v1286 = vmul.f32 %v1230, %v1275
      %v1287 = vmul.f32 %v1231, %v1275
      %v1288 = vmul.f32 %v1233, %v1275
      %v1289 = vmul.f32 %v1234, %v1275
      %v1290 = vmul.f32 %v1236, %v1275
      %v1291 = vmul.f32 %v1237, %v1275
      %v1292 = vmul.f32 %v1239, %v1275
      %v1293 = vmul.f32 %v1240, %v1275
      %v1294 = vmul.f32 %v1242, %v1275
      %v1295 = vmul.f32 %v1243, %v1275
      %v1296 = vmul.f32 %v1245, %v1275
      %v1297 = vmul.f32 %v1246, %v1275
      %v1298 = vmul.f32 %v1248, %v1275
      %v1299 = vmul.f32 %v1249, %v1275
      %v1300 = vmul.f32 %v1251, %v1275
      %v1301 = vmul.f32 %v1252, %v1275
      %v1302 = vmul.f32 %v1254, %v1275
      %v1303 = vmul.f32 %v1255, %v1275
      %v1304 = vmul.f32 %v1257, %v1275
      %v1305 = vmul.f32 %v1258, %v1275
      %v1306 = vmul.f32 %v1260, %v1275
      %v1307 = vmul.f32 %v1261, %v1275
      %v1308 = vadd.f32 %v1276, 0.0
      %v1309 = vadd.f32 %v1277, 0.0
      %v1310 = vadd.f32 %v1278, 0.0
      %v1311 = vadd.f32 %v1279, 0.0
      %v1312 = vadd.f32 %v1280, 0.0
      %v1313 = vadd.f32 %v1281, 0.0
      %v1314 = vadd.f32 %v1282, 0.0
      %v1315 = vadd.f32 %v1283, 0.0
      %v1316 = vadd.f32 %v1284, 0.0
      %v1317 = vadd.f32 %v1285, 0.0
      %v1318 = vadd.f32 %v1286, 0.0
      %v1319 = vadd.f32 %v1287, 0.0
      %v1320 = vadd.f32 %v1288, 0.0
      %v1321 = vadd.f32 %v1289, 0.0
      %v1322 = vadd.f32 %v1290, 0.0
      %v1323 = vadd.f32 %v1291, 0.0
      %v1324 = vadd.f32 %v1292, 0.0
      %v1325 = vadd.f32 %v1293, 0.0
      %v1326 = vadd.f32 %v1294, 0.0
      %v1327 = vadd.f32 %v1295, 0.0
      %v1328 = vadd.f32 %v1296, 0.0
      %v1329 = vadd.f32 %v1297, 0.0
      %v1330 = vadd.f32 %v1298, 0.0
      %v1331 = vadd.f32 %v1299, 0.0
      %v1332 = vadd.f32 %v1300, 0.0
      %v1333 = vadd.f32 %v1301, 0.0
      %v1334 = vadd.f32 %v1302, 0.0
      %v1335 = vadd.f32 %v1303, 0.0
      %v1336 = vadd.f32 %v1304, 0.0
      %v1337 = vadd.f32 %v1305, 0.0
      %v1338 = vadd.f32 %v1306, 0.0
      %v1339 = vadd.f32 %v1307, 0.0
      %v1340 = vlaneseq
      %v1341 = vshrl.u32 %v1340, 7
      %v1342 = vsub.s32 1, %v1341
      %v1343 = vrot.slane %v1269, %v1342
      %v1344 = vmul.f32 %v1215, %v1343
      %v1345 = vmul.f32 %v1216, %v1343
      %v1346 = vmul.f32 %v1217, %v1343
      %v1347 = vmul.f32 %v1218, %v1343
      %v1348 = vmul.f32 %v1219, %v1343
      %v1349 = vmul.f32 %v1220, %v1343
      %v1350 = vmul.f32 %v1221, %v1343
      %v1351 = vmul.f32 %v1222, %v1343
      %v1352 = vmul.f32 %v1223, %v1343
      %v1353 = vmul.f32 %v1224, %v1343
      %v1354 = vmul.f32 %v1225, %v1343
      %v1355 = vmul.f32 %v1226, %v1343
      %v1356 = vmul.f32 %v1227, %v1343
      %v1357 = vmul.f32 %v1228, %v1343
      %v1358 = vmul.f32 %v1229, %v1343
      %v1359 = vmul.f32 %v1230, %v1343
      %v1360 = vmul.f32 %v1231, %v1343
      %v1361 = vmul.f32 %v1232, %v1343
      %v1362 = vmul.f32 %v1233, %v1343
      %v1363 = vmul.f32 %v1234, %v1343
      %v1364 = vmul.f32 %v1235, %v1343
      %v1365 = vmul.f32 %v1236, %v1343
      %v1366 = vmul.f32 %v1237, %v1343
      %v1367 = vmul.f32 %v1238, %v1343
      %v1368 = vmul.f32 %v1239, %v1343
      %v1369 = vmul.f32 %v1240, %v1343
      %v1370 = vmul.f32 %v1241, %v1343
      %v1371 = vmul.f32 %v1242, %v1343
      %v1372 = vmul.f32 %v1243, %v1343
      %v1373 = vmul.f32 %v1244, %v1343
      %v1374 = vmul.f32 %v1245, %v1343
      %v1375 = vmul.f32 %v1246, %v1343
      %v1376 = vmul.f32 %v1247, %v1343
      %v1377 = vmul.f32 %v1248, %v1343
      %v1378 = vmul.f32 %v1249, %v1343
      %v1379 = vmul.f32 %v1250, %v1343
      %v1380 = vmul.f32 %v1251, %v1343
      %v1381 = vmul.f32 %v1252, %v1343
      %v1382 = vmul.f32 %v1253, %v1343
      %v1383 = vmul.f32 %v1254, %v1343
      %v1384 = vmul.f32 %v1255, %v1343
      %v1385 = vmul.f32 %v1256, %v1343
      %v1386 = vmul.f32 %v1257, %v1343
      %v1387 = vmul.f32 %v1258, %v1343
      %v1388 = vmul.f32 %v1259, %v1343
      %v1389 = vmul.f32 %v1260, %v1343
      %v1390 = vmul.f32 %v1261, %v1343
      %v1391 = vmul.f32 %v1262, %v1343
      %vm1440 = vcmask 1046528
      %v1441 = vrot.slane %v1344, 1
      %v1442 = vrot.slane %v1345, 1
      %v1443 = vsel %vm1440, %v1441, %v1442
      %v1444 = vrot.slane %v1346, 1
      %v1445 = vsel %vm1440, %v1442, %v1444
      %v1446 = vrot.slane %v1347, 1
      %v1447 = vrot.slane %v1348, 1
      %v1448 = vsel %vm1440, %v1446, %v1447
      %v1449 = vrot.slane %v1349, 1
      %v1450 = vsel %vm1440, %v1447, %v1449
      %v1451 = vrot.slane %v1350, 1
      %v1452 = vrot.slane %v1351, 1
      %v1453 = vsel %vm1440, %v1451, %v1452
      %v1454 = vrot.slane %v1352, 1
      %v1455 = vsel %vm1440, %v1452, %v1454
      %v1456 = vrot.slane %v1353, 1
      %v1457 = vrot.slane %v1354, 1
      %v1458 = vsel %vm1440, %v1456, %v1457
      %v1459 = vrot.slane %v1355, 1
      %v1460 = vsel %vm1440, %v1457, %v1459
      %v1461 = vrot.slane %v1356, 1
      %v1462 = vrot.slane %v1357, 1
      %v1463 = vsel %vm1440, %v1461, %v1462
      %v1464 = vrot.slane %v1358, 1
      %v1465 = vsel %vm1440, %v1462, %v1464
      %v1466 = vrot.slane %v1359, 1
      %v1467 = vrot.slane %v1360, 1
      %v1468 = vsel %vm1440, %v1466, %v1467
      %v1469 = vrot.slane %v1361, 1
      %v1470 = vsel %vm1440, %v1467, %v1469
      %v1471 = vrot.slane %v1362, 1
      %v1472 = vrot.slane %v1363, 1
      %v1473 = vsel %vm1440, %v1471, %v1472
      %v1474 = vrot.slane %v1364, 1
      %v1475 = vsel %vm1440, %v1472, %v1474
      %v1476 = vrot.slane %v1365, 1
      %v1477 = vrot.slane %v1366, 1
      %v1478 = vsel %vm1440, %v1476, %v1477
      %v1479 = vrot.slane %v1367, 1
      %v1480 = vsel %vm1440, %v1477, %v1479
      %v1481 = vrot.slane %v1368, 1
      %v1482 = vrot.slane %v1369, 1
      %v1483 = vsel %vm1440, %v1481, %v1482
      %v1484 = vrot.slane %v1370, 1
      %v1485 = vsel %vm1440, %v1482, %v1484
      %v1486 = vrot.slane %v1371, 1
      %v1487 = vrot.slane %v1372, 1
      %v1488 = vsel %vm1440, %v1486, %v1487
      %v1489 = vrot.slane %v1373, 1
      %v1490 = vsel %vm1440, %v1487, %v1489
      %v1491 = vrot.slane %v1374, 1
      %v1492 = vrot.slane %v1375, 1
      %v1493 = vsel %vm1440, %v1491, %v1492
      %v1494 = vrot.slane %v1376, 1
      %v1495 = vsel %vm1440, %v1492, %v1494
      %v1496 = vrot.slane %v1377, 1
      %v1497 = vrot.slane %v1378, 1
      %v1498 = vsel %vm1440, %v1496, %v1497
      %v1499 = vrot.slane %v1379, 1
      %v1500 = vsel %vm1440, %v1497, %v1499
      %v1501 = vrot.slane %v1380, 1
      %v1502 = vrot.slane %v1381, 1
      %v1503 = vsel %vm1440, %v1501, %v1502
      %v1504 = vrot.slane %v1382, 1
      %v1505 = vsel %vm1440, %v1502, %v1504
      %v1506 = vrot.slane %v1383, 1
      %v1507 = vrot.slane %v1384, 1
      %v1508 = vsel %vm1440, %v1506, %v1507
      %v1509 = vrot.slane %v1385, 1
      %v1510 = vsel %vm1440, %v1507, %v1509
      %v1511 = vrot.slane %v1386, 1
      %v1512 = vrot.slane %v1387, 1
      %v1513 = vsel %vm1440, %v1511, %v1512
      %v1514 = vrot.slane %v1388, 1
      %v1515 = vsel %vm1440, %v1512, %v1514
      %v1516 = vrot.slane %v1389, 1
      %v1517 = vrot.slane %v1390, 1
      %v1518 = vsel %vm1440, %v1516, %v1517
      %v1519 = vrot.slane %v1391, 1
      %v1520 = vsel %vm1440, %v1517, %v1519
      %v1553 = vadd.f32 %v1308, %v1443
      %v1554 = vadd.f32 %v1309, %v1445
      %v1555 = vadd.f32 %v1310, %v1448
      %v1556 = vadd.f32 %v1311, %v1450
      %v1557 = vadd.f32 %v1312, %v1453
      %v1558 = vadd.f32 %v1313, %v1455
      %v1559 = vadd.f32 %v1314, %v1458
      %v1560 = vadd.f32 %v1315, %v1460
      %v1561 = vadd.f32 %v1316, %v1463
      %v1562 = vadd.f32 %v1317, %v1465
      %v1563 = vadd.f32 %v1318, %v1468
      %v1564 = vadd.f32 %v1319, %v1470
      %v1565 = vadd.f32 %v1320, %v1473
      %v1566 = vadd.f32 %v1321, %v1475
      %v1567 = vadd.f32 %v1322, %v1478
      %v1568 = vadd.f32 %v1323, %v1480
      %v1569 = vadd.f32 %v1324, %v1483
      %v1570 = vadd.f32 %v1325, %v1485
      %v1571 = vadd.f32 %v1326, %v1488
      %v1572 = vadd.f32 %v1327, %v1490
      %v1573 = vadd.f32 %v1328, %v1493
      %v1574 = vadd.f32 %v1329, %v1495
      %v1575 = vadd.f32 %v1330, %v1498
      %v1576 = vadd.f32 %v1331, %v1500
      %v1577 = vadd.f32 %v1332, %v1503
      %v1578 = vadd.f32 %v1333, %v1505
      %v1579 = vadd.f32 %v1334, %v1508
      %v1580 = vadd.f32 %v1335, %v1510
      %v1581 = vadd.f32 %v1336, %v1513
      %v1582 = vadd.f32 %v1337, %v1515
      %v1583 = vadd.f32 %v1338, %v1518
      %v1584 = vadd.f32 %v1339, %v1520
      %v1585 = vlaneseq
      %v1586 = vshrl.u32 %v1585, 7
      %v1587 = vsub.s32 2, %v1586
      %v1588 = vrot.slane %v1269, %v1587
      %v1589 = vmul.f32 %v1215, %v1588
      %v1590 = vmul.f32 %v1216, %v1588
      %v1591 = vmul.f32 %v1217, %v1588
      %v1592 = vmul.f32 %v1218, %v1588
      %v1593 = vmul.f32 %v1219, %v1588
      %v1594 = vmul.f32 %v1220, %v1588
      %v1595 = vmul.f32 %v1221, %v1588
      %v1596 = vmul.f32 %v1222, %v1588
      %v1597 = vmul.f32 %v1223, %v1588
      %v1598 = vmul.f32 %v1224, %v1588
      %v1599 = vmul.f32 %v1225, %v1588
      %v1600 = vmul.f32 %v1226, %v1588
      %v1601 = vmul.f32 %v1227, %v1588
      %v1602 = vmul.f32 %v1228, %v1588
      %v1603 = vmul.f32 %v1229, %v1588
      %v1604 = vmul.f32 %v1230, %v1588
      %v1605 = vmul.f32 %v1231, %v1588
      %v1606 = vmul.f32 %v1232, %v1588
      %v1607 = vmul.f32 %v1233, %v1588
      %v1608 = vmul.f32 %v1234, %v1588
      %v1609 = vmul.f32 %v1235, %v1588
      %v1610 = vmul.f32 %v1236, %v1588
      %v1611 = vmul.f32 %v1237, %v1588
      %v1612 = vmul.f32 %v1238, %v1588
      %v1613 = vmul.f32 %v1239, %v1588
      %v1614 = vmul.f32 %v1240, %v1588
      %v1615 = vmul.f32 %v1241, %v1588
      %v1616 = vmul.f32 %v1242, %v1588
      %v1617 = vmul.f32 %v1243, %v1588
      %v1618 = vmul.f32 %v1244, %v1588
      %v1619 = vmul.f32 %v1245, %v1588
      %v1620 = vmul.f32 %v1246, %v1588
      %v1621 = vmul.f32 %v1247, %v1588
      %v1622 = vmul.f32 %v1248, %v1588
      %v1623 = vmul.f32 %v1249, %v1588
      %v1624 = vmul.f32 %v1250, %v1588
      %v1625 = vmul.f32 %v1251, %v1588
      %v1626 = vmul.f32 %v1252, %v1588
      %v1627 = vmul.f32 %v1253, %v1588
      %v1628 = vmul.f32 %v1254, %v1588
      %v1629 = vmul.f32 %v1255, %v1588
      %v1630 = vmul.f32 %v1256, %v1588
      %v1631 = vmul.f32 %v1257, %v1588
      %v1632 = vmul.f32 %v1258, %v1588
      %v1633 = vmul.f32 %v1259, %v1588
      %v1634 = vmul.f32 %v1260, %v1588
      %v1635 = vmul.f32 %v1261, %v1588
      %v1636 = vmul.f32 %v1262, %v1588
      %vm1685 = vcmask 1045504
      %v1686 = vrot.slane %v1589, 2
      %v1687 = vrot.slane %v1590, 2
      %v1688 = vsel %vm1685, %v1686, %v1687
      %v1689 = vrot.slane %v1591, 2
      %v1690 = vsel %vm1685, %v1687, %v1689
      %v1691 = vrot.slane %v1592, 2
      %v1692 = vrot.slane %v1593, 2
      %v1693 = vsel %vm1685, %v1691, %v1692
      %v1694 = vrot.slane %v1594, 2
      %v1695 = vsel %vm1685, %v1692, %v1694
      %v1696 = vrot.slane %v1595, 2
      %v1697 = vrot.slane %v1596, 2
      %v1698 = vsel %vm1685, %v1696, %v1697
      %v1699 = vrot.slane %v1597, 2
      %v1700 = vsel %vm1685, %v1697, %v1699
      %v1701 = vrot.slane %v1598, 2
      %v1702 = vrot.slane %v1599, 2
      %v1703 = vsel %vm1685, %v1701, %v1702
      %v1704 = vrot.slane %v1600, 2
      %v1705 = vsel %vm1685, %v1702, %v1704
      %v1706 = vrot.slane %v1601, 2
      %v1707 = vrot.slane %v1602, 2
      %v1708 = vsel %vm1685, %v1706, %v1707
      %v1709 = vrot.slane %v1603, 2
      %v1710 = vsel %vm1685, %v1707, %v1709
      %v1711 = vrot.slane %v1604, 2
      %v1712 = vrot.slane %v1605, 2
      %v1713 = vsel %vm1685, %v1711, %v1712
      %v1714 = vrot.slane %v1606, 2
      %v1715 = vsel %vm1685, %v1712, %v1714
      %v1716 = vrot.slane %v1607, 2
      %v1717 = vrot.slane %v1608, 2
      %v1718 = vsel %vm1685, %v1716, %v1717
      %v1719 = vrot.slane %v1609, 2
      %v1720 = vsel %vm1685, %v1717, %v1719
      %v1721 = vrot.slane %v1610, 2
      %v1722 = vrot.slane %v1611, 2
      %v1723 = vsel %vm1685, %v1721, %v1722
      %v1724 = vrot.slane %v1612, 2
      %v1725 = vsel %vm1685, %v1722, %v1724
      %v1726 = vrot.slane %v1613, 2
      %v1727 = vrot.slane %v1614, 2
      %v1728 = vsel %vm1685, %v1726, %v1727
      %v1729 = vrot.slane %v1615, 2
      %v1730 = vsel %vm1685, %v1727, %v1729
      %v1731 = vrot.slane %v1616, 2
      %v1732 = vrot.slane %v1617, 2
      %v1733 = vsel %vm1685, %v1731, %v1732
      %v1734 = vrot.slane %v1618, 2
      %v1735 = vsel %vm1685, %v1732, %v1734
      %v1736 = vrot.slane %v1619, 2
      %v1737 = vrot.slane %v1620, 2
      %v1738 = vsel %vm1685, %v1736, %v1737
      %v1739 = vrot.slane %v1621, 2
      %v1740 = vsel %vm1685, %v1737, %v1739
      %v1741 = vrot.slane %v1622, 2
      %v1742 = vrot.slane %v1623, 2
      %v1743 = vsel %vm1685, %v1741, %v1742
      %v1744 = vrot.slane %v1624, 2
      %v1745 = vsel %vm1685, %v1742, %v1744
      %v1746 = vrot.slane %v1625, 2
      %v1747 = vrot.slane %v1626, 2
      %v1748 = vsel %vm1685, %v1746, %v1747
      %v1749 = vrot.slane %v1627, 2
      %v1750 = vsel %vm1685, %v1747, %v1749
      %v1751 = vrot.slane %v1628, 2
      %v1752 = vrot.slane %v1629, 2
      %v1753 = vsel %vm1685, %v1751, %v1752
      %v1754 = vrot.slane %v1630, 2
      %v1755 = vsel %vm1685, %v1752, %v1754
      %v1756 = vrot.slane %v1631, 2
      %v1757 = vrot.slane %v1632, 2
      %v1758 = vsel %vm1685, %v1756, %v1757
      %v1759 = vrot.slane %v1633, 2
      %v1760 = vsel %vm1685, %v1757, %v1759
      %v1761 = vrot.slane %v1634, 2
      %v1762 = vrot.slane %v1635, 2
      %v1763 = vsel %vm1685, %v1761, %v1762
      %v1764 = vrot.slane %v1636, 2
      %v1765 = vsel %vm1685, %v1762, %v1764
      %v1798 = vadd.f32 %v1553, %v1688
      %v1799 = vadd.f32 %v1554, %v1690
      %v1800 = vadd.f32 %v1555, %v1693
      %v1801 = vadd.f32 %v1556, %v1695
      %v1802 = vadd.f32 %v1557, %v1698
      %v1803 = vadd.f32 %v1558, %v1700
      %v1804 = vadd.f32 %v1559, %v1703
      %v1805 = vadd.f32 %v1560, %v1705
      %v1806 = vadd.f32 %v1561, %v1708
      %v1807 = vadd.f32 %v1562, %v1710
      %v1808 = vadd.f32 %v1563, %v1713
      %v1809 = vadd.f32 %v1564, %v1715
      %v1810 = vadd.f32 %v1565, %v1718
      %v1811 = vadd.f32 %v1566, %v1720
      %v1812 = vadd.f32 %v1567, %v1723
      %v1813 = vadd.f32 %v1568, %v1725
      %v1814 = vadd.f32 %v1569, %v1728
      %v1815 = vadd.f32 %v1570, %v1730
      %v1816 = vadd.f32 %v1571, %v1733
      %v1817 = vadd.f32 %v1572, %v1735
      %v1818 = vadd.f32 %v1573, %v1738
      %v1819 = vadd.f32 %v1574, %v1740
      %v1820 = vadd.f32 %v1575, %v1743
      %v1821 = vadd.f32 %v1576, %v1745
      %v1822 = vadd.f32 %v1577, %v1748
      %v1823 = vadd.f32 %v1578, %v1750
      %v1824 = vadd.f32 %v1579, %v1753
      %v1825 = vadd.f32 %v1580, %v1755
      %v1826 = vadd.f32 %v1581, %v1758
      %v1827 = vadd.f32 %v1582, %v1760
      %v1828 = vadd.f32 %v1583, %v1763
      %v1829 = vadd.f32 %v1584, %v1765
      %v1830 = vlaneseq
      %v1831 = vshrl.u32 %v1830, 7
      %v1832 = vsub.s32 0, %v1831
      %v1833 = vrot.slane %v1270, %v1832
      %v1834 = vmul.f32 %v1218, %v1833
      %v1835 = vmul.f32 %v1219, %v1833
      %v1836 = vmul.f32 %v1221, %v1833
      %v1837 = vmul.f32 %v1222, %v1833
      %v1838 = vmul.f32 %v1224, %v1833
      %v1839 = vmul.f32 %v1225, %v1833
      %v1840 = vmul.f32 %v1227, %v1833
      %v1841 = vmul.f32 %v1228, %v1833
      %v1842 = vmul.f32 %v1230, %v1833
      %v1843 = vmul.f32 %v1231, %v1833
      %v1844 = vmul.f32 %v1233, %v1833
      %v1845 = vmul.f32 %v1234, %v1833
      %v1846 = vmul.f32 %v1236, %v1833
      %v1847 = vmul.f32 %v1237, %v1833
      %v1848 = vmul.f32 %v1239, %v1833
      %v1849 = vmul.f32 %v1240, %v1833
      %v1850 = vmul.f32 %v1242, %v1833
      %v1851 = vmul.f32 %v1243, %v1833
      %v1852 = vmul.f32 %v1245, %v1833
      %v1853 = vmul.f32 %v1246, %v1833
      %v1854 = vmul.f32 %v1248, %v1833
      %v1855 = vmul.f32 %v1249, %v1833
      %v1856 = vmul.f32 %v1251, %v1833
      %v1857 = vmul.f32 %v1252, %v1833
      %v1858 = vmul.f32 %v1254, %v1833
      %v1859 = vmul.f32 %v1255, %v1833
      %v1860 = vmul.f32 %v1257, %v1833
      %v1861 = vmul.f32 %v1258, %v1833
      %v1862 = vmul.f32 %v1260, %v1833
      %v1863 = vmul.f32 %v1261, %v1833
      %v1864 = vmul.f32 %v1263, %v1833
      %v1865 = vmul.f32 %v1264, %v1833
      %v1866 = vadd.f32 %v1798, %v1834
      %v1867 = vadd.f32 %v1799, %v1835
      %v1868 = vadd.f32 %v1800, %v1836
      %v1869 = vadd.f32 %v1801, %v1837
      %v1870 = vadd.f32 %v1802, %v1838
      %v1871 = vadd.f32 %v1803, %v1839
      %v1872 = vadd.f32 %v1804, %v1840
      %v1873 = vadd.f32 %v1805, %v1841
      %v1874 = vadd.f32 %v1806, %v1842
      %v1875 = vadd.f32 %v1807, %v1843
      %v1876 = vadd.f32 %v1808, %v1844
      %v1877 = vadd.f32 %v1809, %v1845
      %v1878 = vadd.f32 %v1810, %v1846
      %v1879 = vadd.f32 %v1811, %v1847
      %v1880 = vadd.f32 %v1812, %v1848
      %v1881 = vadd.f32 %v1813, %v1849
      %v1882 = vadd.f32 %v1814, %v1850
      %v1883 = vadd.f32 %v1815, %v1851
      %v1884 = vadd.f32 %v1816, %v1852
      %v1885 = vadd.f32 %v1817, %v1853
      %v1886 = vadd.f32 %v1818, %v1854
      %v1887 = vadd.f32 %v1819, %v1855
      %v1888 = vadd.f32 %v1820, %v1856
      %v1889 = vadd.f32 %v1821, %v1857
      %v1890 = vadd.f32 %v1822, %v1858
      %v1891 = vadd.f32 %v1823, %v1859
      %v1892 = vadd.f32 %v1824, %v1860
      %v1893 = vadd.f32 %v1825, %v1861
      %v1894 = vadd.f32 %v1826, %v1862
      %v1895 = vadd.f32 %v1827, %v1863
      %v1896 = vadd.f32 %v1828, %v1864
      %v1897 = vadd.f32 %v1829, %v1865
      %v1898 = vlaneseq
      %v1899 = vshrl.u32 %v1898, 7
      %v1900 = vsub.s32 1, %v1899
      %v1901 = vrot.slane %v1270, %v1900
      %v1902 = vmul.f32 %v1218, %v1901
      %v1903 = vmul.f32 %v1219, %v1901
      %v1904 = vmul.f32 %v1220, %v1901
      %v1905 = vmul.f32 %v1221, %v1901
      %v1906 = vmul.f32 %v1222, %v1901
      %v1907 = vmul.f32 %v1223, %v1901
      %v1908 = vmul.f32 %v1224, %v1901
      %v1909 = vmul.f32 %v1225, %v1901
      %v1910 = vmul.f32 %v1226, %v1901
      %v1911 = vmul.f32 %v1227, %v1901
      %v1912 = vmul.f32 %v1228, %v1901
      %v1913 = vmul.f32 %v1229, %v1901
      %v1914 = vmul.f32 %v1230, %v1901
      %v1915 = vmul.f32 %v1231, %v1901
      %v1916 = vmul.f32 %v1232, %v1901
      %v1917 = vmul.f32 %v1233, %v1901
      %v1918 = vmul.f32 %v1234, %v1901
      %v1919 = vmul.f32 %v1235, %v1901
      %v1920 = vmul.f32 %v1236, %v1901
      %v1921 = vmul.f32 %v1237, %v1901
      %v1922 = vmul.f32 %v1238, %v1901
      %v1923 = vmul.f32 %v1239, %v1901
      %v1924 = vmul.f32 %v1240, %v1901
      %v1925 = vmul.f32 %v1241, %v1901
      %v1926 = vmul.f32 %v1242, %v1901
      %v1927 = vmul.f32 %v1243, %v1901
      %v1928 = vmul.f32 %v1244, %v1901
      %v1929 = vmul.f32 %v1245, %v1901
      %v1930 = vmul.f32 %v1246, %v1901
      %v1931 = vmul.f32 %v1247, %v1901
      %v1932 = vmul.f32 %v1248, %v1901
      %v1933 = vmul.f32 %v1249, %v1901
      %v1934 = vmul.f32 %v1250, %v1901
      %v1935 = vmul.f32 %v1251, %v1901
      %v1936 = vmul.f32 %v1252, %v1901
      %v1937 = vmul.f32 %v1253, %v1901
      %v1938 = vmul.f32 %v1254, %v1901
      %v1939 = vmul.f32 %v1255, %v1901
      %v1940 = vmul.f32 %v1256, %v1901
      %v1941 = vmul.f32 %v1257, %v1901
      %v1942 = vmul.f32 %v1258, %v1901
      %v1943 = vmul.f32 %v1259, %v1901
      %v1944 = vmul.f32 %v1260, %v1901
      %v1945 = vmul.f32 %v1261, %v1901
      %v1946 = vmul.f32 %v1262, %v1901
      %v1947 = vmul.f32 %v1263, %v1901
      %v1948 = vmul.f32 %v1264, %v1901
      %v1949 = vmul.f32 %v1265, %v1901
      %v1998 = vrot.slane %v1902, 1
      %v1999 = vrot.slane %v1903, 1
      %v2000 = vsel %vm1440, %v1998, %v1999
      %v2001 = vrot.slane %v1904, 1
      %v2002 = vsel %vm1440, %v1999, %v2001
      %v2003 = vrot.slane %v1905, 1
      %v2004 = vrot.slane %v1906, 1
      %v2005 = vsel %vm1440, %v2003, %v2004
      %v2006 = vrot.slane %v1907, 1
      %v2007 = vsel %vm1440, %v2004, %v2006
      %v2008 = vrot.slane %v1908, 1
      %v2009 = vrot.slane %v1909, 1
      %v2010 = vsel %vm1440, %v2008, %v2009
      %v2011 = vrot.slane %v1910, 1
      %v2012 = vsel %vm1440, %v2009, %v2011
      %v2013 = vrot.slane %v1911, 1
      %v2014 = vrot.slane %v1912, 1
      %v2015 = vsel %vm1440, %v2013, %v2014
      %v2016 = vrot.slane %v1913, 1
      %v2017 = vsel %vm1440, %v2014, %v2016
      %v2018 = vrot.slane %v1914, 1
      %v2019 = vrot.slane %v1915, 1
      %v2020 = vsel %vm1440, %v2018, %v2019
      %v2021 = vrot.slane %v1916, 1
      %v2022 = vsel %vm1440, %v2019, %v2021
      %v2023 = vrot.slane %v1917, 1
      %v2024 = vrot.slane %v1918, 1
      %v2025 = vsel %vm1440, %v2023, %v2024
      %v2026 = vrot.slane %v1919, 1
      %v2027 = vsel %vm1440, %v2024, %v2026
      %v2028 = vrot.slane %v1920, 1
      %v2029 = vrot.slane %v1921, 1
      %v2030 = vsel %vm1440, %v2028, %v2029
      %v2031 = vrot.slane %v1922, 1
      %v2032 = vsel %vm1440, %v2029, %v2031
      %v2033 = vrot.slane %v1923, 1
      %v2034 = vrot.slane %v1924, 1
      %v2035 = vsel %vm1440, %v2033, %v2034
      %v2036 = vrot.slane %v1925, 1
      %v2037 = vsel %vm1440, %v2034, %v2036
      %v2038 = vrot.slane %v1926, 1
      %v2039 = vrot.slane %v1927, 1
      %v2040 = vsel %vm1440, %v2038, %v2039
      %v2041 = vrot.slane %v1928, 1
      %v2042 = vsel %vm1440, %v2039, %v2041
      %v2043 = vrot.slane %v1929, 1
      %v2044 = vrot.slane %v1930, 1
      %v2045 = vsel %vm1440, %v2043, %v2044
      %v2046 = vrot.slane %v1931, 1
      %v2047 = vsel %vm1440, %v2044, %v2046
      %v2048 = vrot.slane %v1932, 1
      %v2049 = vrot.slane %v1933, 1
      %v2050 = vsel %vm1440, %v2048, %v2049
      %v2051 = vrot.slane %v1934, 1
      %v2052 = vsel %vm1440, %v2049, %v2051
      %v2053 = vrot.slane %v1935, 1
      %v2054 = vrot.slane %v1936, 1
      %v2055 = vsel %vm1440, %v2053, %v2054
      %v2056 = vrot.slane %v1937, 1
      %v2057 = vsel %vm1440, %v2054, %v2056
      %v2058 = vrot.slane %v1938, 1
      %v2059 = vrot.slane %v1939, 1
      %v2060 = vsel %vm1440, %v2058, %v2059
      %v2061 = vrot.slane %v1940, 1
      %v2062 = vsel %vm1440, %v2059, %v2061
      %v2063 = vrot.slane %v1941, 1
      %v2064 = vrot.slane %v1942, 1
      %v2065 = vsel %vm1440, %v2063, %v2064
      %v2066 = vrot.slane %v1943, 1
      %v2067 = vsel %vm1440, %v2064, %v2066
      %v2068 = vrot.slane %v1944, 1
      %v2069 = vrot.slane %v1945, 1
      %v2070 = vsel %vm1440, %v2068, %v2069
      %v2071 = vrot.slane %v1946, 1
      %v2072 = vsel %vm1440, %v2069, %v2071
      %v2073 = vrot.slane %v1947, 1
      %v2074 = vrot.slane %v1948, 1
      %v2075 = vsel %vm1440, %v2073, %v2074
      %v2076 = vrot.slane %v1949, 1
      %v2077 = vsel %vm1440, %v2074, %v2076
      %v2110 = vadd.f32 %v1866, %v2000
      %v2111 = vadd.f32 %v1867, %v2002
      %v2112 = vadd.f32 %v1868, %v2005
      %v2113 = vadd.f32 %v1869, %v2007
      %v2114 = vadd.f32 %v1870, %v2010
      %v2115 = vadd.f32 %v1871, %v2012
      %v2116 = vadd.f32 %v1872, %v2015
      %v2117 = vadd.f32 %v1873, %v2017
      %v2118 = vadd.f32 %v1874, %v2020
      %v2119 = vadd.f32 %v1875, %v2022
      %v2120 = vadd.f32 %v1876, %v2025
      %v2121 = vadd.f32 %v1877, %v2027
      %v2122 = vadd.f32 %v1878, %v2030
      %v2123 = vadd.f32 %v1879, %v2032
      %v2124 = vadd.f32 %v1880, %v2035
      %v2125 = vadd.f32 %v1881, %v2037
      %v2126 = vadd.f32 %v1882, %v2040
      %v2127 = vadd.f32 %v1883, %v2042
      %v2128 = vadd.f32 %v1884, %v2045
      %v2129 = vadd.f32 %v1885, %v2047
      %v2130 = vadd.f32 %v1886, %v2050
      %v2131 = vadd.f32 %v1887, %v2052
      %v2132 = vadd.f32 %v1888, %v2055
      %v2133 = vadd.f32 %v1889, %v2057
      %v2134 = vadd.f32 %v1890, %v2060
      %v2135 = vadd.f32 %v1891, %v2062
      %v2136 = vadd.f32 %v1892, %v2065
      %v2137 = vadd.f32 %v1893, %v2067
      %v2138 = vadd.f32 %v1894, %v2070
      %v2139 = vadd.f32 %v1895, %v2072
      %v2140 = vadd.f32 %v1896, %v2075
      %v2141 = vadd.f32 %v1897, %v2077
      %v2142 = vlaneseq
      %v2143 = vshrl.u32 %v2142, 7
      %v2144 = vsub.s32 2, %v2143
      %v2145 = vrot.slane %v1270, %v2144
      %v2146 = vmul.f32 %v1218, %v2145
      %v2147 = vmul.f32 %v1219, %v2145
      %v2148 = vmul.f32 %v1220, %v2145
      %v2149 = vmul.f32 %v1221, %v2145
      %v2150 = vmul.f32 %v1222, %v2145
      %v2151 = vmul.f32 %v1223, %v2145
      %v2152 = vmul.f32 %v1224, %v2145
      %v2153 = vmul.f32 %v1225, %v2145
      %v2154 = vmul.f32 %v1226, %v2145
      %v2155 = vmul.f32 %v1227, %v2145
      %v2156 = vmul.f32 %v1228, %v2145
      %v2157 = vmul.f32 %v1229, %v2145
      %v2158 = vmul.f32 %v1230, %v2145
      %v2159 = vmul.f32 %v1231, %v2145
      %v2160 = vmul.f32 %v1232, %v2145
      %v2161 = vmul.f32 %v1233, %v2145
      %v2162 = vmul.f32 %v1234, %v2145
      %v2163 = vmul.f32 %v1235, %v2145
      %v2164 = vmul.f32 %v1236, %v2145
      %v2165 = vmul.f32 %v1237, %v2145
      %v2166 = vmul.f32 %v1238, %v2145
      %v2167 = vmul.f32 %v1239, %v2145
      %v2168 = vmul.f32 %v1240, %v2145
      %v2169 = vmul.f32 %v1241, %v2145
      %v2170 = vmul.f32 %v1242, %v2145
      %v2171 = vmul.f32 %v1243, %v2145
      %v2172 = vmul.f32 %v1244, %v2145
      %v2173 = vmul.f32 %v1245, %v2145
      %v2174 = vmul.f32 %v1246, %v2145
      %v2175 = vmul.f32 %v1247, %v2145
      %v2176 = vmul.f32 %v1248, %v2145
      %v2177 = vmul.f32 %v1249, %v2145
      %v2178 = vmul.f32 %v1250, %v2145
      %v2179 = vmul.f32 %v1251, %v2145
      %v2180 = vmul.f32 %v1252, %v2145
      %v2181 = vmul.f32 %v1253, %v2145
      %v2182 = vmul.f32 %v1254, %v2145
      %v2183 = vmul.f32 %v1255, %v2145
      %v2184 = vmul.f32 %v1256, %v2145
      %v2185 = vmul.f32 %v1257, %v2145
      %v2186 = vmul.f32 %v1258, %v2145
      %v2187 = vmul.f32 %v1259, %v2145
      %v2188 = vmul.f32 %v1260, %v2145
      %v2189 = vmul.f32 %v1261, %v2145
      %v2190 = vmul.f32 %v1262, %v2145
      %v2191 = vmul.f32 %v1263, %v2145
      %v2192 = vmul.f32 %v1264, %v2145
      %v2193 = vmul.f32 %v1265, %v2145
      %v2242 = vrot.slane %v2146, 2
      %v2243 = vrot.slane %v2147, 2
      %v2244 = vsel %vm1685, %v2242, %v2243
      %v2245 = vrot.slane %v2148, 2
      %v2246 = vsel %vm1685, %v2243, %v2245
      %v2247 = vrot.slane %v2149, 2
      %v2248 = vrot.slane %v2150, 2
      %v2249 = vsel %vm1685, %v2247, %v2248
      %v2250 = vrot.slane %v2151, 2
      %v2251 = vsel %vm1685, %v2248, %v2250
      %v2252 = vrot.slane %v2152, 2
      %v2253 = vrot.slane %v2153, 2
      %v2254 = vsel %vm1685, %v2252, %v2253
      %v2255 = vrot.slane %v2154, 2
      %v2256 = vsel %vm1685, %v2253, %v2255
      %v2257 = vrot.slane %v2155, 2
      %v2258 = vrot.slane %v2156, 2
      %v2259 = vsel %vm1685, %v2257, %v2258
      %v2260 = vrot.slane %v2157, 2
      %v2261 = vsel %vm1685, %v2258, %v2260
      %v2262 = vrot.slane %v2158, 2
      %v2263 = vrot.slane %v2159, 2
      %v2264 = vsel %vm1685, %v2262, %v2263
      %v2265 = vrot.slane %v2160, 2
      %v2266 = vsel %vm1685, %v2263, %v2265
      %v2267 = vrot.slane %v2161, 2
      %v2268 = vrot.slane %v2162, 2
      %v2269 = vsel %vm1685, %v2267, %v2268
      %v2270 = vrot.slane %v2163, 2
      %v2271 = vsel %vm1685, %v2268, %v2270
      %v2272 = vrot.slane %v2164, 2
      %v2273 = vrot.slane %v2165, 2
      %v2274 = vsel %vm1685, %v2272, %v2273
      %v2275 = vrot.slane %v2166, 2
      %v2276 = vsel %vm1685, %v2273, %v2275
      %v2277 = vrot.slane %v2167, 2
      %v2278 = vrot.slane %v2168, 2
      %v2279 = vsel %vm1685, %v2277, %v2278
      %v2280 = vrot.slane %v2169, 2
      %v2281 = vsel %vm1685, %v2278, %v2280
      %v2282 = vrot.slane %v2170, 2
      %v2283 = vrot.slane %v2171, 2
      %v2284 = vsel %vm1685, %v2282, %v2283
      %v2285 = vrot.slane %v2172, 2
      %v2286 = vsel %vm1685, %v2283, %v2285
      %v2287 = vrot.slane %v2173, 2
      %v2288 = vrot.slane %v2174, 2
      %v2289 = vsel %vm1685, %v2287, %v2288
      %v2290 = vrot.slane %v2175, 2
      %v2291 = vsel %vm1685, %v2288, %v2290
      %v2292 = vrot.slane %v2176, 2
      %v2293 = vrot.slane %v2177, 2
      %v2294 = vsel %vm1685, %v2292, %v2293
      %v2295 = vrot.slane %v2178, 2
      %v2296 = vsel %vm1685, %v2293, %v2295
      %v2297 = vrot.slane %v2179, 2
      %v2298 = vrot.slane %v2180, 2
      %v2299 = vsel %vm1685, %v2297, %v2298
      %v2300 = vrot.slane %v2181, 2
      %v2301 = vsel %vm1685, %v2298, %v2300
      %v2302 = vrot.slane %v2182, 2
      %v2303 = vrot.slane %v2183, 2
      %v2304 = vsel %vm1685, %v2302, %v2303
      %v2305 = vrot.slane %v2184, 2
      %v2306 = vsel %vm1685, %v2303, %v2305
      %v2307 = vrot.slane %v2185, 2
      %v2308 = vrot.slane %v2186, 2
      %v2309 = vsel %vm1685, %v2307, %v2308
      %v2310 = vrot.slane %v2187, 2
      %v2311 = vsel %vm1685, %v2308, %v2310
      %v2312 = vrot.slane %v2188, 2
      %v2313 = vrot.slane %v2189, 2
      %v2314 = vsel %vm1685, %v2312, %v2313
      %v2315 = vrot.slane %v2190, 2
      %v2316 = vsel %vm1685, %v2313, %v2315
      %v2317 = vrot.slane %v2191, 2
      %v2318 = vrot.slane %v2192, 2
      %v2319 = vsel %vm1685, %v2317, %v2318
      %v2320 = vrot.slane %v2193, 2
      %v2321 = vsel %vm1685, %v2318, %v2320
      %v2354 = vadd.f32 %v2110, %v2244
      %v2355 = vadd.f32 %v2111, %v2246
      %v2356 = vadd.f32 %v2112, %v2249
      %v2357 = vadd.f32 %v2113, %v2251
      %v2358 = vadd.f32 %v2114, %v2254
      %v2359 = vadd.f32 %v2115, %v2256
      %v2360 = vadd.f32 %v2116, %v2259
      %v2361 = vadd.f32 %v2117, %v2261
      %v2362 = vadd.f32 %v2118, %v2264
      %v2363 = vadd.f32 %v2119, %v2266
      %v2364 = vadd.f32 %v2120, %v2269
      %v2365 = vadd.f32 %v2121, %v2271
      %v2366 = vadd.f32 %v2122, %v2274
      %v2367 = vadd.f32 %v2123, %v2276
      %v2368 = vadd.f32 %v2124, %v2279
      %v2369 = vadd.f32 %v2125, %v2281
      %v2370 = vadd.f32 %v2126, %v2284
      %v2371 = vadd.f32 %v2127, %v2286
      %v2372 = vadd.f32 %v2128, %v2289
      %v2373 = vadd.f32 %v2129, %v2291
      %v2374 = vadd.f32 %v2130, %v2294
      %v2375 = vadd.f32 %v2131, %v2296
      %v2376 = vadd.f32 %v2132, %v2299
      %v2377 = vadd.f32 %v2133, %v2301
      %v2378 = vadd.f32 %v2134, %v2304
      %v2379 = vadd.f32 %v2135, %v2306
      %v2380 = vadd.f32 %v2136, %v2309
      %v2381 = vadd.f32 %v2137, %v2311
      %v2382 = vadd.f32 %v2138, %v2314
      %v2383 = vadd.f32 %v2139, %v2316
      %v2384 = vadd.f32 %v2140, %v2319
      %v2385 = vadd.f32 %v2141, %v2321
      %v2386 = vlaneseq
      %v2387 = vshrl.u32 %v2386, 7
      %v2388 = vsub.s32 0, %v2387
      %v2389 = vrot.slane %v1271, %v2388
      %v2390 = vmul.f32 %v1221, %v2389
      %v2391 = vmul.f32 %v1222, %v2389
      %v2392 = vmul.f32 %v1224, %v2389
      %v2393 = vmul.f32 %v1225, %v2389
      %v2394 = vmul.f32 %v1227, %v2389
      %v2395 = vmul.f32 %v1228, %v2389
      %v2396 = vmul.f32 %v1230, %v2389
      %v2397 = vmul.f32 %v1231, %v2389
      %v2398 = vmul.f32 %v1233, %v2389
      %v2399 = vmul.f32 %v1234, %v2389
      %v2400 = vmul.f32 %v1236, %v2389
      %v2401 = vmul.f32 %v1237, %v2389
      %v2402 = vmul.f32 %v1239, %v2389
      %v2403 = vmul.f32 %v1240, %v2389
      %v2404 = vmul.f32 %v1242, %v2389
      %v2405 = vmul.f32 %v1243, %v2389
      %v2406 = vmul.f32 %v1245, %v2389
      %v2407 = vmul.f32 %v1246, %v2389
      %v2408 = vmul.f32 %v1248, %v2389
      %v2409 = vmul.f32 %v1249, %v2389
      %v2410 = vmul.f32 %v1251, %v2389
      %v2411 = vmul.f32 %v1252, %v2389
      %v2412 = vmul.f32 %v1254, %v2389
      %v2413 = vmul.f32 %v1255, %v2389
      %v2414 = vmul.f32 %v1257, %v2389
      %v2415 = vmul.f32 %v1258, %v2389
      %v2416 = vmul.f32 %v1260, %v2389
      %v2417 = vmul.f32 %v1261, %v2389
      %v2418 = vmul.f32 %v1263, %v2389
      %v2419 = vmul.f32 %v1264, %v2389
      %v2420 = vmul.f32 %v1266, %v2389
      %v2421 = vmul.f32 %v1267, %v2389
      %v2422 = vadd.f32 %v2354, %v2390
      %v2423 = vadd.f32 %v2355, %v2391
      %v2424 = vadd.f32 %v2356, %v2392
      %v2425 = vadd.f32 %v2357, %v2393
      %v2426 = vadd.f32 %v2358, %v2394
      %v2427 = vadd.f32 %v2359, %v2395
      %v2428 = vadd.f32 %v2360, %v2396
      %v2429 = vadd.f32 %v2361, %v2397
      %v2430 = vadd.f32 %v2362, %v2398
      %v2431 = vadd.f32 %v2363, %v2399
      %v2432 = vadd.f32 %v2364, %v2400
      %v2433 = vadd.f32 %v2365, %v2401
      %v2434 = vadd.f32 %v2366, %v2402
      %v2435 = vadd.f32 %v2367, %v2403
      %v2436 = vadd.f32 %v2368, %v2404
      %v2437 = vadd.f32 %v2369, %v2405
      %v2438 = vadd.f32 %v2370, %v2406
      %v2439 = vadd.f32 %v2371, %v2407
      %v2440 = vadd.f32 %v2372, %v2408
      %v2441 = vadd.f32 %v2373, %v2409
      %v2442 = vadd.f32 %v2374, %v2410
      %v2443 = vadd.f32 %v2375, %v2411
      %v2444 = vadd.f32 %v2376, %v2412
      %v2445 = vadd.f32 %v2377, %v2413
      %v2446 = vadd.f32 %v2378, %v2414
      %v2447 = vadd.f32 %v2379, %v2415
      %v2448 = vadd.f32 %v2380, %v2416
      %v2449 = vadd.f32 %v2381, %v2417
      %v2450 = vadd.f32 %v2382, %v2418
      %v2451 = vadd.f32 %v2383, %v2419
      %v2452 = vadd.f32 %v2384, %v2420
      %v2453 = vadd.f32 %v2385, %v2421
      %v2454 = vlaneseq
      %v2455 = vshrl.u32 %v2454, 7
      %v2456 = vsub.s32 1, %v2455
      %v2457 = vrot.slane %v1271, %v2456
      %v2458 = vmul.f32 %v1221, %v2457
      %v2459 = vmul.f32 %v1222, %v2457
      %v2460 = vmul.f32 %v1223, %v2457
      %v2461 = vmul.f32 %v1224, %v2457
      %v2462 = vmul.f32 %v1225, %v2457
      %v2463 = vmul.f32 %v1226, %v2457
      %v2464 = vmul.f32 %v1227, %v2457
      %v2465 = vmul.f32 %v1228, %v2457
      %v2466 = vmul.f32 %v1229, %v2457
      %v2467 = vmul.f32 %v1230, %v2457
      %v2468 = vmul.f32 %v1231, %v2457
      %v2469 = vmul.f32 %v1232, %v2457
      %v2470 = vmul.f32 %v1233, %v2457
      %v2471 = vmul.f32 %v1234, %v2457
      %v2472 = vmul.f32 %v1235, %v2457
      %v2473 = vmul.f32 %v1236, %v2457
      %v2474 = vmul.f32 %v1237, %v2457
      %v2475 = vmul.f32 %v1238, %v2457
      %v2476 = vmul.f32 %v1239, %v2457
      %v2477 = vmul.f32 %v1240, %v2457
      %v2478 = vmul.f32 %v1241, %v2457
      %v2479 = vmul.f32 %v1242, %v2457
      %v2480 = vmul.f32 %v1243, %v2457
      %v2481 = vmul.f32 %v1244, %v2457
      %v2482 = vmul.f32 %v1245, %v2457
      %v2483 = vmul.f32 %v1246, %v2457
      %v2484 = vmul.f32 %v1247, %v2457
      %v2485 = vmul.f32 %v1248, %v2457
      %v2486 = vmul.f32 %v1249, %v2457
      %v2487 = vmul.f32 %v1250, %v2457
      %v2488 = vmul.f32 %v1251, %v2457
      %v2489 = vmul.f32 %v1252, %v2457
      %v2490 = vmul.f32 %v1253, %v2457
      %v2491 = vmul.f32 %v1254, %v2457
      %v2492 = vmul.f32 %v1255, %v2457
      %v2493 = vmul.f32 %v1256, %v2457
      %v2494 = vmul.f32 %v1257, %v2457
      %v2495 = vmul.f32 %v1258, %v2457
      %v2496 = vmul.f32 %v1259, %v2457
      %v2497 = vmul.f32 %v1260, %v2457
      %v2498 = vmul.f32 %v1261, %v2457
      %v2499 = vmul.f32 %v1262, %v2457
      %v2500 = vmul.f32 %v1263, %v2457
      %v2501 = vmul.f32 %v1264, %v2457
      %v2502 = vmul.f32 %v1265, %v2457
      %v2503 = vmul.f32 %v1266, %v2457
      %v2504 = vmul.f32 %v1267, %v2457
      %v2505 = vmul.f32 %v1268, %v2457
      %v2554 = vrot.slane %v2458, 1
      %v2555 = vrot.slane %v2459, 1
      %v2556 = vsel %vm1440, %v2554, %v2555
      %v2557 = vrot.slane %v2460, 1
      %v2558 = vsel %vm1440, %v2555, %v2557
      %v2559 = vrot.slane %v2461, 1
      %v2560 = vrot.slane %v2462, 1
      %v2561 = vsel %vm1440, %v2559, %v2560
      %v2562 = vrot.slane %v2463, 1
      %v2563 = vsel %vm1440, %v2560, %v2562
      %v2564 = vrot.slane %v2464, 1
      %v2565 = vrot.slane %v2465, 1
      %v2566 = vsel %vm1440, %v2564, %v2565
      %v2567 = vrot.slane %v2466, 1
      %v2568 = vsel %vm1440, %v2565, %v2567
      %v2569 = vrot.slane %v2467, 1
      %v2570 = vrot.slane %v2468, 1
      %v2571 = vsel %vm1440, %v2569, %v2570
      %v2572 = vrot.slane %v2469, 1
      %v2573 = vsel %vm1440, %v2570, %v2572
      %v2574 = vrot.slane %v2470, 1
      %v2575 = vrot.slane %v2471, 1
      %v2576 = vsel %vm1440, %v2574, %v2575
      %v2577 = vrot.slane %v2472, 1
      %v2578 = vsel %vm1440, %v2575, %v2577
      %v2579 = vrot.slane %v2473, 1
      %v2580 = vrot.slane %v2474, 1
      %v2581 = vsel %vm1440, %v2579, %v2580
      %v2582 = vrot.slane %v2475, 1
      %v2583 = vsel %vm1440, %v2580, %v2582
      %v2584 = vrot.slane %v2476, 1
      %v2585 = vrot.slane %v2477, 1
      %v2586 = vsel %vm1440, %v2584, %v2585
      %v2587 = vrot.slane %v2478, 1
      %v2588 = vsel %vm1440, %v2585, %v2587
      %v2589 = vrot.slane %v2479, 1
      %v2590 = vrot.slane %v2480, 1
      %v2591 = vsel %vm1440, %v2589, %v2590
      %v2592 = vrot.slane %v2481, 1
      %v2593 = vsel %vm1440, %v2590, %v2592
      %v2594 = vrot.slane %v2482, 1
      %v2595 = vrot.slane %v2483, 1
      %v2596 = vsel %vm1440, %v2594, %v2595
      %v2597 = vrot.slane %v2484, 1
      %v2598 = vsel %vm1440, %v2595, %v2597
      %v2599 = vrot.slane %v2485, 1
      %v2600 = vrot.slane %v2486, 1
      %v2601 = vsel %vm1440, %v2599, %v2600
      %v2602 = vrot.slane %v2487, 1
      %v2603 = vsel %vm1440, %v2600, %v2602
      %v2604 = vrot.slane %v2488, 1
      %v2605 = vrot.slane %v2489, 1
      %v2606 = vsel %vm1440, %v2604, %v2605
      %v2607 = vrot.slane %v2490, 1
      %v2608 = vsel %vm1440, %v2605, %v2607
      %v2609 = vrot.slane %v2491, 1
      %v2610 = vrot.slane %v2492, 1
      %v2611 = vsel %vm1440, %v2609, %v2610
      %v2612 = vrot.slane %v2493, 1
      %v2613 = vsel %vm1440, %v2610, %v2612
      %v2614 = vrot.slane %v2494, 1
      %v2615 = vrot.slane %v2495, 1
      %v2616 = vsel %vm1440, %v2614, %v2615
      %v2617 = vrot.slane %v2496, 1
      %v2618 = vsel %vm1440, %v2615, %v2617
      %v2619 = vrot.slane %v2497, 1
      %v2620 = vrot.slane %v2498, 1
      %v2621 = vsel %vm1440, %v2619, %v2620
      %v2622 = vrot.slane %v2499, 1
      %v2623 = vsel %vm1440, %v2620, %v2622
      %v2624 = vrot.slane %v2500, 1
      %v2625 = vrot.slane %v2501, 1
      %v2626 = vsel %vm1440, %v2624, %v2625
      %v2627 = vrot.slane %v2502, 1
      %v2628 = vsel %vm1440, %v2625, %v2627
      %v2629 = vrot.slane %v2503, 1
      %v2630 = vrot.slane %v2504, 1
      %v2631 = vsel %vm1440, %v2629, %v2630
      %v2632 = vrot.slane %v2505, 1
      %v2633 = vsel %vm1440, %v2630, %v2632
      %v2666 = vadd.f32 %v2422, %v2556
      %v2667 = vadd.f32 %v2423, %v2558
      %v2668 = vadd.f32 %v2424, %v2561
      %v2669 = vadd.f32 %v2425, %v2563
      %v2670 = vadd.f32 %v2426, %v2566
      %v2671 = vadd.f32 %v2427, %v2568
      %v2672 = vadd.f32 %v2428, %v2571
      %v2673 = vadd.f32 %v2429, %v2573
      %v2674 = vadd.f32 %v2430, %v2576
      %v2675 = vadd.f32 %v2431, %v2578
      %v2676 = vadd.f32 %v2432, %v2581
      %v2677 = vadd.f32 %v2433, %v2583
      %v2678 = vadd.f32 %v2434, %v2586
      %v2679 = vadd.f32 %v2435, %v2588
      %v2680 = vadd.f32 %v2436, %v2591
      %v2681 = vadd.f32 %v2437, %v2593
      %v2682 = vadd.f32 %v2438, %v2596
      %v2683 = vadd.f32 %v2439, %v2598
      %v2684 = vadd.f32 %v2440, %v2601
      %v2685 = vadd.f32 %v2441, %v2603
      %v2686 = vadd.f32 %v2442, %v2606
      %v2687 = vadd.f32 %v2443, %v2608
      %v2688 = vadd.f32 %v2444, %v2611
      %v2689 = vadd.f32 %v2445, %v2613
      %v2690 = vadd.f32 %v2446, %v2616
      %v2691 = vadd.f32 %v2447, %v2618
      %v2692 = vadd.f32 %v2448, %v2621
      %v2693 = vadd.f32 %v2449, %v2623
      %v2694 = vadd.f32 %v2450, %v2626
      %v2695 = vadd.f32 %v2451, %v2628
      %v2696 = vadd.f32 %v2452, %v2631
      %v2697 = vadd.f32 %v2453, %v2633
      %v2698 = vlaneseq
      %v2699 = vshrl.u32 %v2698, 7
      %v2700 = vsub.s32 2, %v2699
      %v2701 = vrot.slane %v1271, %v2700
      %v2702 = vmul.f32 %v1221, %v2701
      %v2703 = vmul.f32 %v1222, %v2701
      %v2704 = vmul.f32 %v1223, %v2701
      %v2705 = vmul.f32 %v1224, %v2701
      %v2706 = vmul.f32 %v1225, %v2701
      %v2707 = vmul.f32 %v1226, %v2701
      %v2708 = vmul.f32 %v1227, %v2701
      %v2709 = vmul.f32 %v1228, %v2701
      %v2710 = vmul.f32 %v1229, %v2701
      %v2711 = vmul.f32 %v1230, %v2701
      %v2712 = vmul.f32 %v1231, %v2701
      %v2713 = vmul.f32 %v1232, %v2701
      %v2714 = vmul.f32 %v1233, %v2701
      %v2715 = vmul.f32 %v1234, %v2701
      %v2716 = vmul.f32 %v1235, %v2701
      %v2717 = vmul.f32 %v1236, %v2701
      %v2718 = vmul.f32 %v1237, %v2701
      %v2719 = vmul.f32 %v1238, %v2701
      %v2720 = vmul.f32 %v1239, %v2701
      %v2721 = vmul.f32 %v1240, %v2701
      %v2722 = vmul.f32 %v1241, %v2701
      %v2723 = vmul.f32 %v1242, %v2701
      %v2724 = vmul.f32 %v1243, %v2701
      %v2725 = vmul.f32 %v1244, %v2701
      %v2726 = vmul.f32 %v1245, %v2701
      %v2727 = vmul.f32 %v1246, %v2701
      %v2728 = vmul.f32 %v1247, %v2701
      %v2729 = vmul.f32 %v1248, %v2701
      %v2730 = vmul.f32 %v1249, %v2701
      %v2731 = vmul.f32 %v1250, %v2701
      %v2732 = vmul.f32 %v1251, %v2701
      %v2733 = vmul.f32 %v1252, %v2701
      %v2734 = vmul.f32 %v1253, %v2701
      %v2735 = vmul.f32 %v1254, %v2701
      %v2736 = vmul.f32 %v1255, %v2701
      %v2737 = vmul.f32 %v1256, %v2701
      %v2738 = vmul.f32 %v1257, %v2701
      %v2739 = vmul.f32 %v1258, %v2701
      %v2740 = vmul.f32 %v1259, %v2701
      %v2741 = vmul.f32 %v1260, %v2701
      %v2742 = vmul.f32 %v1261, %v2701
      %v2743 = vmul.f32 %v1262, %v2701
      %v2744 = vmul.f32 %v1263, %v2701
      %v2745 = vmul.f32 %v1264, %v2701
      %v2746 = vmul.f32 %v1265, %v2701
      %v2747 = vmul.f32 %v1266, %v2701
      %v2748 = vmul.f32 %v1267, %v2701
      %v2749 = vmul.f32 %v1268, %v2701
      %v2798 = vrot.slane %v2702, 2
      %v2799 = vrot.slane %v2703, 2
      %v2800 = vsel %vm1685, %v2798, %v2799
      %v2801 = vrot.slane %v2704, 2
      %v2802 = vsel %vm1685, %v2799, %v2801
      %v2803 = vrot.slane %v2705, 2
      %v2804 = vrot.slane %v2706, 2
      %v2805 = vsel %vm1685, %v2803, %v2804
      %v2806 = vrot.slane %v2707, 2
      %v2807 = vsel %vm1685, %v2804, %v2806
      %v2808 = vrot.slane %v2708, 2
      %v2809 = vrot.slane %v2709, 2
      %v2810 = vsel %vm1685, %v2808, %v2809
      %v2811 = vrot.slane %v2710, 2
      %v2812 = vsel %vm1685, %v2809, %v2811
      %v2813 = vrot.slane %v2711, 2
      %v2814 = vrot.slane %v2712, 2
      %v2815 = vsel %vm1685, %v2813, %v2814
      %v2816 = vrot.slane %v2713, 2
      %v2817 = vsel %vm1685, %v2814, %v2816
      %v2818 = vrot.slane %v2714, 2
      %v2819 = vrot.slane %v2715, 2
      %v2820 = vsel %vm1685, %v2818, %v2819
      %v2821 = vrot.slane %v2716, 2
      %v2822 = vsel %vm1685, %v2819, %v2821
      %v2823 = vrot.slane %v2717, 2
      %v2824 = vrot.slane %v2718, 2
      %v2825 = vsel %vm1685, %v2823, %v2824
      %v2826 = vrot.slane %v2719, 2
      %v2827 = vsel %vm1685, %v2824, %v2826
      %v2828 = vrot.slane %v2720, 2
      %v2829 = vrot.slane %v2721, 2
      %v2830 = vsel %vm1685, %v2828, %v2829
      %v2831 = vrot.slane %v2722, 2
      %v2832 = vsel %vm1685, %v2829, %v2831
      %v2833 = vrot.slane %v2723, 2
      %v2834 = vrot.slane %v2724, 2
      %v2835 = vsel %vm1685, %v2833, %v2834
      %v2836 = vrot.slane %v2725, 2
      %v2837 = vsel %vm1685, %v2834, %v2836
      %v2838 = vrot.slane %v2726, 2
      %v2839 = vrot.slane %v2727, 2
      %v2840 = vsel %vm1685, %v2838, %v2839
      %v2841 = vrot.slane %v2728, 2
      %v2842 = vsel %vm1685, %v2839, %v2841
      %v2843 = vrot.slane %v2729, 2
      %v2844 = vrot.slane %v2730, 2
      %v2845 = vsel %vm1685, %v2843, %v2844
      %v2846 = vrot.slane %v2731, 2
      %v2847 = vsel %vm1685, %v2844, %v2846
      %v2848 = vrot.slane %v2732, 2
      %v2849 = vrot.slane %v2733, 2
      %v2850 = vsel %vm1685, %v2848, %v2849
      %v2851 = vrot.slane %v2734, 2
      %v2852 = vsel %vm1685, %v2849, %v2851
      %v2853 = vrot.slane %v2735, 2
      %v2854 = vrot.slane %v2736, 2
      %v2855 = vsel %vm1685, %v2853, %v2854
      %v2856 = vrot.slane %v2737, 2
      %v2857 = vsel %vm1685, %v2854, %v2856
      %v2858 = vrot.slane %v2738, 2
      %v2859 = vrot.slane %v2739, 2
      %v2860 = vsel %vm1685, %v2858, %v2859
      %v2861 = vrot.slane %v2740, 2
      %v2862 = vsel %vm1685, %v2859, %v2861
      %v2863 = vrot.slane %v2741, 2
      %v2864 = vrot.slane %v2742, 2
      %v2865 = vsel %vm1685, %v2863, %v2864
      %v2866 = vrot.slane %v2743, 2
      %v2867 = vsel %vm1685, %v2864, %v2866
      %v2868 = vrot.slane %v2744, 2
      %v2869 = vrot.slane %v2745, 2
      %v2870 = vsel %vm1685, %v2868, %v2869
      %v2871 = vrot.slane %v2746, 2
      %v2872 = vsel %vm1685, %v2869, %v2871
      %v2873 = vrot.slane %v2747, 2
      %v2874 = vrot.slane %v2748, 2
      %v2875 = vsel %vm1685, %v2873, %v2874
      %v2876 = vrot.slane %v2749, 2
      %v2877 = vsel %vm1685, %v2874, %v2876
      %v2910 = vadd.f32 %v2666, %v2800
      %v2911 = vadd.f32 %v2667, %v2802
      %v2912 = vadd.f32 %v2668, %v2805
      %v2913 = vadd.f32 %v2669, %v2807
      %v2914 = vadd.f32 %v2670, %v2810
      %v2915 = vadd.f32 %v2671, %v2812
      %v2916 = vadd.f32 %v2672, %v2815
      %v2917 = vadd.f32 %v2673, %v2817
      %v2918 = vadd.f32 %v2674, %v2820
      %v2919 = vadd.f32 %v2675, %v2822
      %v2920 = vadd.f32 %v2676, %v2825
      %v2921 = vadd.f32 %v2677, %v2827
      %v2922 = vadd.f32 %v2678, %v2830
      %v2923 = vadd.f32 %v2679, %v2832
      %v2924 = vadd.f32 %v2680, %v2835
      %v2925 = vadd.f32 %v2681, %v2837
      %v2926 = vadd.f32 %v2682, %v2840
      %v2927 = vadd.f32 %v2683, %v2842
      %v2928 = vadd.f32 %v2684, %v2845
      %v2929 = vadd.f32 %v2685, %v2847
      %v2930 = vadd.f32 %v2686, %v2850
      %v2931 = vadd.f32 %v2687, %v2852
      %v2932 = vadd.f32 %v2688, %v2855
      %v2933 = vadd.f32 %v2689, %v2857
      %v2934 = vadd.f32 %v2690, %v2860
      %v2935 = vadd.f32 %v2691, %v2862
      %v2936 = vadd.f32 %v2692, %v2865
      %v2937 = vadd.f32 %v2693, %v2867
      %v2938 = vadd.f32 %v2694, %v2870
      %v2939 = vadd.f32 %v2695, %v2872
      %v2940 = vadd.f32 %v2696, %v2875
      %v2941 = vadd.f32 %v2697, %v2877
      %v2942 = vld [vmem:[%s5] sm:$0x1]
      %v2944 = vlaneseq
      %v2945 = vshrl.u32 %v2944, 7
      %v2946 = vsub.s32 0, %v2945
      %v2947 = vrot.slane %v2942, %v2946
      %v2949 = vmul.f32 %v2910, %v2947
      %v2950 = vmul.f32 %v2911, %v2947
      %v2951 = vmul.f32 %v2912, %v2947
      %v2952 = vmul.f32 %v2913, %v2947
      %v2953 = vmul.f32 %v2914, %v2947
      %v2954 = vmul.f32 %v2915, %v2947
      %v2955 = vmul.f32 %v2916, %v2947
      %v2956 = vmul.f32 %v2917, %v2947
      %v2957 = vmul.f32 %v2918, %v2947
      %v2958 = vmul.f32 %v2919, %v2947
      %v2959 = vmul.f32 %v2920, %v2947
      %v2960 = vmul.f32 %v2921, %v2947
      %v2961 = vmul.f32 %v2922, %v2947
      %v2962 = vmul.f32 %v2923, %v2947
      %v2963 = vmul.f32 %v2924, %v2947
      %v2964 = vmul.f32 %v2925, %v2947
      %v2965 = vmul.f32 %v2926, %v2947
      %v2966 = vmul.f32 %v2927, %v2947
      %v2967 = vmul.f32 %v2928, %v2947
      %v2968 = vmul.f32 %v2929, %v2947
      %v2969 = vmul.f32 %v2930, %v2947
      %v2970 = vmul.f32 %v2931, %v2947
      %v2971 = vmul.f32 %v2932, %v2947
      %v2972 = vmul.f32 %v2933, %v2947
      %v2973 = vmul.f32 %v2934, %v2947
      %v2974 = vmul.f32 %v2935, %v2947
      %v2975 = vmul.f32 %v2936, %v2947
      %v2976 = vmul.f32 %v2937, %v2947
      %v2977 = vmul.f32 %v2938, %v2947
      %v2978 = vmul.f32 %v2939, %v2947
      %v2979 = vmul.f32 %v2940, %v2947
      %v2980 = vmul.f32 %v2941, %v2947
      %v2981 = vld [vmem:[%s6] sm:$0x1]
      %v2983 = vlaneseq
      %v2984 = vshrl.u32 %v2983, 7
      %v2985 = vsub.s32 0, %v2984
      %v2986 = vrot.slane %v2981, %v2985
      %v2988 = vadd.f32 %v2949, %v2986
      %v2989 = vadd.f32 %v2950, %v2986
      %v2990 = vadd.f32 %v2951, %v2986
      %v2991 = vadd.f32 %v2952, %v2986
      %v2992 = vadd.f32 %v2953, %v2986
      %v2993 = vadd.f32 %v2954, %v2986
      %v2994 = vadd.f32 %v2955, %v2986
      %v2995 = vadd.f32 %v2956, %v2986
      %v2996 = vadd.f32 %v2957, %v2986
      %v2997 = vadd.f32 %v2958, %v2986
      %v2998 = vadd.f32 %v2959, %v2986
      %v2999 = vadd.f32 %v2960, %v2986
      %v3000 = vadd.f32 %v2961, %v2986
      %v3001 = vadd.f32 %v2962, %v2986
      %v3002 = vadd.f32 %v2963, %v2986
      %v3003 = vadd.f32 %v2964, %v2986
      %v3004 = vadd.f32 %v2965, %v2986
      %v3005 = vadd.f32 %v2966, %v2986
      %v3006 = vadd.f32 %v2967, %v2986
      %v3007 = vadd.f32 %v2968, %v2986
      %v3008 = vadd.f32 %v2969, %v2986
      %v3009 = vadd.f32 %v2970, %v2986
      %v3010 = vadd.f32 %v2971, %v2986
      %v3011 = vadd.f32 %v2972, %v2986
      %v3012 = vadd.f32 %v2973, %v2986
      %v3013 = vadd.f32 %v2974, %v2986
      %v3014 = vadd.f32 %v2975, %v2986
      %v3015 = vadd.f32 %v2976, %v2986
      %v3016 = vadd.f32 %v2977, %v2986
      %v3017 = vadd.f32 %v2978, %v2986
      %v3018 = vadd.f32 %v2979, %v2986
      %v3019 = vadd.f32 %v2980, %v2986
      %v3020 = vxor.u32 %v2988, 2147483648
      %v3021 = vxor.u32 %v2989, 2147483648
      %v3022 = vxor.u32 %v2990, 2147483648
      %v3023 = vxor.u32 %v2991, 2147483648
      %v3024 = vxor.u32 %v2992, 2147483648
      %v3025 = vxor.u32 %v2993, 2147483648
      %v3026 = vxor.u32 %v2994, 2147483648
      %v3027 = vxor.u32 %v2995, 2147483648
      %v3028 = vxor.u32 %v2996, 2147483648
      %v3029 = vxor.u32 %v2997, 2147483648
      %v3030 = vxor.u32 %v2998, 2147483648
      %v3031 = vxor.u32 %v2999, 2147483648
      %v3032 = vxor.u32 %v3000, 2147483648
      %v3033 = vxor.u32 %v3001, 2147483648
      %v3034 = vxor.u32 %v3002, 2147483648
      %v3035 = vxor.u32 %v3003, 2147483648
      %v3036 = vxor.u32 %v3004, 2147483648
      %v3037 = vxor.u32 %v3005, 2147483648
      %v3038 = vxor.u32 %v3006, 2147483648
      %v3039 = vxor.u32 %v3007, 2147483648
      %v3040 = vxor.u32 %v3008, 2147483648
      %v3041 = vxor.u32 %v3009, 2147483648
      %v3042 = vxor.u32 %v3010, 2147483648
      %v3043 = vxor.u32 %v3011, 2147483648
      %v3044 = vxor.u32 %v3012, 2147483648
      %v3045 = vxor.u32 %v3013, 2147483648
      %v3046 = vxor.u32 %v3014, 2147483648
      %v3047 = vxor.u32 %v3015, 2147483648
      %v3048 = vxor.u32 %v3016, 2147483648
      %v3049 = vxor.u32 %v3017, 2147483648
      %v3050 = vxor.u32 %v3018, 2147483648
      %v3051 = vxor.u32 %v3019, 2147483648
      %v3052 = vmul.f32 %v3020, 1.442695
      %v3053 = vpow.pop %v3052
      %v3054 = vmul.f32 %v3021, 1.442695
      %v3055 = vpow.pop %v3054
      %v3056 = vmul.f32 %v3022, 1.442695
      %v3057 = vpow.pop %v3056
      %v3058 = vmul.f32 %v3023, 1.442695
      %v3059 = vpow.pop %v3058
      %v3060 = vmul.f32 %v3024, 1.442695
      %v3061 = vpow.pop %v3060
      %v3062 = vmul.f32 %v3025, 1.442695
      %v3063 = vpow.pop %v3062
      %v3064 = vmul.f32 %v3026, 1.442695
      %v3065 = vpow.pop %v3064
      %v3066 = vmul.f32 %v3027, 1.442695
      %v3067 = vpow.pop %v3066
      %v3068 = vmul.f32 %v3028, 1.442695
      %v3069 = vpow.pop %v3068
      %v3070 = vmul.f32 %v3029, 1.442695
      %v3071 = vpow.pop %v3070
      %v3072 = vmul.f32 %v3030, 1.442695
      %v3073 = vpow.pop %v3072
      %v3074 = vmul.f32 %v3031, 1.442695
      %v3075 = vpow.pop %v3074
      %v3076 = vmul.f32 %v3032, 1.442695
      %v3077 = vpow.pop %v3076
      %v3078 = vmul.f32 %v3033, 1.442695
      %v3079 = vpow.pop %v3078
      %v3080 = vmul.f32 %v3034, 1.442695
      %v3081 = vpow.pop %v3080
      %v3082 = vmul.f32 %v3035, 1.442695
      %v3083 = vpow.pop %v3082
      %v3084 = vmul.f32 %v3036, 1.442695
      %v3085 = vpow.pop %v3084
      %v3086 = vmul.f32 %v3037, 1.442695
      %v3087 = vpow.pop %v3086
      %v3088 = vmul.f32 %v3038, 1.442695
      %v3089 = vpow.pop %v3088
      %v3090 = vmul.f32 %v3039, 1.442695
      %v3091 = vpow.pop %v3090
      %v3092 = vmul.f32 %v3040, 1.442695
      %v3093 = vpow.pop %v3092
      %v3094 = vmul.f32 %v3041, 1.442695
      %v3095 = vpow.pop %v3094
      %v3096 = vmul.f32 %v3042, 1.442695
      %v3097 = vpow.pop %v3096
      %v3098 = vmul.f32 %v3043, 1.442695
      %v3099 = vpow.pop %v3098
      %v3100 = vmul.f32 %v3044, 1.442695
      %v3101 = vpow.pop %v3100
      %v3102 = vmul.f32 %v3045, 1.442695
      %v3103 = vpow.pop %v3102
      %v3104 = vmul.f32 %v3046, 1.442695
      %v3105 = vpow.pop %v3104
      %v3106 = vmul.f32 %v3047, 1.442695
      %v3107 = vpow.pop %v3106
      %v3108 = vmul.f32 %v3048, 1.442695
      %v3109 = vpow.pop %v3108
      %v3110 = vmul.f32 %v3049, 1.442695
      %v3111 = vpow.pop %v3110
      %v3112 = vmul.f32 %v3050, 1.442695
      %v3113 = vpow.pop %v3112
      %v3114 = vmul.f32 %v3051, 1.442695
      %v3115 = vpow.pop %v3114
      %v3116 = vadd.f32 %v3053, 1.0
      %v3117 = vadd.f32 %v3055, 1.0
      %v3118 = vadd.f32 %v3057, 1.0
      %v3119 = vadd.f32 %v3059, 1.0
      %v3120 = vadd.f32 %v3061, 1.0
      %v3121 = vadd.f32 %v3063, 1.0
      %v3122 = vadd.f32 %v3065, 1.0
      %v3123 = vadd.f32 %v3067, 1.0
      %v3124 = vadd.f32 %v3069, 1.0
      %v3125 = vadd.f32 %v3071, 1.0
      %v3126 = vadd.f32 %v3073, 1.0
      %v3127 = vadd.f32 %v3075, 1.0
      %v3128 = vadd.f32 %v3077, 1.0
      %v3129 = vadd.f32 %v3079, 1.0
      %v3130 = vadd.f32 %v3081, 1.0
      %v3131 = vadd.f32 %v3083, 1.0
      %v3132 = vadd.f32 %v3085, 1.0
      %v3133 = vadd.f32 %v3087, 1.0
      %v3134 = vadd.f32 %v3089, 1.0
      %v3135 = vadd.f32 %v3091, 1.0
      %v3136 = vadd.f32 %v3093, 1.0
      %v3137 = vadd.f32 %v3095, 1.0
      %v3138 = vadd.f32 %v3097, 1.0
      %v3139 = vadd.f32 %v3099, 1.0
      %v3140 = vadd.f32 %v3101, 1.0
      %v3141 = vadd.f32 %v3103, 1.0
      %v3142 = vadd.f32 %v3105, 1.0
      %v3143 = vadd.f32 %v3107, 1.0
      %v3144 = vadd.f32 %v3109, 1.0
      %v3145 = vadd.f32 %v3111, 1.0
      %v3146 = vadd.f32 %v3113, 1.0
      %v3147 = vadd.f32 %v3115, 1.0
      %v3148 = vrcp.pop %v3116
      %v3149 = vmul.f32 1.0, %v3148
      %v3150 = vrcp.pop %v3117
      %v3151 = vmul.f32 1.0, %v3150
      %v3152 = vrcp.pop %v3118
      %v3153 = vmul.f32 1.0, %v3152
      %v3154 = vrcp.pop %v3119
      %v3155 = vmul.f32 1.0, %v3154
      %v3156 = vrcp.pop %v3120
      %v3157 = vmul.f32 1.0, %v3156
      %v3158 = vrcp.pop %v3121
      %v3159 = vmul.f32 1.0, %v3158
      %v3160 = vrcp.pop %v3122
      %v3161 = vmul.f32 1.0, %v3160
      %v3162 = vrcp.pop %v3123
      %v3163 = vmul.f32 1.0, %v3162
      %v3164 = vrcp.pop %v3124
      %v3165 = vmul.f32 1.0, %v3164
      %v3166 = vrcp.pop %v3125
      %v3167 = vmul.f32 1.0, %v3166
      %v3168 = vrcp.pop %v3126
      %v3169 = vmul.f32 1.0, %v3168
      %v3170 = vrcp.pop %v3127
      %v3171 = vmul.f32 1.0, %v3170
      %v3172 = vrcp.pop %v3128
      %v3173 = vmul.f32 1.0, %v3172
      %v3174 = vrcp.pop %v3129
      %v3175 = vmul.f32 1.0, %v3174
      %v3176 = vrcp.pop %v3130
      %v3177 = vmul.f32 1.0, %v3176
      %v3178 = vrcp.pop %v3131
      %v3179 = vmul.f32 1.0, %v3178
      %v3180 = vrcp.pop %v3132
      %v3181 = vmul.f32 1.0, %v3180
      %v3182 = vrcp.pop %v3133
      %v3183 = vmul.f32 1.0, %v3182
      %v3184 = vrcp.pop %v3134
      %v3185 = vmul.f32 1.0, %v3184
      %v3186 = vrcp.pop %v3135
      %v3187 = vmul.f32 1.0, %v3186
      %v3188 = vrcp.pop %v3136
      %v3189 = vmul.f32 1.0, %v3188
      %v3190 = vrcp.pop %v3137
      %v3191 = vmul.f32 1.0, %v3190
      %v3192 = vrcp.pop %v3138
      %v3193 = vmul.f32 1.0, %v3192
      %v3194 = vrcp.pop %v3139
      %v3195 = vmul.f32 1.0, %v3194
      %v3196 = vrcp.pop %v3140
      %v3197 = vmul.f32 1.0, %v3196
      %v3198 = vrcp.pop %v3141
      %v3199 = vmul.f32 1.0, %v3198
      %v3200 = vrcp.pop %v3142
      %v3201 = vmul.f32 1.0, %v3200
      %v3202 = vrcp.pop %v3143
      %v3203 = vmul.f32 1.0, %v3202
      %v3204 = vrcp.pop %v3144
      %v3205 = vmul.f32 1.0, %v3204
      %v3206 = vrcp.pop %v3145
      %v3207 = vmul.f32 1.0, %v3206
      %v3208 = vrcp.pop %v3146
      %v3209 = vmul.f32 1.0, %v3208
      %v3210 = vrcp.pop %v3147
      %v3211 = vmul.f32 1.0, %v3210
      %v3212 = vmul.f32 %v2988, %v3149
      %v3213 = vmul.f32 %v2989, %v3151
      %v3214 = vmul.f32 %v2990, %v3153
      %v3215 = vmul.f32 %v2991, %v3155
      %v3216 = vmul.f32 %v2992, %v3157
      %v3217 = vmul.f32 %v2993, %v3159
      %v3218 = vmul.f32 %v2994, %v3161
      %v3219 = vmul.f32 %v2995, %v3163
      %v3220 = vmul.f32 %v2996, %v3165
      %v3221 = vmul.f32 %v2997, %v3167
      %v3222 = vmul.f32 %v2998, %v3169
      %v3223 = vmul.f32 %v2999, %v3171
      %v3224 = vmul.f32 %v3000, %v3173
      %v3225 = vmul.f32 %v3001, %v3175
      %v3226 = vmul.f32 %v3002, %v3177
      %v3227 = vmul.f32 %v3003, %v3179
      %v3228 = vmul.f32 %v3004, %v3181
      %v3229 = vmul.f32 %v3005, %v3183
      %v3230 = vmul.f32 %v3006, %v3185
      %v3231 = vmul.f32 %v3007, %v3187
      %v3232 = vmul.f32 %v3008, %v3189
      %v3233 = vmul.f32 %v3009, %v3191
      %v3234 = vmul.f32 %v3010, %v3193
      %v3235 = vmul.f32 %v3011, %v3195
      %v3236 = vmul.f32 %v3012, %v3197
      %v3237 = vmul.f32 %v3013, %v3199
      %v3238 = vmul.f32 %v3014, %v3201
      %v3239 = vmul.f32 %v3015, %v3203
      %v3240 = vmul.f32 %v3016, %v3205
      %v3241 = vmul.f32 %v3017, %v3207
      %v3242 = vmul.f32 %v3018, %v3209
      %v3243 = vmul.f32 %v3019, %v3211
      %v3244 = vsel %vm1126, %v3212, 0.0
      %v3245 = vsel %vm1126, %v3213, 0.0
      %v3246 = vadd.f32 %v3244, %v3245
      %v3247 = vsel %vm1126, %v3214, 0.0
      %v3248 = vadd.f32 %v3246, %v3247
      %v3249 = vsel %vm1126, %v3215, 0.0
      %v3250 = vadd.f32 %v3248, %v3249
      %v3251 = vsel %vm1126, %v3216, 0.0
      %v3252 = vadd.f32 %v3250, %v3251
      %v3253 = vsel %vm1126, %v3217, 0.0
      %v3254 = vadd.f32 %v3252, %v3253
      %v3255 = vsel %vm1126, %v3218, 0.0
      %v3256 = vadd.f32 %v3254, %v3255
      %v3257 = vsel %vm1126, %v3219, 0.0
      %v3258 = vadd.f32 %v3256, %v3257
      %v3259 = vsel %vm1126, %v3220, 0.0
      %v3260 = vadd.f32 %v3258, %v3259
      %v3261 = vsel %vm1126, %v3221, 0.0
      %v3262 = vadd.f32 %v3260, %v3261
      %v3263 = vsel %vm1126, %v3222, 0.0
      %v3264 = vadd.f32 %v3262, %v3263
      %v3265 = vsel %vm1126, %v3223, 0.0
      %v3266 = vadd.f32 %v3264, %v3265
      %v3267 = vsel %vm1126, %v3224, 0.0
      %v3268 = vadd.f32 %v3266, %v3267
      %v3269 = vsel %vm1126, %v3225, 0.0
      %v3270 = vadd.f32 %v3268, %v3269
      %v3271 = vsel %vm1126, %v3226, 0.0
      %v3272 = vadd.f32 %v3270, %v3271
      %v3273 = vsel %vm1126, %v3227, 0.0
      %v3274 = vadd.f32 %v3272, %v3273
      %v3275 = vsel %vm1126, %v3228, 0.0
      %v3276 = vadd.f32 %v3274, %v3275
      %v3277 = vsel %vm1126, %v3229, 0.0
      %v3278 = vadd.f32 %v3276, %v3277
      %v3279 = vsel %vm1126, %v3230, 0.0
      %v3280 = vadd.f32 %v3278, %v3279
      %v3281 = vsel %vm1126, %v3231, 0.0
      %v3282 = vadd.f32 %v3280, %v3281
      %v3283 = vsel %vm1126, %v3232, 0.0
      %v3284 = vadd.f32 %v3282, %v3283
      %v3285 = vsel %vm1126, %v3233, 0.0
      %v3286 = vadd.f32 %v3284, %v3285
      %v3287 = vsel %vm1126, %v3234, 0.0
      %v3288 = vadd.f32 %v3286, %v3287
      %v3289 = vsel %vm1126, %v3235, 0.0
      %v3290 = vadd.f32 %v3288, %v3289
      %v3291 = vsel %vm1126, %v3236, 0.0
      %v3292 = vadd.f32 %v3290, %v3291
      %v3293 = vsel %vm1126, %v3237, 0.0
      %v3294 = vadd.f32 %v3292, %v3293
      %v3295 = vsel %vm1126, %v3238, 0.0
      %v3296 = vadd.f32 %v3294, %v3295
      %v3297 = vsel %vm1126, %v3239, 0.0
      %v3298 = vadd.f32 %v3296, %v3297
      %v3299 = vsel %vm1126, %v3240, 0.0
      %v3300 = vadd.f32 %v3298, %v3299
      %v3301 = vsel %vm1126, %v3241, 0.0
      %v3302 = vadd.f32 %v3300, %v3301
      %v3303 = vsel %vm1126, %v3242, 0.0
      %v3304 = vadd.f32 %v3302, %v3303
      %v3305 = vsel %vm1126, %v3243, 0.0
      %v3306 = vadd.f32 %v3304, %v3305
      %v3307 = vrot.slane %v3306, 4
      %v3308 = vadd.f32 %v3306, %v3307
      %v3309 = vrot.slane %v3308, 2
      %v3310 = vadd.f32 %v3308, %v3309
      %v3311 = vrot.slane %v3310, 1
      %v3312 = vadd.f32 %v3310, %v3311
      %v3313 = vrcp.pop 256.0
      %v3314 = vmul.f32 %v3312, %v3313
      %v3315 = vld [vmem:[%s7] sm:$0xff]
      %v3316 = vld [vmem:[%s7 + $0x8] sm:$0xff]
      %v3317 = vld [vmem:[%s7 + $0x10] sm:$0xff]
      %v3318 = vld [vmem:[%s7 + $0x18] sm:$0xff]
      %v3319 = vld [vmem:[%s7 + $0x20] sm:$0xff]
      %v3320 = vld [vmem:[%s7 + $0x28] sm:$0xff]
      %v3321 = vld [vmem:[%s7 + $0x30] sm:$0xff]
      %v3322 = vld [vmem:[%s7 + $0x38] sm:$0xff]
      %v3323 = vld [vmem:[%s8] sm:$0x1]
      %v3325 = vsel %vm1126, %v3314, 0
      %3327 = vmatprep.subr.mxu0 0.0
      %3328 = vmatpush1.msra.mxu0 %v3315
      %3329 = vmatprep.subr.mxu0 0.0
      %3330 = vmatpush1.msra.mxu0 %v3316
      %3331 = vmatprep.subr.mxu0 0.0
      %3332 = vmatpush1.msra.mxu0 %v3317
      %3333 = vmatprep.subr.mxu0 0.0
      %3334 = vmatpush1.msra.mxu0 %v3318
      %3335 = vmatprep.subr.mxu0 0.0
      %3336 = vmatpush1.msra.mxu0 %v3319
      %3337 = vmatprep.subr.mxu0 0.0
      %3338 = vmatpush1.msra.mxu0 %v3320
      %3339 = vmatprep.subr.mxu0 0.0
      %3340 = vmatpush1.msra.mxu0 %v3321
      %3341 = vmatprep.subr.mxu0 0.0
      %3342 = vmatpush1.msra.mxu0 %v3322
      %3343 = vmatprep.subr.mxu0 0.0
      %3344 = vmatpush1.msra.mxu0 0.0
      %3345 = vmatprep.subr.mxu0 0.0
      %3346 = vmatpush1.msra.mxu0 0.0
      %3347 = vmatprep.subr.mxu0 0.0
      %3348 = vmatpush1.msra.mxu0 0.0
      %3349 = vmatprep.subr.mxu0 0.0
      %3350 = vmatpush1.msra.mxu0 0.0
      %3351 = vmatprep.subr.mxu0 0.0
      %3352 = vmatpush1.msra.mxu0 0.0
      %3353 = vmatprep.subr.mxu0 0.0
      %3354 = vmatpush1.msra.mxu0 0.0
      %3355 = vmatprep.subr.mxu0 0.0
      %3356 = vmatpush1.msra.mxu0 0.0
      %3357 = vmatprep.subr.mxu0 0.0
      %3358 = vmatpush1.msra.mxu0 0.0
      %3359 = vmatprep.subr.mxu0 0.0
      %3360 = vmatpush1.msra.mxu0 0.0
      %3361 = vmatprep.subr.mxu0 0.0
      %3362 = vmatpush1.msra.mxu0 0.0
      %3363 = vmatprep.subr.mxu0 0.0
      %3364 = vmatpush1.msra.mxu0 0.0
      %3365 = vmatprep.subr.mxu0 0.0
      %3366 = vmatpush1.msra.mxu0 0.0
      %3367 = vmatprep.subr.mxu0 0.0
      %3368 = vmatpush1.msra.mxu0 0.0
      %3369 = vmatprep.subr.mxu0 0.0
      %3370 = vmatpush1.msra.mxu0 0.0
      %3371 = vmatprep.subr.mxu0 0.0
      %3372 = vmatpush1.msra.mxu0 0.0
      %3373 = vmatprep.subr.mxu0 0.0
      %3374 = vmatpush1.msra.mxu0 0.0
      %3375 = vmatprep.subr.mxu0 0.0
      %3376 = vmatpush1.msra.mxu0 0.0
      %3377 = vmatprep.subr.mxu0 0.0
      %3378 = vmatpush1.msra.mxu0 0.0
      %3379 = vmatprep.subr.mxu0 0.0
      %3380 = vmatpush1.msra.mxu0 0.0
      %3381 = vmatprep.subr.mxu0 0.0
      %3382 = vmatpush1.msra.mxu0 0.0
      %3383 = vmatprep.subr.mxu0 0.0
      %3384 = vmatpush1.msra.mxu0 0.0
      %3385 = vmatprep.subr.mxu0 0.0
      %3386 = vmatpush1.msra.mxu0 0.0
      %3387 = vmatprep.subr.mxu0 0.0
      %3388 = vmatpush1.msra.mxu0 0.0
      %3389 = vmatprep.subr.mxu0 0.0
      %3390 = vmatpush1.msra.mxu0 0.0
      %3391 = vmatprep.mubr.f32.mxu0 0.0
      %3392 = vmatmul.mubr.f32.gmra.mrb[0].mxu0 %v3325
      %v3393 = vpop.f32.mrb[0].mxu0
      %v3394 = vadd.f32 %v3323, %v3393
      %v3395 = vpop.f32.mrb[0].mxu0
      %3396 = vdwg.mxu0
      %v3397 = vxor.u32 %v3394, 2147483648
      %v3398 = vmul.f32 %v3397, 1.442695
      %v3399 = vpow.pop %v3398
      %v3400 = vadd.f32 %v3399, 1.0
      %v3401 = vrcp.pop %v3400
      %v3402 = vmul.f32 1.0, %v3401
      %v3403 = vmul.f32 %v3394, %v3402
      %v3404 = vld [vmem:[%s9] sm:$0xf]
      %v3405 = vld [vmem:[%s10] sm:$0x1]
      %vm3406 = vcmask 31744
      %v3408 = vsel %vm3406, %v3403, 0
      %vm3410 = vcmask 1043456
      %v3412 = vsel %vm3410, %v3404, 0
      %3414 = vmatprep.subr.mxu0 0.0
      %3415 = vmatpush1.msra.mxu0 %v3412
      %3416 = vmatprep.subr.mxu0 0.0
      %3417 = vmatpush1.msra.mxu0 0.0
      %3418 = vmatprep.subr.mxu0 0.0
      %3419 = vmatpush1.msra.mxu0 0.0
      %3420 = vmatprep.subr.mxu0 0.0
      %3421 = vmatpush1.msra.mxu0 0.0
      %3422 = vmatprep.subr.mxu0 0.0
      %3423 = vmatpush1.msra.mxu0 0.0
      %3424 = vmatprep.subr.mxu0 0.0
      %3425 = vmatpush1.msra.mxu0 0.0
      %3426 = vmatprep.subr.mxu0 0.0
      %3427 = vmatpush1.msra.mxu0 0.0
      %3428 = vmatprep.subr.mxu0 0.0
      %3429 = vmatpush1.msra.mxu0 0.0
      %3430 = vmatprep.subr.mxu0 0.0
      %3431 = vmatpush1.msra.mxu0 0.0
      %3432 = vmatprep.subr.mxu0 0.0
      %3433 = vmatpush1.msra.mxu0 0.0
      %3434 = vmatprep.subr.mxu0 0.0
      %3435 = vmatpush1.msra.mxu0 0.0
      %3436 = vmatprep.subr.mxu0 0.0
      %3437 = vmatpush1.msra.mxu0 0.0
      %3438 = vmatprep.subr.mxu0 0.0
      %3439 = vmatpush1.msra.mxu0 0.0
      %3440 = vmatprep.subr.mxu0 0.0
      %3441 = vmatpush1.msra.mxu0 0.0
      %3442 = vmatprep.subr.mxu0 0.0
      %3443 = vmatpush1.msra.mxu0 0.0
      %3444 = vmatprep.subr.mxu0 0.0
      %3445 = vmatpush1.msra.mxu0 0.0
      %3446 = vmatprep.subr.mxu0 0.0
      %3447 = vmatpush1.msra.mxu0 0.0
      %3448 = vmatprep.subr.mxu0 0.0
      %3449 = vmatpush1.msra.mxu0 0.0
      %3450 = vmatprep.subr.mxu0 0.0
      %3451 = vmatpush1.msra.mxu0 0.0
      %3452 = vmatprep.subr.mxu0 0.0
      %3453 = vmatpush1.msra.mxu0 0.0
      %3454 = vmatprep.subr.mxu0 0.0
      %3455 = vmatpush1.msra.mxu0 0.0
      %3456 = vmatprep.subr.mxu0 0.0
      %3457 = vmatpush1.msra.mxu0 0.0
      %3458 = vmatprep.subr.mxu0 0.0
      %3459 = vmatpush1.msra.mxu0 0.0
      %3460 = vmatprep.subr.mxu0 0.0
      %3461 = vmatpush1.msra.mxu0 0.0
      %3462 = vmatprep.subr.mxu0 0.0
      %3463 = vmatpush1.msra.mxu0 0.0
      %3464 = vmatprep.subr.mxu0 0.0
      %3465 = vmatpush1.msra.mxu0 0.0
      %3466 = vmatprep.subr.mxu0 0.0
      %3467 = vmatpush1.msra.mxu0 0.0
      %3468 = vmatprep.subr.mxu0 0.0
      %3469 = vmatpush1.msra.mxu0 0.0
      %3470 = vmatprep.subr.mxu0 0.0
      %3471 = vmatpush1.msra.mxu0 0.0
      %3472 = vmatprep.subr.mxu0 0.0
      %3473 = vmatpush1.msra.mxu0 0.0
      %3474 = vmatprep.subr.mxu0 0.0
      %3475 = vmatpush1.msra.mxu0 0.0
      %3476 = vmatprep.subr.mxu0 0.0
      %3477 = vmatpush1.msra.mxu0 0.0
      %3478 = vmatprep.mubr.f32.mxu0 0.0
      %3479 = vmatmul.mubr.f32.gmra.mrb[0].mxu0 %v3408
      %v3480 = vpop.f32.mrb[0].mxu0
      %v3481 = vadd.f32 %v3405, %v3480
      %v3482 = vpop.f32.mrb[0].mxu0
      %3483 = vdwg.mxu0
      %v3484 = vxor.u32 %v3481, 2147483648
      %v3485 = vmul.f32 %v3484, 1.442695
      %v3486 = vpow.pop %v3485
      %v3487 = vadd.f32 %v3486, 1.0
      %v3488 = vrcp.pop %v3487
      %v3489 = vmul.f32 1.0, %v3488
      %v3490 = vlaneseq
      %v3491 = vshrl.u32 %v3490, 7
      %v3492 = vsub.s32 0, %v3491
      %v3493 = vrot.slane %v3489, %v3492
      %v3494 = vmul.f32 %v3212, %v3493
      %v3495 = vmul.f32 %v3213, %v3493
      %v3496 = vmul.f32 %v3214, %v3493
      %v3497 = vmul.f32 %v3215, %v3493
      %v3498 = vmul.f32 %v3216, %v3493
      %v3499 = vmul.f32 %v3217, %v3493
      %v3500 = vmul.f32 %v3218, %v3493
      %v3501 = vmul.f32 %v3219, %v3493
      %v3502 = vmul.f32 %v3220, %v3493
      %v3503 = vmul.f32 %v3221, %v3493
      %v3504 = vmul.f32 %v3222, %v3493
      %v3505 = vmul.f32 %v3223, %v3493
      %v3506 = vmul.f32 %v3224, %v3493
      %v3507 = vmul.f32 %v3225, %v3493
      %v3508 = vmul.f32 %v3226, %v3493
      %v3509 = vmul.f32 %v3227, %v3493
      %v3510 = vmul.f32 %v3228, %v3493
      %v3511 = vmul.f32 %v3229, %v3493
      %v3512 = vmul.f32 %v3230, %v3493
      %v3513 = vmul.f32 %v3231, %v3493
      %v3514 = vmul.f32 %v3232, %v3493
      %v3515 = vmul.f32 %v3233, %v3493
      %v3516 = vmul.f32 %v3234, %v3493
      %v3517 = vmul.f32 %v3235, %v3493
      %v3518 = vmul.f32 %v3236, %v3493
      %v3519 = vmul.f32 %v3237, %v3493
      %v3520 = vmul.f32 %v3238, %v3493
      %v3521 = vmul.f32 %v3239, %v3493
      %v3522 = vmul.f32 %v3240, %v3493
      %v3523 = vmul.f32 %v3241, %v3493
      %v3524 = vmul.f32 %v3242, %v3493
      %v3525 = vmul.f32 %v3243, %v3493
      %v3526 = vld [vmem:[%s11] sm:$0xff]
      %v3527 = vld [vmem:[%s11 + $0x8] sm:$0xff]
      %v3528 = vld [vmem:[%s11 + $0x10] sm:$0xff]
      %v3529 = vld [vmem:[%s11 + $0x18] sm:$0xff]
      %v3530 = vld [vmem:[%s11 + $0x20] sm:$0xff]
      %v3531 = vld [vmem:[%s11 + $0x28] sm:$0xff]
      %v3532 = vld [vmem:[%s11 + $0x30] sm:$0xff]
      %v3533 = vld [vmem:[%s11 + $0x38] sm:$0xff]
      %v3535 = vsel %vm1126, %v3494, 0
      %v3538 = vsel %vm1126, %v3495, 0
      %v3541 = vsel %vm1126, %v3496, 0
      %v3544 = vsel %vm1126, %v3497, 0
      %v3547 = vsel %vm1126, %v3498, 0
      %v3550 = vsel %vm1126, %v3499, 0
      %v3553 = vsel %vm1126, %v3500, 0
      %v3556 = vsel %vm1126, %v3501, 0
      %v3559 = vsel %vm1126, %v3502, 0
      %v3562 = vsel %vm1126, %v3503, 0
      %v3565 = vsel %vm1126, %v3504, 0
      %v3568 = vsel %vm1126, %v3505, 0
      %v3571 = vsel %vm1126, %v3506, 0
      %v3574 = vsel %vm1126, %v3507, 0
      %v3577 = vsel %vm1126, %v3508, 0
      %v3580 = vsel %vm1126, %v3509, 0
      %v3583 = vsel %vm1126, %v3510, 0
      %v3586 = vsel %vm1126, %v3511, 0
      %v3589 = vsel %vm1126, %v3512, 0
      %v3592 = vsel %vm1126, %v3513, 0
      %v3595 = vsel %vm1126, %v3514, 0
      %v3598 = vsel %vm1126, %v3515, 0
      %v3601 = vsel %vm1126, %v3516, 0
      %v3604 = vsel %vm1126, %v3517, 0
      %v3607 = vsel %vm1126, %v3518, 0
      %v3610 = vsel %vm1126, %v3519, 0
      %v3613 = vsel %vm1126, %v3520, 0
      %v3616 = vsel %vm1126, %v3521, 0
      %v3619 = vsel %vm1126, %v3522, 0
      %v3622 = vsel %vm1126, %v3523, 0
      %v3625 = vsel %vm1126, %v3524, 0
      %v3628 = vsel %vm1126, %v3525, 0
      %3630 = vmatprep.subr.mxu0 0.0
      %3631 = vmatpush1.msra.mxu0 %v3526
      %3632 = vmatprep.subr.mxu0 0.0
      %3633 = vmatpush1.msra.mxu0 %v3527
      %3634 = vmatprep.subr.mxu0 0.0
      %3635 = vmatpush1.msra.mxu0 %v3528
      %3636 = vmatprep.subr.mxu0 0.0
      %3637 = vmatpush1.msra.mxu0 %v3529
      %3638 = vmatprep.subr.mxu0 0.0
      %3639 = vmatpush1.msra.mxu0 %v3530
      %3640 = vmatprep.subr.mxu0 0.0
      %3641 = vmatpush1.msra.mxu0 %v3531
      %3642 = vmatprep.subr.mxu0 0.0
      %3643 = vmatpush1.msra.mxu0 %v3532
      %3644 = vmatprep.subr.mxu0 0.0
      %3645 = vmatpush1.msra.mxu0 %v3533
      %3646 = vmatprep.subr.mxu0 0.0
      %3647 = vmatpush1.msra.mxu0 0.0
      %3648 = vmatprep.subr.mxu0 0.0
      %3649 = vmatpush1.msra.mxu0 0.0
      %3650 = vmatprep.subr.mxu0 0.0
      %3651 = vmatpush1.msra.mxu0 0.0
      %3652 = vmatprep.subr.mxu0 0.0
      %3653 = vmatpush1.msra.mxu0 0.0
      %3654 = vmatprep.subr.mxu0 0.0
      %3655 = vmatpush1.msra.mxu0 0.0
      %3656 = vmatprep.subr.mxu0 0.0
      %3657 = vmatpush1.msra.mxu0 0.0
      %3658 = vmatprep.subr.mxu0 0.0
      %3659 = vmatpush1.msra.mxu0 0.0
      %3660 = vmatprep.subr.mxu0 0.0
      %3661 = vmatpush1.msra.mxu0 0.0
      %3662 = vmatprep.subr.mxu0 0.0
      %3663 = vmatpush1.msra.mxu0 0.0
      %3664 = vmatprep.subr.mxu0 0.0
      %3665 = vmatpush1.msra.mxu0 0.0
      %3666 = vmatprep.subr.mxu0 0.0
      %3667 = vmatpush1.msra.mxu0 0.0
      %3668 = vmatprep.subr.mxu0 0.0
      %3669 = vmatpush1.msra.mxu0 0.0
      %3670 = vmatprep.subr.mxu0 0.0
      %3671 = vmatpush1.msra.mxu0 0.0
      %3672 = vmatprep.subr.mxu0 0.0
      %3673 = vmatpush1.msra.mxu0 0.0
      %3674 = vmatprep.subr.mxu0 0.0
      %3675 = vmatpush1.msra.mxu0 0.0
      %3676 = vmatprep.subr.mxu0 0.0
      %3677 = vmatpush1.msra.mxu0 0.0
      %3678 = vmatprep.subr.mxu0 0.0
      %3679 = vmatpush1.msra.mxu0 0.0
      %3680 = vmatprep.subr.mxu0 0.0
      %3681 = vmatpush1.msra.mxu0 0.0
      %3682 = vmatprep.subr.mxu0 0.0
      %3683 = vmatpush1.msra.mxu0 0.0
      %3684 = vmatprep.subr.mxu0 0.0
      %3685 = vmatpush1.msra.mxu0 0.0
      %3686 = vmatprep.subr.mxu0 0.0
      %3687 = vmatpush1.msra.mxu0 0.0
      %3688 = vmatprep.subr.mxu0 0.0
      %3689 = vmatpush1.msra.mxu0 0.0
      %3690 = vmatprep.subr.mxu0 0.0
      %3691 = vmatpush1.msra.mxu0 0.0
      %3692 = vmatprep.subr.mxu0 0.0
      %3693 = vmatpush1.msra.mxu0 0.0
      %3694 = vmatprep.mubr.f32.mxu0 0.0
      %3695 = vmatmul.mubr.f32.gmra.mrb[0].mxu0 %v3535
      %v3696 = vpop.f32.mrb[0].mxu0
      %v3697 = vadd.f32 0.0, %v3696
      %v3698 = vpop.f32.mrb[0].mxu0
      %3699 = vmatprep.mubr.f32.mxu0 0.0
      %3700 = vmatmul.mubr.f32.gmra.mrb[0].mxu0 %v3538
      %v3701 = vpop.f32.mrb[0].mxu0
      %v3702 = vadd.f32 0.0, %v3701
      %v3703 = vpop.f32.mrb[0].mxu0
      %3704 = vmatprep.mubr.f32.mxu0 0.0
      %3705 = vmatmul.mubr.f32.gmra.mrb[0].mxu0 %v3541
      %v3706 = vpop.f32.mrb[0].mxu0
      %v3707 = vadd.f32 0.0, %v3706
      %v3708 = vpop.f32.mrb[0].mxu0
      %3709 = vmatprep.mubr.f32.mxu0 0.0
      %3710 = vmatmul.mubr.f32.gmra.mrb[0].mxu0 %v3544
      %v3711 = vpop.f32.mrb[0].mxu0
      %v3712 = vadd.f32 0.0, %v3711
      %v3713 = vpop.f32.mrb[0].mxu0
      %3714 = vmatprep.mubr.f32.mxu0 0.0
      %3715 = vmatmul.mubr.f32.gmra.mrb[0].mxu0 %v3547
      %v3716 = vpop.f32.mrb[0].mxu0
      %v3717 = vadd.f32 0.0, %v3716
      %v3718 = vpop.f32.mrb[0].mxu0
      %3719 = vmatprep.mubr.f32.mxu0 0.0
      %3720 = vmatmul.mubr.f32.gmra.mrb[0].mxu0 %v3550
      %v3721 = vpop.f32.mrb[0].mxu0
      %v3722 = vadd.f32 0.0, %v3721
      %v3723 = vpop.f32.mrb[0].mxu0
      %3724 = vmatprep.mubr.f32.mxu0 0.0
      %3725 = vmatmul.mubr.f32.gmra.mrb[0].mxu0 %v3553
      %v3726 = vpop.f32.mrb[0].mxu0
      %v3727 = vadd.f32 0.0, %v3726
      %v3728 = vpop.f32.mrb[0].mxu0
      %3729 = vmatprep.mubr.f32.mxu0 0.0
      %3730 = vmatmul.mubr.f32.gmra.mrb[0].mxu0 %v3556
      %v3731 = vpop.f32.mrb[0].mxu0
      %v3732 = vadd.f32 0.0, %v3731
      %v3733 = vpop.f32.mrb[0].mxu0
      %3734 = vmatprep.mubr.f32.mxu0 0.0
      %3735 = vmatmul.mubr.f32.gmra.mrb[0].mxu0 %v3559
      %v3736 = vpop.f32.mrb[0].mxu0
      %v3737 = vadd.f32 0.0, %v3736
      %v3738 = vpop.f32.mrb[0].mxu0
      %3739 = vmatprep.mubr.f32.mxu0 0.0
      %3740 = vmatmul.mubr.f32.gmra.mrb[0].mxu0 %v3562
      %v3741 = vpop.f32.mrb[0].mxu0
      %v3742 = vadd.f32 0.0, %v3741
      %v3743 = vpop.f32.mrb[0].mxu0
      %3744 = vmatprep.mubr.f32.mxu0 0.0
      %3745 = vmatmul.mubr.f32.gmra.mrb[0].mxu0 %v3565
      %v3746 = vpop.f32.mrb[0].mxu0
      %v3747 = vadd.f32 0.0, %v3746
      %v3748 = vpop.f32.mrb[0].mxu0
      %3749 = vmatprep.mubr.f32.mxu0 0.0
      %3750 = vmatmul.mubr.f32.gmra.mrb[0].mxu0 %v3568
      %v3751 = vpop.f32.mrb[0].mxu0
      %v3752 = vadd.f32 0.0, %v3751
      %v3753 = vpop.f32.mrb[0].mxu0
      %3754 = vmatprep.mubr.f32.mxu0 0.0
      %3755 = vmatmul.mubr.f32.gmra.mrb[0].mxu0 %v3571
      %v3756 = vpop.f32.mrb[0].mxu0
      %v3757 = vadd.f32 0.0, %v3756
      %v3758 = vpop.f32.mrb[0].mxu0
      %3759 = vmatprep.mubr.f32.mxu0 0.0
      %3760 = vmatmul.mubr.f32.gmra.mrb[0].mxu0 %v3574
      %v3761 = vpop.f32.mrb[0].mxu0
      %v3762 = vadd.f32 0.0, %v3761
      %v3763 = vpop.f32.mrb[0].mxu0
      %3764 = vmatprep.mubr.f32.mxu0 0.0
      %3765 = vmatmul.mubr.f32.gmra.mrb[0].mxu0 %v3577
      %v3766 = vpop.f32.mrb[0].mxu0
      %v3767 = vadd.f32 0.0, %v3766
      %v3768 = vpop.f32.mrb[0].mxu0
      %3769 = vmatprep.mubr.f32.mxu0 0.0
      %3770 = vmatmul.mubr.f32.gmra.mrb[0].mxu0 %v3580
      %v3771 = vpop.f32.mrb[0].mxu0
      %v3772 = vadd.f32 0.0, %v3771
      %v3773 = vpop.f32.mrb[0].mxu0
      %3774 = vmatprep.mubr.f32.mxu0 0.0
      %3775 = vmatmul.mubr.f32.gmra.mrb[0].mxu0 %v3583
      %v3776 = vpop.f32.mrb[0].mxu0
      %v3777 = vadd.f32 0.0, %v3776
      %v3778 = vpop.f32.mrb[0].mxu0
      %3779 = vmatprep.mubr.f32.mxu0 0.0
      %3780 = vmatmul.mubr.f32.gmra.mrb[0].mxu0 %v3586
      %v3781 = vpop.f32.mrb[0].mxu0
      %v3782 = vadd.f32 0.0, %v3781
      %v3783 = vpop.f32.mrb[0].mxu0
      %3784 = vmatprep.mubr.f32.mxu0 0.0
      %3785 = vmatmul.mubr.f32.gmra.mrb[0].mxu0 %v3589
      %v3786 = vpop.f32.mrb[0].mxu0
      %v3787 = vadd.f32 0.0, %v3786
      %v3788 = vpop.f32.mrb[0].mxu0
      %3789 = vmatprep.mubr.f32.mxu0 0.0
      %3790 = vmatmul.mubr.f32.gmra.mrb[0].mxu0 %v3592
      %v3791 = vpop.f32.mrb[0].mxu0
      %v3792 = vadd.f32 0.0, %v3791
      %v3793 = vpop.f32.mrb[0].mxu0
      %3794 = vmatprep.mubr.f32.mxu0 0.0
      %3795 = vmatmul.mubr.f32.gmra.mrb[0].mxu0 %v3595
      %v3796 = vpop.f32.mrb[0].mxu0
      %v3797 = vadd.f32 0.0, %v3796
      %v3798 = vpop.f32.mrb[0].mxu0
      %3799 = vmatprep.mubr.f32.mxu0 0.0
      %3800 = vmatmul.mubr.f32.gmra.mrb[0].mxu0 %v3598
      %v3801 = vpop.f32.mrb[0].mxu0
      %v3802 = vadd.f32 0.0, %v3801
      %v3803 = vpop.f32.mrb[0].mxu0
      %3804 = vmatprep.mubr.f32.mxu0 0.0
      %3805 = vmatmul.mubr.f32.gmra.mrb[0].mxu0 %v3601
      %v3806 = vpop.f32.mrb[0].mxu0
      %v3807 = vadd.f32 0.0, %v3806
      %v3808 = vpop.f32.mrb[0].mxu0
      %3809 = vmatprep.mubr.f32.mxu0 0.0
      %3810 = vmatmul.mubr.f32.gmra.mrb[0].mxu0 %v3604
      %v3811 = vpop.f32.mrb[0].mxu0
      %v3812 = vadd.f32 0.0, %v3811
      %v3813 = vpop.f32.mrb[0].mxu0
      %3814 = vmatprep.mubr.f32.mxu0 0.0
      %3815 = vmatmul.mubr.f32.gmra.mrb[0].mxu0 %v3607
      %v3816 = vpop.f32.mrb[0].mxu0
      %v3817 = vadd.f32 0.0, %v3816
      %v3818 = vpop.f32.mrb[0].mxu0
      %3819 = vmatprep.mubr.f32.mxu0 0.0
      %3820 = vmatmul.mubr.f32.gmra.mrb[0].mxu0 %v3610
      %v3821 = vpop.f32.mrb[0].mxu0
      %v3822 = vadd.f32 0.0, %v3821
      %v3823 = vpop.f32.mrb[0].mxu0
      %3824 = vmatprep.mubr.f32.mxu0 0.0
      %3825 = vmatmul.mubr.f32.gmra.mrb[0].mxu0 %v3613
      %v3826 = vpop.f32.mrb[0].mxu0
      %v3827 = vadd.f32 0.0, %v3826
      %v3828 = vpop.f32.mrb[0].mxu0
      %3829 = vmatprep.mubr.f32.mxu0 0.0
      %3830 = vmatmul.mubr.f32.gmra.mrb[0].mxu0 %v3616
      %v3831 = vpop.f32.mrb[0].mxu0
      %v3832 = vadd.f32 0.0, %v3831
      %v3833 = vpop.f32.mrb[0].mxu0
      %3834 = vmatprep.mubr.f32.mxu0 0.0
      %3835 = vmatmul.mubr.f32.gmra.mrb[0].mxu0 %v3619
      %v3836 = vpop.f32.mrb[0].mxu0
      %v3837 = vadd.f32 0.0, %v3836
      %v3838 = vpop.f32.mrb[0].mxu0
      %3839 = vmatprep.mubr.f32.mxu0 0.0
      %3840 = vmatmul.mubr.f32.gmra.mrb[0].mxu0 %v3622
      %v3841 = vpop.f32.mrb[0].mxu0
      %v3842 = vadd.f32 0.0, %v3841
      %v3843 = vpop.f32.mrb[0].mxu0
      %3844 = vmatprep.mubr.f32.mxu0 0.0
      %3845 = vmatmul.mubr.f32.gmra.mrb[0].mxu0 %v3625
      %v3846 = vpop.f32.mrb[0].mxu0
      %v3847 = vadd.f32 0.0, %v3846
      %v3848 = vpop.f32.mrb[0].mxu0
      %3849 = vmatprep.mubr.f32.mxu0 0.0
      %3850 = vmatmul.mubr.f32.gmra.mrb[0].mxu0 %v3628
      %v3851 = vpop.f32.mrb[0].mxu0
      %v3852 = vadd.f32 0.0, %v3851
      %v3853 = vpop.f32.mrb[0].mxu0
      %3854 = vdwg.mxu0
      %v3855 = vld [vmem:[%s12] sm:$0x1]
      %v3857 = vlaneseq
      %v3858 = vshrl.u32 %v3857, 7
      %v3859 = vsub.s32 0, %v3858
      %v3860 = vrot.slane %v3855, %v3859
      %v3862 = vmul.f32 %v3697, %v3860
      %v3863 = vmul.f32 %v3702, %v3860
      %v3864 = vmul.f32 %v3707, %v3860
      %v3865 = vmul.f32 %v3712, %v3860
      %v3866 = vmul.f32 %v3717, %v3860
      %v3867 = vmul.f32 %v3722, %v3860
      %v3868 = vmul.f32 %v3727, %v3860
      %v3869 = vmul.f32 %v3732, %v3860
      %v3870 = vmul.f32 %v3737, %v3860
      %v3871 = vmul.f32 %v3742, %v3860
      %v3872 = vmul.f32 %v3747, %v3860
      %v3873 = vmul.f32 %v3752, %v3860
      %v3874 = vmul.f32 %v3757, %v3860
      %v3875 = vmul.f32 %v3762, %v3860
      %v3876 = vmul.f32 %v3767, %v3860
      %v3877 = vmul.f32 %v3772, %v3860
      %v3878 = vmul.f32 %v3777, %v3860
      %v3879 = vmul.f32 %v3782, %v3860
      %v3880 = vmul.f32 %v3787, %v3860
      %v3881 = vmul.f32 %v3792, %v3860
      %v3882 = vmul.f32 %v3797, %v3860
      %v3883 = vmul.f32 %v3802, %v3860
      %v3884 = vmul.f32 %v3807, %v3860
      %v3885 = vmul.f32 %v3812, %v3860
      %v3886 = vmul.f32 %v3817, %v3860
      %v3887 = vmul.f32 %v3822, %v3860
      %v3888 = vmul.f32 %v3827, %v3860
      %v3889 = vmul.f32 %v3832, %v3860
      %v3890 = vmul.f32 %v3837, %v3860
      %v3891 = vmul.f32 %v3842, %v3860
      %v3892 = vmul.f32 %v3847, %v3860
      %v3893 = vmul.f32 %v3852, %v3860
      %v3894 = vld [vmem:[%s13] sm:$0x1]
      %v3896 = vlaneseq
      %v3897 = vshrl.u32 %v3896, 7
      %v3898 = vsub.s32 0, %v3897
      %v3899 = vrot.slane %v3894, %v3898
      %v3901 = vadd.f32 %v3862, %v3899
      %v3902 = vadd.f32 %v3863, %v3899
      %v3903 = vadd.f32 %v3864, %v3899
      %v3904 = vadd.f32 %v3865, %v3899
      %v3905 = vadd.f32 %v3866, %v3899
      %v3906 = vadd.f32 %v3867, %v3899
      %v3907 = vadd.f32 %v3868, %v3899
      %v3908 = vadd.f32 %v3869, %v3899
      %v3909 = vadd.f32 %v3870, %v3899
      %v3910 = vadd.f32 %v3871, %v3899
      %v3911 = vadd.f32 %v3872, %v3899
      %v3912 = vadd.f32 %v3873, %v3899
      %v3913 = vadd.f32 %v3874, %v3899
      %v3914 = vadd.f32 %v3875, %v3899
      %v3915 = vadd.f32 %v3876, %v3899
      %v3916 = vadd.f32 %v3877, %v3899
      %v3917 = vadd.f32 %v3878, %v3899
      %v3918 = vadd.f32 %v3879, %v3899
      %v3919 = vadd.f32 %v3880, %v3899
      %v3920 = vadd.f32 %v3881, %v3899
      %v3921 = vadd.f32 %v3882, %v3899
      %v3922 = vadd.f32 %v3883, %v3899
      %v3923 = vadd.f32 %v3884, %v3899
      %v3924 = vadd.f32 %v3885, %v3899
      %v3925 = vadd.f32 %v3886, %v3899
      %v3926 = vadd.f32 %v3887, %v3899
      %v3927 = vadd.f32 %v3888, %v3899
      %v3928 = vadd.f32 %v3889, %v3899
      %v3929 = vadd.f32 %v3890, %v3899
      %v3930 = vadd.f32 %v3891, %v3899
      %v3931 = vadd.f32 %v3892, %v3899
      %v3932 = vadd.f32 %v3893, %v3899
      %v3933 = vadd.f32 %v3901, %v468
      %v3934 = vadd.f32 %v3902, %v469
      %v3935 = vadd.f32 %v3903, %v470
      %v3936 = vadd.f32 %v3904, %v471
      %v3937 = vadd.f32 %v3905, %v472
      %v3938 = vadd.f32 %v3906, %v473
      %v3939 = vadd.f32 %v3907, %v474
      %v3940 = vadd.f32 %v3908, %v475
      %v3941 = vadd.f32 %v3909, %v476
      %v3942 = vadd.f32 %v3910, %v477
      %v3943 = vadd.f32 %v3911, %v478
      %v3944 = vadd.f32 %v3912, %v479
      %v3945 = vadd.f32 %v3913, %v480
      %v3946 = vadd.f32 %v3914, %v481
      %v3947 = vadd.f32 %v3915, %v482
      %v3948 = vadd.f32 %v3916, %v483
      %v3949 = vadd.f32 %v3917, %v484
      %v3950 = vadd.f32 %v3918, %v485
      %v3951 = vadd.f32 %v3919, %v486
      %v3952 = vadd.f32 %v3920, %v487
      %v3953 = vadd.f32 %v3921, %v488
      %v3954 = vadd.f32 %v3922, %v489
      %v3955 = vadd.f32 %v3923, %v490
      %v3956 = vadd.f32 %v3924, %v491
      %v3957 = vadd.f32 %v3925, %v492
      %v3958 = vadd.f32 %v3926, %v493
      %v3959 = vadd.f32 %v3927, %v494
      %v3960 = vadd.f32 %v3928, %v495
      %v3961 = vadd.f32 %v3929, %v496
      %v3962 = vadd.f32 %v3930, %v497
      %v3963 = vadd.f32 %v3931, %v498
      %v3964 = vadd.f32 %v3932, %v499
      %3965 = vst.msk [vmem:[%s467] sm:$0xff] %vm502, %v3933
      %3966 = vst.msk [vmem:[%s467 + $0x8] sm:$0xff] %vm502, %v3934
      %3967 = vst.msk [vmem:[%s467 + $0x10] sm:$0xff] %vm502, %v3935
      %3968 = vst.msk [vmem:[%s467 + $0x18] sm:$0xff] %vm502, %v3936
      %3969 = vst.msk [vmem:[%s467 + $0x20] sm:$0xff] %vm502, %v3937
      %3970 = vst.msk [vmem:[%s467 + $0x28] sm:$0xff] %vm502, %v3938
      %3971 = vst.msk [vmem:[%s467 + $0x30] sm:$0xff] %vm502, %v3939
      %3972 = vst.msk [vmem:[%s467 + $0x38] sm:$0xff] %vm502, %v3940
      %3973 = vst.msk [vmem:[%s467 + $0x40] sm:$0xff] %vm502, %v3941
      %3974 = vst.msk [vmem:[%s467 + $0x48] sm:$0xff] %vm502, %v3942
      %3975 = vst.msk [vmem:[%s467 + $0x50] sm:$0xff] %vm502, %v3943
      %3976 = vst.msk [vmem:[%s467 + $0x58] sm:$0xff] %vm502, %v3944
      %3977 = vst.msk [vmem:[%s467 + $0x60] sm:$0xff] %vm502, %v3945
      %3978 = vst.msk [vmem:[%s467 + $0x68] sm:$0xff] %vm502, %v3946
      %3979 = vst.msk [vmem:[%s467 + $0x70] sm:$0xff] %vm502, %v3947
      %3980 = vst.msk [vmem:[%s467 + $0x78] sm:$0xff] %vm502, %v3948
      %3981 = vst.msk [vmem:[%s467 + $0x80] sm:$0xff] %vm502, %v3949
      %3982 = vst.msk [vmem:[%s467 + $0x88] sm:$0xff] %vm502, %v3950
      %3983 = vst.msk [vmem:[%s467 + $0x90] sm:$0xff] %vm502, %v3951
      %3984 = vst.msk [vmem:[%s467 + $0x98] sm:$0xff] %vm502, %v3952
      %3985 = vst.msk [vmem:[%s467 + $0xa0] sm:$0xff] %vm502, %v3953
      %3986 = vst.msk [vmem:[%s467 + $0xa8] sm:$0xff] %vm502, %v3954
      %3987 = vst.msk [vmem:[%s467 + $0xb0] sm:$0xff] %vm502, %v3955
      %3988 = vst.msk [vmem:[%s467 + $0xb8] sm:$0xff] %vm502, %v3956
      %3989 = vst.msk [vmem:[%s467 + $0xc0] sm:$0xff] %vm502, %v3957
      %3990 = vst.msk [vmem:[%s467 + $0xc8] sm:$0xff] %vm502, %v3958
      %3991 = vst.msk [vmem:[%s467 + $0xd0] sm:$0xff] %vm502, %v3959
      %3992 = vst.msk [vmem:[%s467 + $0xd8] sm:$0xff] %vm502, %v3960
      %3993 = vst.msk [vmem:[%s467 + $0xe0] sm:$0xff] %vm502, %v3961
      %3994 = vst.msk [vmem:[%s467 + $0xe8] sm:$0xff] %vm502, %v3962
      %3995 = vst.msk [vmem:[%s467 + $0xf0] sm:$0xff] %vm502, %v3963
      %3996 = vst.msk [vmem:[%s467 + $0xf8] sm:$0xff] %vm502, %v3964
      %p3997 = scmp.lt.s32.totalorder %s25, 1
      %s3998 = scalar_select %p3997, %s25, 1
      %s3999 = smul.addr %s3998, 32
      %s4000 = smul.addr %s3999, 8
      %s4001 = scalar_lea.vmem %s14, %s4000
      // Predicated region
      $region77: #{_lambda_.2} parent=75 // pred_check
        %p4002 = pneg %p342
      $region78: #{_lambda_.2} parent=75 // pred_check_branch
        %4004 = sbr.rel (%p4002) target = $region80
      $region79: #{_lambda_.2} parent=75 // pred_region
        _
      $region80: #{_lambda_.2} parent=75 // pred_fallthru
        _
    $region76: #{_lambda_.2} parent=5 // pred_fallthru
      _
    %p4005 = scmp.le.s32.totalorder 2, %s20
    // Predicated region
    $region81: #{_lambda_.2} parent=5 // pred_check
      %p4006 = pneg %p4005
    $region82: #{_lambda_.2} parent=5 // pred_check_branch
      %4008 = sbr.rel (%p4006) target = $region84
    $region83: #{_lambda_.2} parent=5 // pred_region
      %s4009 = ssub.s32 %s20, 2
      // Predicated region
      $region85: #{_lambda_.2} parent=83 // pred_check
        %p4010 = pneg %p348
      $region86: #{_lambda_.2} parent=83 // pred_check_branch
        %4012 = sbr.rel (%p4010) target = $region88
      $region87: #{_lambda_.2} parent=83 // pred_region
        %p4013 = scmp.lt.s32.totalorder %s26, 1
        %s4014 = scalar_select %p4013, %s26, 1
        %s4015 = smul.addr %s4014, 32
        %s4016 = smul.addr %s4015, 8
        %s4017 = scalar_lea.vmem %s14, %s4016
      $region88: #{_lambda_.2} parent=83 // pred_fallthru
        _
    $region84: #{_lambda_.2} parent=5 // pred_fallthru
      _
  $region6: #{_lambda_.2} parent=0 // loop_footer
    %s24 = sadd.s32 1, %s20
  $region7: #{_lambda_.2} parent=0 // loop_footer_branch
    %19 = sbr.rel target = $region3
  $region8: #{_lambda_.2} parent=0 // loop_exit
    _

</llo_original>
